<compile_context>
chip_gen: v7x
topology: tpu7x:2x2x1
jax: 0.10.0
libtpu: 0.0.40
codegen_flags: <defaults>
</compile_context>

<pallas_src>
import functools

import jax
import jax.numpy as jnp
from jax.experimental import pallas as pl
from jax.experimental.pallas import tpu as pltpu

BN_EPS = 1e-5
MXU_DTYPE = jnp.bfloat16  # storage dtype for MXU operands / inter-layer data


def _round_up(x, m):
    return (x + m - 1) // m * m


def _conv_bn_act_kernel(pt_ref, wt_ref, g_ref, be_ref, o_ref, *, m_valid, act):
    """Fused Conv2d + BatchNorm2d(batch stats) + activation for one layer.

    pt_ref : (K, Mp)   bf16  im2col slab (taps folded into K), lane-dense M.
    wt_ref : (Cp, K)   bf16  transposed weights, Cout padded to Cp sublanes.
    g_ref  : (Cp, 1)   f32   BatchNorm gamma (zero padded).
    be_ref : (Cp, 1)   f32   BatchNorm beta  (zero padded).
    o_ref  : (Cp, Mp)  bf16 (ReLU layers) / f32 (final sigmoid layer).
    """
    # Upcast bf16 operands in-kernel: the dot is F32xF32=F32 on every backend
    # (the bf16xbf16->f32 form is rejected by the CPU/interpret dot path).
    acc = jnp.dot(wt_ref[...].astype(jnp.float32),
                  pt_ref[...].astype(jnp.float32),
                  preferred_element_type=jnp.float32)            # (Cp, Mp) f32

    # Per-channel batch statistics.  Padded M columns of pt are exactly zero,
    # so the unmasked full-row sums equal the valid-column sums (no masks).
    inv_cnt = jnp.float32(1.0 / m_valid)
    mean = jnp.sum(acc, axis=1, keepdims=True) * inv_cnt          # (Cp, 1)
    ex2 = jnp.sum(acc * acc, axis=1, keepdims=True) * inv_cnt     # (Cp, 1)
    var = jnp.maximum(ex2 - mean * mean, 0.0)                     # biased, torch-like

    # NOTE: the conv bias is intentionally omitted -- train-mode BatchNorm's
    # mean subtraction cancels it exactly.
    # BN normalize + affine folded into a single per-element FMA.
    s = g_ref[...] * jax.lax.rsqrt(var + BN_EPS)                  # (Cp, 1)
    t = be_ref[...] - mean * s                                    # (Cp, 1)
    y = acc * s + t

    if act == "relu":
        y = jnp.maximum(y, 0.0)
    else:  # "sigmoid"
        y = 1.0 / (1.0 + jnp.exp(-y))

    o_ref[...] = y.astype(o_ref.dtype)


def conv_bn_act(x_cnhw, w, gamma, beta, *, padding, upsample, act, out_dtype):
    """One decoder layer: [nearest 2x upsample] -> Conv2d(stride=1) ->
    BatchNorm2d(batch stats) -> activation.

    x_cnhw : (Cin, N, H, W) bf16, channel-leading layout (pre-upsample).
    w      : (KH, KW, Cin, Cout) f32 HWIO weights.
    Returns (Cout, N, Ho, Wo) in `out_dtype`.
    """
    Cin, N, H, W = x_cnhw.shape
    KH, KW, _, Cout = w.shape
    Hi, Wi = (2 * H, 2 * W) if upsample else (H, W)
    Ho = Hi + 2 * padding - KH + 1
    Wo = Wi + 2 * padding - KW + 1
    M = N * Ho * Wo
    K = KH * KW * Cin
    Mp = _round_up(M, 128)   # lane-aligned pixel axis
    Cp = _round_up(Cout, 8)  # sublane-aligned channel axis

    # im2col slab with the taps folded into the contraction dim, built
    # directly in (K, M) tap/channel-leading form (no big transposes), bf16.
    # The nearest 2x upsample is folded into the gather indices so the 4x
    # intermediate is never materialized.
    # (Glue JAX: Mosaic cannot express these unaligned gathers / reshapes
    #  in-kernel at these spatial shapes.)
    taps = []
    if upsample:
        assert padding == 0
        for kh in range(KH):
            ri = (kh + jnp.arange(Ho)) // 2
            x_r = jnp.take(x_cnhw, ri, axis=2)                    # (Cin,N,Ho,W)
            for kw in range(KW):
                ci = (kw + jnp.arange(Wo)) // 2
                taps.append(jnp.take(x_r, ci, axis=3).reshape(Cin, M))
    else:
        xp = jnp.pad(x_cnhw, ((0, 0), (0, 0),
                              (padding, padding), (padding, padding)))
        for kh in range(KH):
            for kw in range(KW):
                taps.append(xp[:, :, kh:kh + Ho, kw:kw + Wo].reshape(Cin, M))
    pt = jnp.pad(jnp.concatenate(taps, axis=0), ((0, 0), (0, Mp - M)))  # (K,Mp)

    wt = jnp.pad(w.reshape(K, Cout).T.astype(MXU_DTYPE),
                 ((0, Cp - Cout), (0, 0)))                        # (Cp, K) bf16
    g = jnp.pad(gamma.reshape(Cout, 1), ((0, Cp - Cout), (0, 0)))
    be = jnp.pad(beta.reshape(Cout, 1), ((0, Cp - Cout), (0, 0)))

    out = pl.pallas_call(
        functools.partial(_conv_bn_act_kernel, m_valid=M, act=act),
        out_shape=jax.ShapeDtypeStruct((Cp, Mp), out_dtype),
        in_specs=[pl.BlockSpec(memory_space=pltpu.MemorySpace.VMEM)] * 4,
        out_specs=pl.BlockSpec(memory_space=pltpu.MemorySpace.VMEM),
    )(pt, wt, g, be)

    return out[:Cout, :M].reshape(Cout, N, Ho, Wo)


def decoder_forward(x_nchw, params):
    # Channel-leading (C, N, H, W) bf16 layout end-to-end: channels map to
    # kernel sublanes, the flattened (N, Ho, Wo) pixel axis maps to lanes.
    x = jnp.transpose(x_nchw, (1, 0, 2, 3)).astype(MXU_DTYPE)
    layer_cfg = [("l1", 1, False, "relu"),
                 ("l2", 0, True, "relu"),
                 ("l3", 0, True, "relu"),
                 ("l4", 0, True, "relu"),
                 ("l5", 0, True, "sigmoid")]
    for name, pad, ups, act in layer_cfg:
        w, _, g, be = params[name]
        out_dtype = jnp.float32 if act == "sigmoid" else MXU_DTYPE
        x = conv_bn_act(x, w, g, be, padding=pad, upsample=ups, act=act,
                        out_dtype=out_dtype)
    return jnp.transpose(x, (1, 0, 2, 3))  # (C,N,H,W) -> (N,C,H,W)


def init_params(key, num_channels):
    c8, c4, c2, c1 = num_channels * 8, num_channels * 4, num_channels * 2, num_channels
    layer_defs = [
        ("l1", 2, c8, c8),
        ("l2", 2, c8, c4),
        ("l3", 2, c4, c2),
        ("l4", 2, c2, c1),
        ("l5", 3, c1, 3),
    ]
    params = {}
    for name, k, cin, cout in layer_defs:
        key, kw_, kb_, kg_, ke_ = jax.random.split(key, 5)
        bound = 1.0 / float(cin * k * k) ** 0.5
        w = jax.random.uniform(kw_, (k, k, cin, cout), jnp.float32, -bound, bound)
        b = jax.random.uniform(kb_, (cout,), jnp.float32, -bound, bound)
        # nn.BatchNorm2d defaults are gamma=1, beta=0; perturb slightly so the
        # affine path is actually exercised by the correctness check.
        gamma = 1.0 + 0.1 * jax.random.normal(kg_, (cout,), jnp.float32)
        beta = 0.1 * jax.random.normal(ke_, (cout,), jnp.float32)
        params[name] = (w, b, gamma, beta)
    return params


# ---- pure-JAX references (no Pallas) for correctness checking --------------
def upsample2x_nearest(x_nhwc):
    return jnp.repeat(jnp.repeat(x_nhwc, 2, axis=1), 2, axis=2)


def ref_forward(x_nchw, params, *, quantize):
    """Reference Decoder forward.  quantize=True replicates the kernel's bf16
    rounding points (input, weights, intermediate activations) with all math
    in f32, so it matches the kernel tightly; quantize=False is plain f32."""
    q = ((lambda a: a.astype(jnp.bfloat16).astype(jnp.float32))
         if quantize else (lambda a: a))
    x = q(jnp.transpose(x_nchw, (0, 2, 3, 1)))  # NHWC
    pads = {"l1": 1, "l2": 0, "l3": 0, "l4": 0, "l5": 0}
    for name in ["l1", "l2", "l3", "l4", "l5"]:
        w, b, g, be = params[name]
        p = pads[name]
        y = jax.lax.conv_general_dilated(
            x, q(w), window_strides=(1, 1), padding=[(p, p), (p, p)],
            dimension_numbers=("NHWC", "HWIO", "NHWC"),
            preferred_element_type=jnp.float32) + b.reshape(1, 1, 1, -1)
        mean = jnp.mean(y, axis=(0, 1, 2), keepdims=True)
        var = jnp.mean((y - mean) ** 2, axis=(0, 1, 2), keepdims=True)
        y = (y - mean) * jax.lax.rsqrt(var + BN_EPS) * g.reshape(1, 1, 1, -1) \
            + be.reshape(1, 1, 1, -1)
        if name == "l5":
            x = jax.nn.sigmoid(y)
        else:
            x = upsample2x_nearest(q(jax.nn.relu(y)))
    return jnp.transpose(x, (0, 3, 1, 2))


if __name__ == "__main__":
    num_channels = 4
    key = jax.random.PRNGKey(0)
    kx, kp = jax.random.split(key)
    # PyTorch-style NCHW input: (batch=2, num_channels*8=32, 4, 4)
    x = jax.random.normal(kx, (2, num_channels * 8, 4, 4), jnp.float32)
    params = init_params(kp, num_channels)

    out = jax.jit(decoder_forward)(x, params)
    out = jax.block_until_ready(out)
    assert out.shape == (2, 3, 64, 64), out.shape

    # Primary check: reference replicating the kernel's bf16 rounding points.
    ref_m = ref_forward(x, params, quantize=True)
    err_m = float(jnp.max(jnp.abs(out - ref_m)))
    assert jnp.allclose(out, ref_m, atol=3e-3, rtol=3e-3), err_m

    # Sanity check against the full-f32 module semantics (looser; covers the
    # intentional bf16 storage rounding).
    ref_f = ref_forward(x, params, quantize=False)
    err_f = float(jnp.max(jnp.abs(out - ref_f)))
    assert jnp.allclose(out, ref_f, atol=6e-2, rtol=6e-2), err_f

    print("KERNEL_OK")
</pallas_src>

<mosaic_0001>
module attributes {stable_mosaic.version = 11 : i64} {
  func.func @_conv_bn_act_kernel(%arg0: memref<128x128xbf16, #tpu.memory_space<vmem>>, %arg1: memref<32x128xbf16, #tpu.memory_space<vmem>>, %arg2: memref<32x1xf32, #tpu.memory_space<vmem>>, %arg3: memref<32x1xf32, #tpu.memory_space<vmem>>, %arg4: memref<32x128xbf16, #tpu.memory_space<vmem>>) attributes {dimension_semantics = [], scalar_prefetch = 0 : i64, scratch_operands = 0 : i64, tpu.core_type = #tpu.core_type<tc>} {
    %c0 = arith.constant 0 : index
    %c0_0 = arith.constant 0 : index
    %0 = vector.load %arg1[%c0, %c0_0] : memref<32x128xbf16, #tpu.memory_space<vmem>>, vector<32x128xbf16>
    %1 = arith.extf %0 : vector<32x128xbf16> to vector<32x128xf32>
    %c0_1 = arith.constant 0 : index
    %c0_2 = arith.constant 0 : index
    %2 = vector.load %arg0[%c0_1, %c0_2] : memref<128x128xbf16, #tpu.memory_space<vmem>>, vector<128x128xbf16>
    %3 = arith.extf %2 : vector<128x128xbf16> to vector<128x128xf32>
    %cst = arith.constant dense<0.000000e+00> : vector<32x128xf32>
    %4 = tpu.matmul %1, %3, %cst {dimension_numbers = #tpu.dot_dimension_numbers<[1], [0], [0], [1], [0, 0, 1, 1], [], []>} : vector<32x128xf32>, vector<128x128xf32>, vector<32x128xf32> -> vector<32x128xf32>
    %cst_3 = arith.constant dense<0.000000e+00> : vector<32xf32>
    %5 = vector.multi_reduction <add>, %4, %cst_3 [1] : vector<32x128xf32> to vector<32xf32>
    %6 = vector.shape_cast %5 : vector<32xf32> to vector<32x1xf32>
    %cst_4 = arith.constant 2.000000e-02 : f32
    %7 = vector.broadcast %cst_4 : f32 to vector<32x1xf32>
    %8 = arith.mulf %6, %7 : vector<32x1xf32>
    %9 = arith.mulf %4, %4 : vector<32x128xf32>
    %cst_5 = arith.constant dense<0.000000e+00> : vector<32xf32>
    %10 = vector.multi_reduction <add>, %9, %cst_5 [1] : vector<32x128xf32> to vector<32xf32>
    %11 = vector.shape_cast %10 : vector<32xf32> to vector<32x1xf32>
    %cst_6 = arith.constant 2.000000e-02 : f32
    %12 = vector.broadcast %cst_6 : f32 to vector<32x1xf32>
    %13 = arith.mulf %11, %12 : vector<32x1xf32>
    %14 = arith.mulf %8, %8 : vector<32x1xf32>
    %15 = arith.subf %13, %14 : vector<32x1xf32>
    %cst_7 = arith.constant 0.000000e+00 : f32
    %16 = vector.broadcast %cst_7 : f32 to vector<32x1xf32>
    %17 = arith.maximumf %15, %16 : vector<32x1xf32>
    %c0_8 = arith.constant 0 : index
    %c0_9 = arith.constant 0 : index
    %18 = vector.load %arg2[%c0_8, %c0_9] : memref<32x1xf32, #tpu.memory_space<vmem>>, vector<32x1xf32>
    %cst_10 = arith.constant 9.99999974E-6 : f32
    %19 = vector.broadcast %cst_10 : f32 to vector<32x1xf32>
    %20 = arith.addf %17, %19 : vector<32x1xf32>
    %21 = math.rsqrt %20 : vector<32x1xf32>
    %22 = arith.mulf %18, %21 : vector<32x1xf32>
    %c0_11 = arith.constant 0 : index
    %c0_12 = arith.constant 0 : index
    %23 = vector.load %arg3[%c0_11, %c0_12] : memref<32x1xf32, #tpu.memory_space<vmem>>, vector<32x1xf32>
    %24 = arith.mulf %8, %22 : vector<32x1xf32>
    %25 = arith.subf %23, %24 : vector<32x1xf32>
    %26 = vector.broadcast %22 : vector<32x1xf32> to vector<32x128xf32>
    %27 = arith.mulf %4, %26 : vector<32x128xf32>
    %28 = vector.broadcast %25 : vector<32x1xf32> to vector<32x128xf32>
    %29 = arith.addf %27, %28 : vector<32x128xf32>
    %cst_13 = arith.constant 0.000000e+00 : f32
    %30 = vector.broadcast %cst_13 : f32 to vector<32x128xf32>
    %31 = arith.maximumf %29, %30 : vector<32x128xf32>
    %32 = arith.truncf %31 : vector<32x128xf32> to vector<32x128xbf16>
    %c0_14 = arith.constant 0 : index
    %c0_15 = arith.constant 0 : index
    %33 = vector.load %arg4[%c0_14, %c0_15] : memref<32x128xbf16, #tpu.memory_space<vmem>>, vector<32x128xbf16>
    tpu.vector_store %arg4[%c0_14, %c0_15], %32 {strides = array<i32>} : memref<32x128xbf16, #tpu.memory_space<vmem>>, vector<32x128xbf16>,
    return
  }
}

module attributes {stable_mosaic.version = 11 : i64} {
  func.func @_conv_bn_act_kernel(%arg0: memref<128x256xbf16, #tpu.memory_space<vmem>>, %arg1: memref<16x128xbf16, #tpu.memory_space<vmem>>, %arg2: memref<16x1xf32, #tpu.memory_space<vmem>>, %arg3: memref<16x1xf32, #tpu.memory_space<vmem>>, %arg4: memref<16x256xbf16, #tpu.memory_space<vmem>>) attributes {dimension_semantics = [], scalar_prefetch = 0 : i64, scratch_operands = 0 : i64, tpu.core_type = #tpu.core_type<tc>} {
    %c0 = arith.constant 0 : index
    %c0_0 = arith.constant 0 : index
    %0 = vector.load %arg1[%c0, %c0_0] : memref<16x128xbf16, #tpu.memory_space<vmem>>, vector<16x128xbf16>
    %1 = arith.extf %0 : vector<16x128xbf16> to vector<16x128xf32>
    %c0_1 = arith.constant 0 : index
    %c0_2 = arith.constant 0 : index
    %2 = vector.load %arg0[%c0_1, %c0_2] : memref<128x256xbf16, #tpu.memory_space<vmem>>, vector<128x256xbf16>
    %3 = arith.extf %2 : vector<128x256xbf16> to vector<128x256xf32>
    %cst = arith.constant dense<0.000000e+00> : vector<16x256xf32>
    %4 = tpu.matmul %1, %3, %cst {dimension_numbers = #tpu.dot_dimension_numbers<[1], [0], [0], [1], [0, 0, 1, 1], [], []>} : vector<16x128xf32>, vector<128x256xf32>, vector<16x256xf32> -> vector<16x256xf32>
    %cst_3 = arith.constant dense<0.000000e+00> : vector<16xf32>
    %5 = vector.multi_reduction <add>, %4, %cst_3 [1] : vector<16x256xf32> to vector<16xf32>
    %6 = vector.shape_cast %5 : vector<16xf32> to vector<16x1xf32>
    %cst_4 = arith.constant 0.00617283955 : f32
    %7 = vector.broadcast %cst_4 : f32 to vector<16x1xf32>
    %8 = arith.mulf %6, %7 : vector<16x1xf32>
    %9 = arith.mulf %4, %4 : vector<16x256xf32>
    %cst_5 = arith.constant dense<0.000000e+00> : vector<16xf32>
    %10 = vector.multi_reduction <add>, %9, %cst_5 [1] : vector<16x256xf32> to vector<16xf32>
    %11 = vector.shape_cast %10 : vector<16xf32> to vector<16x1xf32>
    %cst_6 = arith.constant 0.00617283955 : f32
    %12 = vector.broadcast %cst_6 : f32 to vector<16x1xf32>
    %13 = arith.mulf %11, %12 : vector<16x1xf32>
    %14 = arith.mulf %8, %8 : vector<16x1xf32>
    %15 = arith.subf %13, %14 : vector<16x1xf32>
    %cst_7 = arith.constant 0.000000e+00 : f32
    %16 = vector.broadcast %cst_7 : f32 to vector<16x1xf32>
    %17 = arith.maximumf %15, %16 : vector<16x1xf32>
    %c0_8 = arith.constant 0 : index
    %c0_9 = arith.constant 0 : index
    %18 = vector.load %arg2[%c0_8, %c0_9] : memref<16x1xf32, #tpu.memory_space<vmem>>, vector<16x1xf32>
    %cst_10 = arith.constant 9.99999974E-6 : f32
    %19 = vector.broadcast %cst_10 : f32 to vector<16x1xf32>
    %20 = arith.addf %17, %19 : vector<16x1xf32>
    %21 = math.rsqrt %20 : vector<16x1xf32>
    %22 = arith.mulf %18, %21 : vector<16x1xf32>
    %c0_11 = arith.constant 0 : index
    %c0_12 = arith.constant 0 : index
    %23 = vector.load %arg3[%c0_11, %c0_12] : memref<16x1xf32, #tpu.memory_space<vmem>>, vector<16x1xf32>
    %24 = arith.mulf %8, %22 : vector<16x1xf32>
    %25 = arith.subf %23, %24 : vector<16x1xf32>
    %26 = vector.broadcast %22 : vector<16x1xf32> to vector<16x256xf32>
    %27 = arith.mulf %4, %26 : vector<16x256xf32>
    %28 = vector.broadcast %25 : vector<16x1xf32> to vector<16x256xf32>
    %29 = arith.addf %27, %28 : vector<16x256xf32>
    %cst_13 = arith.constant 0.000000e+00 : f32
    %30 = vector.broadcast %cst_13 : f32 to vector<16x256xf32>
    %31 = arith.maximumf %29, %30 : vector<16x256xf32>
    %32 = arith.truncf %31 : vector<16x256xf32> to vector<16x256xbf16>
    %c0_14 = arith.constant 0 : index
    %c0_15 = arith.constant 0 : index
    %33 = vector.load %arg4[%c0_14, %c0_15] : memref<16x256xbf16, #tpu.memory_space<vmem>>, vector<16x256xbf16>
    tpu.vector_store %arg4[%c0_14, %c0_15], %32 {strides = array<i32>} : memref<16x256xbf16, #tpu.memory_space<vmem>>, vector<16x256xbf16>,
    return
  }
}

module attributes {stable_mosaic.version = 11 : i64} {
  func.func @_conv_bn_act_kernel(%arg0: memref<64x640xbf16, #tpu.memory_space<vmem>>, %arg1: memref<8x64xbf16, #tpu.memory_space<vmem>>, %arg2: memref<8x1xf32, #tpu.memory_space<vmem>>, %arg3: memref<8x1xf32, #tpu.memory_space<vmem>>, %arg4: memref<8x640xbf16, #tpu.memory_space<vmem>>) attributes {dimension_semantics = [], scalar_prefetch = 0 : i64, scratch_operands = 0 : i64, tpu.core_type = #tpu.core_type<tc>} {
    %c0 = arith.constant 0 : index
    %c0_0 = arith.constant 0 : index
    %0 = vector.load %arg1[%c0, %c0_0] : memref<8x64xbf16, #tpu.memory_space<vmem>>, vector<8x64xbf16>
    %1 = arith.extf %0 : vector<8x64xbf16> to vector<8x64xf32>
    %c0_1 = arith.constant 0 : index
    %c0_2 = arith.constant 0 : index
    %2 = vector.load %arg0[%c0_1, %c0_2] : memref<64x640xbf16, #tpu.memory_space<vmem>>, vector<64x640xbf16>
    %3 = arith.extf %2 : vector<64x640xbf16> to vector<64x640xf32>
    %cst = arith.constant dense<0.000000e+00> : vector<8x640xf32>
    %4 = tpu.matmul %1, %3, %cst {dimension_numbers = #tpu.dot_dimension_numbers<[1], [0], [0], [1], [0, 0, 1, 1], [], []>} : vector<8x64xf32>, vector<64x640xf32>, vector<8x640xf32> -> vector<8x640xf32>
    %cst_3 = arith.constant dense<0.000000e+00> : vector<8xf32>
    %5 = vector.multi_reduction <add>, %4, %cst_3 [1] : vector<8x640xf32> to vector<8xf32>
    %6 = vector.shape_cast %5 : vector<8xf32> to vector<8x1xf32>
    %cst_4 = arith.constant 0.00173010386 : f32
    %7 = vector.broadcast %cst_4 : f32 to vector<8x1xf32>
    %8 = arith.mulf %6, %7 : vector<8x1xf32>
    %9 = arith.mulf %4, %4 : vector<8x640xf32>
    %cst_5 = arith.constant dense<0.000000e+00> : vector<8xf32>
    %10 = vector.multi_reduction <add>, %9, %cst_5 [1] : vector<8x640xf32> to vector<8xf32>
    %11 = vector.shape_cast %10 : vector<8xf32> to vector<8x1xf32>
    %cst_6 = arith.constant 0.00173010386 : f32
    %12 = vector.broadcast %cst_6 : f32 to vector<8x1xf32>
    %13 = arith.mulf %11, %12 : vector<8x1xf32>
    %14 = arith.mulf %8, %8 : vector<8x1xf32>
    %15 = arith.subf %13, %14 : vector<8x1xf32>
    %cst_7 = arith.constant 0.000000e+00 : f32
    %16 = vector.broadcast %cst_7 : f32 to vector<8x1xf32>
    %17 = arith.maximumf %15, %16 : vector<8x1xf32>
    %c0_8 = arith.constant 0 : index
    %c0_9 = arith.constant 0 : index
    %18 = vector.load %arg2[%c0_8, %c0_9] : memref<8x1xf32, #tpu.memory_space<vmem>>, vector<8x1xf32>
    %cst_10 = arith.constant 9.99999974E-6 : f32
    %19 = vector.broadcast %cst_10 : f32 to vector<8x1xf32>
    %20 = arith.addf %17, %19 : vector<8x1xf32>
    %21 = math.rsqrt %20 : vector<8x1xf32>
    %22 = arith.mulf %18, %21 : vector<8x1xf32>
    %c0_11 = arith.constant 0 : index
    %c0_12 = arith.constant 0 : index
    %23 = vector.load %arg3[%c0_11, %c0_12] : memref<8x1xf32, #tpu.memory_space<vmem>>, vector<8x1xf32>
    %24 = arith.mulf %8, %22 : vector<8x1xf32>
    %25 = arith.subf %23, %24 : vector<8x1xf32>
    %26 = vector.broadcast %22 : vector<8x1xf32> to vector<8x640xf32>
    %27 = arith.mulf %4, %26 : vector<8x640xf32>
    %28 = vector.broadcast %25 : vector<8x1xf32> to vector<8x640xf32>
    %29 = arith.addf %27, %28 : vector<8x640xf32>
    %cst_13 = arith.constant 0.000000e+00 : f32
    %30 = vector.broadcast %cst_13 : f32 to vector<8x640xf32>
    %31 = arith.maximumf %29, %30 : vector<8x640xf32>
    %32 = arith.truncf %31 : vector<8x640xf32> to vector<8x640xbf16>
    %c0_14 = arith.constant 0 : index
    %c0_15 = arith.constant 0 : index
    %33 = vector.load %arg4[%c0_14, %c0_15] : memref<8x640xbf16, #tpu.memory_space<vmem>>, vector<8x640xbf16>
    tpu.vector_store %arg4[%c0_14, %c0_15], %32 {strides = array<i32>} : memref<8x640xbf16, #tpu.memory_space<vmem>>, vector<8x640xbf16>,
    return
  }
}

module attributes {stable_mosaic.version = 11 : i64} {
  func.func @_conv_bn_act_kernel(%arg0: memref<32x2304xbf16, #tpu.memory_space<vmem>>, %arg1: memref<8x32xbf16, #tpu.memory_space<vmem>>, %arg2: memref<8x1xf32, #tpu.memory_space<vmem>>, %arg3: memref<8x1xf32, #tpu.memory_space<vmem>>, %arg4: memref<8x2304xbf16, #tpu.memory_space<vmem>>) attributes {dimension_semantics = [], scalar_prefetch = 0 : i64, scratch_operands = 0 : i64, tpu.core_type = #tpu.core_type<tc>} {
    %c0 = arith.constant 0 : index
    %c0_0 = arith.constant 0 : index
    %0 = vector.load %arg1[%c0, %c0_0] : memref<8x32xbf16, #tpu.memory_space<vmem>>, vector<8x32xbf16>
    %1 = arith.extf %0 : vector<8x32xbf16> to vector<8x32xf32>
    %c0_1 = arith.constant 0 : index
    %c0_2 = arith.constant 0 : index
    %2 = vector.load %arg0[%c0_1, %c0_2] : memref<32x2304xbf16, #tpu.memory_space<vmem>>, vector<32x2304xbf16>
    %3 = arith.extf %2 : vector<32x2304xbf16> to vector<32x2304xf32>
    %cst = arith.constant dense<0.000000e+00> : vector<8x2304xf32>
    %4 = tpu.matmul %1, %3, %cst {dimension_numbers = #tpu.dot_dimension_numbers<[1], [0], [0], [1], [0, 0, 1, 1], [], []>} : vector<8x32xf32>, vector<32x2304xf32>, vector<8x2304xf32> -> vector<8x2304xf32>
    %cst_3 = arith.constant dense<0.000000e+00> : vector<8xf32>
    %5 = vector.multi_reduction <add>, %4, %cst_3 [1] : vector<8x2304xf32> to vector<8xf32>
    %6 = vector.shape_cast %5 : vector<8xf32> to vector<8x1xf32>
    %cst_4 = arith.constant 4.5913682E-4 : f32
    %7 = vector.broadcast %cst_4 : f32 to vector<8x1xf32>
    %8 = arith.mulf %6, %7 : vector<8x1xf32>
    %9 = arith.mulf %4, %4 : vector<8x2304xf32>
    %cst_5 = arith.constant dense<0.000000e+00> : vector<8xf32>
    %10 = vector.multi_reduction <add>, %9, %cst_5 [1] : vector<8x2304xf32> to vector<8xf32>
    %11 = vector.shape_cast %10 : vector<8xf32> to vector<8x1xf32>
    %cst_6 = arith.constant 4.5913682E-4 : f32
    %12 = vector.broadcast %cst_6 : f32 to vector<8x1xf32>
    %13 = arith.mulf %11, %12 : vector<8x1xf32>
    %14 = arith.mulf %8, %8 : vector<8x1xf32>
    %15 = arith.subf %13, %14 : vector<8x1xf32>
    %cst_7 = arith.constant 0.000000e+00 : f32
    %16 = vector.broadcast %cst_7 : f32 to vector<8x1xf32>
    %17 = arith.maximumf %15, %16 : vector<8x1xf32>
    %c0_8 = arith.constant 0 : index
    %c0_9 = arith.constant 0 : index
    %18 = vector.load %arg2[%c0_8, %c0_9] : memref<8x1xf32, #tpu.memory_space<vmem>>, vector<8x1xf32>
    %cst_10 = arith.constant 9.99999974E-6 : f32
    %19 = vector.broadcast %cst_10 : f32 to vector<8x1xf32>
    %20 = arith.addf %17, %19 : vector<8x1xf32>
    %21 = math.rsqrt %20 : vector<8x1xf32>
    %22 = arith.mulf %18, %21 : vector<8x1xf32>
    %c0_11 = arith.constant 0 : index
    %c0_12 = arith.constant 0 : index
    %23 = vector.load %arg3[%c0_11, %c0_12] : memref<8x1xf32, #tpu.memory_space<vmem>>, vector<8x1xf32>
    %24 = arith.mulf %8, %22 : vector<8x1xf32>
    %25 = arith.subf %23, %24 : vector<8x1xf32>
    %26 = vector.broadcast %22 : vector<8x1xf32> to vector<8x2304xf32>
    %27 = arith.mulf %4, %26 : vector<8x2304xf32>
    %28 = vector.broadcast %25 : vector<8x1xf32> to vector<8x2304xf32>
    %29 = arith.addf %27, %28 : vector<8x2304xf32>
    %cst_13 = arith.constant 0.000000e+00 : f32
    %30 = vector.broadcast %cst_13 : f32 to vector<8x2304xf32>
    %31 = arith.maximumf %29, %30 : vector<8x2304xf32>
    %32 = arith.truncf %31 : vector<8x2304xf32> to vector<8x2304xbf16>
    %c0_14 = arith.constant 0 : index
    %c0_15 = arith.constant 0 : index
    %33 = vector.load %arg4[%c0_14, %c0_15] : memref<8x2304xbf16, #tpu.memory_space<vmem>>, vector<8x2304xbf16>
    tpu.vector_store %arg4[%c0_14, %c0_15], %32 {strides = array<i32>} : memref<8x2304xbf16, #tpu.memory_space<vmem>>, vector<8x2304xbf16>,
    return
  }
}

module attributes {stable_mosaic.version = 11 : i64} {
  func.func @_conv_bn_act_kernel(%arg0: memref<36x8192xbf16, #tpu.memory_space<vmem>>, %arg1: memref<8x36xbf16, #tpu.memory_space<vmem>>, %arg2: memref<8x1xf32, #tpu.memory_space<vmem>>, %arg3: memref<8x1xf32, #tpu.memory_space<vmem>>, %arg4: memref<8x8192xf32, #tpu.memory_space<vmem>>) attributes {dimension_semantics = [], scalar_prefetch = 0 : i64, scratch_operands = 0 : i64, tpu.core_type = #tpu.core_type<tc>} {
    %c0 = arith.constant 0 : index
    %c0_0 = arith.constant 0 : index
    %0 = vector.load %arg1[%c0, %c0_0] : memref<8x36xbf16, #tpu.memory_space<vmem>>, vector<8x36xbf16>
    %1 = arith.extf %0 : vector<8x36xbf16> to vector<8x36xf32>
    %c0_1 = arith.constant 0 : index
    %c0_2 = arith.constant 0 : index
    %2 = vector.load %arg0[%c0_1, %c0_2] : memref<36x8192xbf16, #tpu.memory_space<vmem>>, vector<36x8192xbf16>
    %3 = arith.extf %2 : vector<36x8192xbf16> to vector<36x8192xf32>
    %cst = arith.constant dense<0.000000e+00> : vector<8x8192xf32>
    %4 = tpu.matmul %1, %3, %cst {dimension_numbers = #tpu.dot_dimension_numbers<[1], [0], [0], [1], [0, 0, 1, 1], [], []>} : vector<8x36xf32>, vector<36x8192xf32>, vector<8x8192xf32> -> vector<8x8192xf32>
    %cst_3 = arith.constant dense<0.000000e+00> : vector<8xf32>
    %5 = vector.multi_reduction <add>, %4, %cst_3 [1] : vector<8x8192xf32> to vector<8xf32>
    %6 = vector.shape_cast %5 : vector<8xf32> to vector<8x1xf32>
    %cst_4 = arith.constant 1.22070313E-4 : f32
    %7 = vector.broadcast %cst_4 : f32 to vector<8x1xf32>
    %8 = arith.mulf %6, %7 : vector<8x1xf32>
    %9 = arith.mulf %4, %4 : vector<8x8192xf32>
    %cst_5 = arith.constant dense<0.000000e+00> : vector<8xf32>
    %10 = vector.multi_reduction <add>, %9, %cst_5 [1] : vector<8x8192xf32> to vector<8xf32>
    %11 = vector.shape_cast %10 : vector<8xf32> to vector<8x1xf32>
    %cst_6 = arith.constant 1.22070313E-4 : f32
    %12 = vector.broadcast %cst_6 : f32 to vector<8x1xf32>
    %13 = arith.mulf %11, %12 : vector<8x1xf32>
    %14 = arith.mulf %8, %8 : vector<8x1xf32>
    %15 = arith.subf %13, %14 : vector<8x1xf32>
    %cst_7 = arith.constant 0.000000e+00 : f32
    %16 = vector.broadcast %cst_7 : f32 to vector<8x1xf32>
    %17 = arith.maximumf %15, %16 : vector<8x1xf32>
    %c0_8 = arith.constant 0 : index
    %c0_9 = arith.constant 0 : index
    %18 = vector.load %arg2[%c0_8, %c0_9] : memref<8x1xf32, #tpu.memory_space<vmem>>, vector<8x1xf32>
    %cst_10 = arith.constant 9.99999974E-6 : f32
    %19 = vector.broadcast %cst_10 : f32 to vector<8x1xf32>
    %20 = arith.addf %17, %19 : vector<8x1xf32>
    %21 = math.rsqrt %20 : vector<8x1xf32>
    %22 = arith.mulf %18, %21 : vector<8x1xf32>
    %c0_11 = arith.constant 0 : index
    %c0_12 = arith.constant 0 : index
    %23 = vector.load %arg3[%c0_11, %c0_12] : memref<8x1xf32, #tpu.memory_space<vmem>>, vector<8x1xf32>
    %24 = arith.mulf %8, %22 : vector<8x1xf32>
    %25 = arith.subf %23, %24 : vector<8x1xf32>
    %26 = vector.broadcast %22 : vector<8x1xf32> to vector<8x8192xf32>
    %27 = arith.mulf %4, %26 : vector<8x8192xf32>
    %28 = vector.broadcast %25 : vector<8x1xf32> to vector<8x8192xf32>
    %29 = arith.addf %27, %28 : vector<8x8192xf32>
    %cst_13 = arith.constant 0.000000e+00 : f32
    %30 = vector.broadcast %cst_13 : f32 to vector<8x8192xf32>
    %31 = arith.subf %30, %29 : vector<8x8192xf32>
    %32 = math.exp %31 : vector<8x8192xf32>
    %cst_14 = arith.constant 1.000000e+00 : f32
    %33 = vector.broadcast %cst_14 : f32 to vector<8x8192xf32>
    %34 = arith.addf %33, %32 : vector<8x8192xf32>
    %cst_15 = arith.constant 1.000000e+00 : f32
    %35 = vector.broadcast %cst_15 : f32 to vector<8x8192xf32>
    %36 = arith.divf %35, %34 : vector<8x8192xf32>
    %c0_16 = arith.constant 0 : index
    %c0_17 = arith.constant 0 : index
    %37 = vector.load %arg4[%c0_16, %c0_17] : memref<8x8192xf32, #tpu.memory_space<vmem>>, vector<8x8192xf32>
    tpu.vector_store %arg4[%c0_16, %c0_17], %36 {strides = array<i32>} : memref<8x8192xf32, #tpu.memory_space<vmem>>, vector<8x8192xf32>,
    return
  }
}

</mosaic_0001>

<llo_original>
// kernel: decoder_forward.5
$region0: #{decoder_forward.5}
  #allocation0 [shape = 'u32[]', space=smem, size = 0x4, offset = 0x4, fixed_abs, tag = 'smem constant byte address 0x4 - core index']
  #allocation1 [shape = 'u32[144,128]{1,0:T(1,128)}', space=vmem, size = 0x12000, scoped, tag = 'internal scratch']
  %s0 = inlined_call_operand.vmem [shape: bf16[128,128], index: 0, kind: input, shape index: {}]
  %s1 = inlined_call_operand.vmem [shape: bf16[32,128], index: 1, kind: input, shape index: {}]
  %s2 = inlined_call_operand.vmem [shape: f32[32,1], index: 2, kind: input, shape index: {}]
  %s3 = inlined_call_operand.vmem [shape: f32[32,1], index: 3, kind: input, shape index: {}]
  %s4 = inlined_call_operand.vmem [shape: bf16[32,128], index: 4, kind: output, shape index: {}]
  %s5 = sld [smem:[#allocation0]]
  $region26: #{decoder_forward.5} parent=0
    _
  %s7 = ssub.s32 1, %s5
  %s8 = scalar_select 0, %s7, %s5
  // Predicated region
  $region2: #{decoder_forward.5} parent=0 // pred_check
    _
  $region3: #{decoder_forward.5} parent=0 // pred_check_branch
    %10 = sbr.rel (0) target = $region5
  $region4: #{decoder_forward.5} parent=0 // pred_region
    _
  $region5: #{decoder_forward.5} parent=0 // pred_fallthru
    _
  // Predicated region
  $region6: #{decoder_forward.5} parent=0 // pred_check
    _
  $region7: #{decoder_forward.5} parent=0 // pred_check_branch
    %12 = sbr.rel (0) target = $region9
  $region8: #{decoder_forward.5} parent=0 // pred_region
    _
  $region9: #{decoder_forward.5} parent=0 // pred_fallthru
    _
  // Predicated region
  $region10: #{decoder_forward.5} parent=0 // pred_check
    _
  $region11: #{decoder_forward.5} parent=0 // pred_check_branch
    %14 = sbr.rel (0) target = $region13
  $region12: #{decoder_forward.5} parent=0 // pred_region
    _
  $region13: #{decoder_forward.5} parent=0 // pred_fallthru
    _
  // Predicated region
  $region14: #{decoder_forward.5} parent=0 // pred_check
    _
  $region15: #{decoder_forward.5} parent=0 // pred_check_branch
    %16 = sbr.rel (0) target = $region17
  $region16: #{decoder_forward.5} parent=0 // pred_region
    _
  $region17: #{decoder_forward.5} parent=0 // pred_fallthru
    _
  %v17 = vld [vmem:[%s1] sm:$0xf]
  %v18 = vld [vmem:[%s1 + $0x4] sm:$0xf]
  %v19 = vld [vmem:[%s1 + $0x8] sm:$0xf]
  %v20 = vld [vmem:[%s1 + $0xc] sm:$0xf]
  %v21 = vunpack.c.l.bf16 %v17
  %v22 = vunpack.c.l.bf16 %v18
  %v23 = vunpack.c.l.bf16 %v19
  %v24 = vunpack.c.l.bf16 %v20
  %v25 = vld [vmem:[%s0] sm:$0xf]
  %v26 = vld [vmem:[%s0 + $0x4] sm:$0xf]
  %v27 = vld [vmem:[%s0 + $0x8] sm:$0xf]
  %v28 = vld [vmem:[%s0 + $0xc] sm:$0xf]
  %v29 = vld [vmem:[%s0 + $0x10] sm:$0xf]
  %v30 = vld [vmem:[%s0 + $0x14] sm:$0xf]
  %v31 = vld [vmem:[%s0 + $0x18] sm:$0xf]
  %v32 = vld [vmem:[%s0 + $0x1c] sm:$0xf]
  %v33 = vld [vmem:[%s0 + $0x20] sm:$0xf]
  %v34 = vld [vmem:[%s0 + $0x24] sm:$0xf]
  %v35 = vld [vmem:[%s0 + $0x28] sm:$0xf]
  %v36 = vld [vmem:[%s0 + $0x2c] sm:$0xf]
  %v37 = vld [vmem:[%s0 + $0x30] sm:$0xf]
  %v38 = vld [vmem:[%s0 + $0x34] sm:$0xf]
  %v39 = vld [vmem:[%s0 + $0x38] sm:$0xf]
  %v40 = vld [vmem:[%s0 + $0x3c] sm:$0xf]
  %v41 = vunpack.c.l.bf16 %v25
  %v42 = vunpack.c.l.bf16 %v26
  %v43 = vunpack.c.l.bf16 %v27
  %v44 = vunpack.c.l.bf16 %v28
  %v45 = vunpack.c.l.bf16 %v29
  %v46 = vunpack.c.l.bf16 %v30
  %v47 = vunpack.c.l.bf16 %v31
  %v48 = vunpack.c.l.bf16 %v32
  %v49 = vunpack.c.l.bf16 %v33
  %v50 = vunpack.c.l.bf16 %v34
  %v51 = vunpack.c.l.bf16 %v35
  %v52 = vunpack.c.l.bf16 %v36
  %v53 = vunpack.c.l.bf16 %v37
  %v54 = vunpack.c.l.bf16 %v38
  %v55 = vunpack.c.l.bf16 %v39
  %v56 = vunpack.c.l.bf16 %v40
  %57 = vmatprep.subr.mxu0 0.0
  %58 = vmatpush1.msra.mxu0 %v41
  %59 = vmatprep.subr.mxu0 0.0
  %60 = vmatpush1.msra.mxu0 %v42
  %61 = vmatprep.subr.mxu0 0.0
  %62 = vmatpush1.msra.mxu0 %v43
  %63 = vmatprep.subr.mxu0 0.0
  %64 = vmatpush1.msra.mxu0 %v44
  %65 = vmatprep.subr.mxu0 0.0
  %66 = vmatpush1.msra.mxu0 %v45
  %67 = vmatprep.subr.mxu0 0.0
  %68 = vmatpush1.msra.mxu0 %v46
  %69 = vmatprep.subr.mxu0 0.0
  %70 = vmatpush1.msra.mxu0 %v47
  %71 = vmatprep.subr.mxu0 0.0
  %72 = vmatpush1.msra.mxu0 %v48
  %73 = vmatprep.subr.mxu0 0.0
  %74 = vmatpush1.msra.mxu0 %v49
  %75 = vmatprep.subr.mxu0 0.0
  %76 = vmatpush1.msra.mxu0 %v50
  %77 = vmatprep.subr.mxu0 0.0
  %78 = vmatpush1.msra.mxu0 %v51
  %79 = vmatprep.subr.mxu0 0.0
  %80 = vmatpush1.msra.mxu0 %v52
  %81 = vmatprep.subr.mxu0 0.0
  %82 = vmatpush1.msra.mxu0 %v53
  %83 = vmatprep.subr.mxu0 0.0
  %84 = vmatpush1.msra.mxu0 %v54
  %85 = vmatprep.subr.mxu0 0.0
  %86 = vmatpush1.msra.mxu0 %v55
  %87 = vmatprep.subr.mxu0 0.0
  %88 = vmatpush1.msra.mxu0 %v56
  %89 = vmatprep.subr.mxu0 0.0
  %90 = vmatpush1.msra.mxu0 0.0
  %91 = vmatprep.subr.mxu0 0.0
  %92 = vmatpush1.msra.mxu0 0.0
  %93 = vmatprep.subr.mxu0 0.0
  %94 = vmatpush1.msra.mxu0 0.0
  %95 = vmatprep.subr.mxu0 0.0
  %96 = vmatpush1.msra.mxu0 0.0
  %97 = vmatprep.subr.mxu0 0.0
  %98 = vmatpush1.msra.mxu0 0.0
  %99 = vmatprep.subr.mxu0 0.0
  %100 = vmatpush1.msra.mxu0 0.0
  %101 = vmatprep.subr.mxu0 0.0
  %102 = vmatpush1.msra.mxu0 0.0
  %103 = vmatprep.subr.mxu0 0.0
  %104 = vmatpush1.msra.mxu0 0.0
  %105 = vmatprep.subr.mxu0 0.0
  %106 = vmatpush1.msra.mxu0 0.0
  %107 = vmatprep.subr.mxu0 0.0
  %108 = vmatpush1.msra.mxu0 0.0
  %109 = vmatprep.subr.mxu0 0.0
  %110 = vmatpush1.msra.mxu0 0.0
  %111 = vmatprep.subr.mxu0 0.0
  %112 = vmatpush1.msra.mxu0 0.0
  %113 = vmatprep.subr.mxu0 0.0
  %114 = vmatpush1.msra.mxu0 0.0
  %115 = vmatprep.subr.mxu0 0.0
  %116 = vmatpush1.msra.mxu0 0.0
  %117 = vmatprep.subr.mxu0 0.0
  %118 = vmatpush1.msra.mxu0 0.0
  %119 = vmatprep.subr.mxu0 0.0
  %120 = vmatpush1.msra.mxu0 0.0
  %121 = vmatprep.mubr.f32.mxu0 0.0
  %122 = vmatmul.mubr.f32.gmra.mrb[0].mxu0 %v21
  %v123 = vpop.f32.mrb[0].mxu0
  %v124 = vadd.f32 0.0, %v123
  %v125 = vpop.f32.mrb[0].mxu0
  %126 = vmatprep.mubr.f32.mxu0 0.0
  %127 = vmatmul.mubr.f32.gmra.mrb[0].mxu0 %v22
  %v128 = vpop.f32.mrb[0].mxu0
  %v129 = vadd.f32 0.0, %v128
  %v130 = vpop.f32.mrb[0].mxu0
  %131 = vmatprep.mubr.f32.mxu0 0.0
  %132 = vmatmul.mubr.f32.gmra.mrb[0].mxu0 %v23
  %v133 = vpop.f32.mrb[0].mxu0
  %v134 = vadd.f32 0.0, %v133
  %v135 = vpop.f32.mrb[0].mxu0
  %136 = vmatprep.mubr.f32.mxu0 0.0
  %137 = vmatmul.mubr.f32.gmra.mrb[0].mxu0 %v24
  %v138 = vpop.f32.mrb[0].mxu0
  %v139 = vadd.f32 0.0, %v138
  %v140 = vpop.f32.mrb[0].mxu0
  %141 = vdwg.mxu0
  %142 = vadd.xlane.f32.xlu0 %v124
  %v143 = vpop.xlane.xlu0 %142
  %144 = vadd.xlane.f32.xlu0 %v129
  %v145 = vpop.xlane.xlu0 %144
  %146 = vadd.xlane.f32.xlu0 %v134
  %v147 = vpop.xlane.xlu0 %146
  %148 = vadd.xlane.f32.xlu0 %v139
  %v149 = vpop.xlane.xlu0 %148
  %v150 = vmul.f32 %v143, 0.02
  %v151 = vmul.f32 %v145, 0.02
  %v152 = vmul.f32 %v147, 0.02
  %v153 = vmul.f32 %v149, 0.02
  %v154 = vmul.f32 %v124, %v124
  %v155 = vmul.f32 %v129, %v129
  %v156 = vmul.f32 %v134, %v134
  %v157 = vmul.f32 %v139, %v139
  %158 = vadd.xlane.f32.xlu0 %v154
  %v159 = vpop.xlane.xlu0 %158
  %160 = vadd.xlane.f32.xlu0 %v155
  %v161 = vpop.xlane.xlu0 %160
  %162 = vadd.xlane.f32.xlu0 %v156
  %v163 = vpop.xlane.xlu0 %162
  %164 = vadd.xlane.f32.xlu0 %v157
  %v165 = vpop.xlane.xlu0 %164
  %v166 = vmul.f32 %v159, 0.02
  %v167 = vmul.f32 %v161, 0.02
  %v168 = vmul.f32 %v163, 0.02
  %v169 = vmul.f32 %v165, 0.02
  %v170 = vmul.f32 %v150, %v150
  %v171 = vmul.f32 %v151, %v151
  %v172 = vmul.f32 %v152, %v152
  %v173 = vmul.f32 %v153, %v153
  %v174 = vsub.f32 %v166, %v170
  %v175 = vsub.f32 %v167, %v171
  %v176 = vsub.f32 %v168, %v172
  %v177 = vsub.f32 %v169, %v173
  %v178 = vmax.f32 %v174, 0.0
  %v179 = vmax.f32 %v175, 0.0
  %v180 = vmax.f32 %v176, 0.0
  %v181 = vmax.f32 %v177, 0.0
  %v182 = vld [vmem:[%s2] sm:$0xff]
  %v183 = vld [vmem:[%s2 + $0x8] sm:$0xff]
  %v184 = vld [vmem:[%s2 + $0x10] sm:$0xff]
  %v185 = vld [vmem:[%s2 + $0x18] sm:$0xff]
  %v186 = vadd.f32 %v178, 1e-05
  %v187 = vadd.f32 %v179, 1e-05
  %v188 = vadd.f32 %v180, 1e-05
  %v189 = vadd.f32 %v181, 1e-05
  %v190 = vrsqrt.pop %v186
  %v191 = vrsqrt.pop %v187
  %v192 = vrsqrt.pop %v188
  %v193 = vrsqrt.pop %v189
  %v194 = vmul.f32 %v182, %v190
  %v195 = vmul.f32 %v183, %v191
  %v196 = vmul.f32 %v184, %v192
  %v197 = vmul.f32 %v185, %v193
  %v198 = vld [vmem:[%s3] sm:$0xff]
  %v199 = vld [vmem:[%s3 + $0x8] sm:$0xff]
  %v200 = vld [vmem:[%s3 + $0x10] sm:$0xff]
  %v201 = vld [vmem:[%s3 + $0x18] sm:$0xff]
  %v202 = vmul.f32 %v150, %v194
  %v203 = vmul.f32 %v151, %v195
  %v204 = vmul.f32 %v152, %v196
  %v205 = vmul.f32 %v153, %v197
  %v206 = vsub.f32 %v198, %v202
  %v207 = vsub.f32 %v199, %v203
  %v208 = vsub.f32 %v200, %v204
  %v209 = vsub.f32 %v201, %v205
  %211 = vset.pattern.permute.xlu0 0
  %212 = vperm.xlu0 %211, %v194
  %v213 = vpop.permute.xlu0 %212
  %216 = vset.pattern.permute.xlu0 0
  %217 = vperm.xlu0 %216, %v195
  %v218 = vpop.permute.xlu0 %217
  %221 = vset.pattern.permute.xlu0 0
  %222 = vperm.xlu0 %221, %v196
  %v223 = vpop.permute.xlu0 %222
  %226 = vset.pattern.permute.xlu0 0
  %227 = vperm.xlu0 %226, %v197
  %v228 = vpop.permute.xlu0 %227
  %v230 = vmul.f32 %v124, %v213
  %v231 = vmul.f32 %v129, %v218
  %v232 = vmul.f32 %v134, %v223
  %v233 = vmul.f32 %v139, %v228
  %235 = vset.pattern.permute.xlu0 0
  %236 = vperm.xlu0 %235, %v206
  %v237 = vpop.permute.xlu0 %236
  %240 = vset.pattern.permute.xlu0 0
  %241 = vperm.xlu0 %240, %v207
  %v242 = vpop.permute.xlu0 %241
  %245 = vset.pattern.permute.xlu0 0
  %246 = vperm.xlu0 %245, %v208
  %v247 = vpop.permute.xlu0 %246
  %250 = vset.pattern.permute.xlu0 0
  %251 = vperm.xlu0 %250, %v209
  %v252 = vpop.permute.xlu0 %251
  %v254 = vadd.f32 %v230, %v237
  %v255 = vadd.f32 %v231, %v242
  %v256 = vadd.f32 %v232, %v247
  %v257 = vadd.f32 %v233, %v252
  %v258 = vmax.f32 %v254, 0.0
  %v259 = vmax.f32 %v255, 0.0
  %v260 = vmax.f32 %v256, 0.0
  %v261 = vmax.f32 %v257, 0.0
  %v262 = vpack.c.bf16 %v259, %v258
  %v263 = vpack.c.bf16 %v261, %v260
  %v266 = vunpack.c.l.b16 %v262
  %v267 = vunpack.c.h.b16 %v262
  %v268 = vunpack.c.l.b16 %v263
  %v269 = vunpack.c.h.b16 %v263
  %v270 = vpack.c.b16 %v266, %v266
  %v271 = vpack.c.b16 %v267, %v267
  %v272 = vpack.c.b16 %v268, %v268
  %v273 = vpack.c.b16 %v269, %v269
  %278 = vst [vmem:[%s4] sm:$0xf] %v270
  %279 = vst [vmem:[%s4 + $0x4] sm:$0xf] %v271
  %280 = vst [vmem:[%s4 + $0x8] sm:$0xf] %v272
  %281 = vst [vmem:[%s4 + $0xc] sm:$0xf] %v273
  // Predicated region
  $region18: #{decoder_forward.5} parent=0 // pred_check
    _
  $region19: #{decoder_forward.5} parent=0 // pred_check_branch
    %283 = sbr.rel (0) target = $region21
  $region20: #{decoder_forward.5} parent=0 // pred_region
    _
  $region21: #{decoder_forward.5} parent=0 // pred_fallthru
    _
  // Predicated region
  $region22: #{decoder_forward.5} parent=0 // pred_check
    _
  $region23: #{decoder_forward.5} parent=0 // pred_check_branch
    %285 = sbr.rel (0) target = $region25
  $region24: #{decoder_forward.5} parent=0 // pred_region
    _
  $region25: #{decoder_forward.5} parent=0 // pred_fallthru
    _

// kernel: decoder_forward.6
$region0: #{decoder_forward.6}
  #allocation0 [shape = 'u32[]', space=smem, size = 0x4, offset = 0x4, fixed_abs, tag = 'smem constant byte address 0x4 - core index']
  #allocation1 [shape = 'u32[144,128]{1,0:T(1,128)}', space=vmem, size = 0x12000, scoped, tag = 'internal scratch']
  %s0 = inlined_call_operand.vmem [shape: bf16[128,256], index: 0, kind: input, shape index: {}]
  %s1 = inlined_call_operand.vmem [shape: bf16[16,128], index: 1, kind: input, shape index: {}]
  %s2 = inlined_call_operand.vmem [shape: f32[16,1], index: 2, kind: input, shape index: {}]
  %s3 = inlined_call_operand.vmem [shape: f32[16,1], index: 3, kind: input, shape index: {}]
  %s4 = inlined_call_operand.vmem [shape: bf16[16,256], index: 4, kind: output, shape index: {}]
  %s5 = sld [smem:[#allocation0]]
  $region26: #{decoder_forward.6} parent=0
    _
  %s7 = ssub.s32 1, %s5
  %s8 = scalar_select 0, %s7, %s5
  // Predicated region
  $region2: #{decoder_forward.6} parent=0 // pred_check
    _
  $region3: #{decoder_forward.6} parent=0 // pred_check_branch
    %10 = sbr.rel (0) target = $region5
  $region4: #{decoder_forward.6} parent=0 // pred_region
    _
  $region5: #{decoder_forward.6} parent=0 // pred_fallthru
    _
  // Predicated region
  $region6: #{decoder_forward.6} parent=0 // pred_check
    _
  $region7: #{decoder_forward.6} parent=0 // pred_check_branch
    %12 = sbr.rel (0) target = $region9
  $region8: #{decoder_forward.6} parent=0 // pred_region
    _
  $region9: #{decoder_forward.6} parent=0 // pred_fallthru
    _
  // Predicated region
  $region10: #{decoder_forward.6} parent=0 // pred_check
    _
  $region11: #{decoder_forward.6} parent=0 // pred_check_branch
    %14 = sbr.rel (0) target = $region13
  $region12: #{decoder_forward.6} parent=0 // pred_region
    _
  $region13: #{decoder_forward.6} parent=0 // pred_fallthru
    _
  // Predicated region
  $region14: #{decoder_forward.6} parent=0 // pred_check
    _
  $region15: #{decoder_forward.6} parent=0 // pred_check_branch
    %16 = sbr.rel (0) target = $region17
  $region16: #{decoder_forward.6} parent=0 // pred_region
    _
  $region17: #{decoder_forward.6} parent=0 // pred_fallthru
    _
  %v17 = vld [vmem:[%s1] sm:$0xf]
  %v18 = vld [vmem:[%s1 + $0x4] sm:$0xf]
  %v19 = vunpack.c.l.bf16 %v17
  %v20 = vunpack.c.l.bf16 %v18
  %v21 = vld [vmem:[%s0] sm:$0xff]
  %v22 = vld [vmem:[%s0 + $0x8] sm:$0xff]
  %v23 = vld [vmem:[%s0 + $0x10] sm:$0xff]
  %v24 = vld [vmem:[%s0 + $0x18] sm:$0xff]
  %v25 = vld [vmem:[%s0 + $0x20] sm:$0xff]
  %v26 = vld [vmem:[%s0 + $0x28] sm:$0xff]
  %v27 = vld [vmem:[%s0 + $0x30] sm:$0xff]
  %v28 = vld [vmem:[%s0 + $0x38] sm:$0xff]
  %v29 = vld [vmem:[%s0 + $0x40] sm:$0xff]
  %v30 = vld [vmem:[%s0 + $0x48] sm:$0xff]
  %v31 = vld [vmem:[%s0 + $0x50] sm:$0xff]
  %v32 = vld [vmem:[%s0 + $0x58] sm:$0xff]
  %v33 = vld [vmem:[%s0 + $0x60] sm:$0xff]
  %v34 = vld [vmem:[%s0 + $0x68] sm:$0xff]
  %v35 = vld [vmem:[%s0 + $0x70] sm:$0xff]
  %v36 = vld [vmem:[%s0 + $0x78] sm:$0xff]
  %v37 = vunpack.c.l.bf16 %v21
  %v38 = vunpack.c.h.bf16 %v21
  %v39 = vunpack.c.l.bf16 %v22
  %v40 = vunpack.c.h.bf16 %v22
  %v41 = vunpack.c.l.bf16 %v23
  %v42 = vunpack.c.h.bf16 %v23
  %v43 = vunpack.c.l.bf16 %v24
  %v44 = vunpack.c.h.bf16 %v24
  %v45 = vunpack.c.l.bf16 %v25
  %v46 = vunpack.c.h.bf16 %v25
  %v47 = vunpack.c.l.bf16 %v26
  %v48 = vunpack.c.h.bf16 %v26
  %v49 = vunpack.c.l.bf16 %v27
  %v50 = vunpack.c.h.bf16 %v27
  %v51 = vunpack.c.l.bf16 %v28
  %v52 = vunpack.c.h.bf16 %v28
  %v53 = vunpack.c.l.bf16 %v29
  %v54 = vunpack.c.h.bf16 %v29
  %v55 = vunpack.c.l.bf16 %v30
  %v56 = vunpack.c.h.bf16 %v30
  %v57 = vunpack.c.l.bf16 %v31
  %v58 = vunpack.c.h.bf16 %v31
  %v59 = vunpack.c.l.bf16 %v32
  %v60 = vunpack.c.h.bf16 %v32
  %v61 = vunpack.c.l.bf16 %v33
  %v62 = vunpack.c.h.bf16 %v33
  %v63 = vunpack.c.l.bf16 %v34
  %v64 = vunpack.c.h.bf16 %v34
  %v65 = vunpack.c.l.bf16 %v35
  %v66 = vunpack.c.h.bf16 %v35
  %v67 = vunpack.c.l.bf16 %v36
  %v68 = vunpack.c.h.bf16 %v36
  %69 = vmatprep.subr.mxu0 %v38
  %70 = vmatpush1.msra.mxu0 %v37
  %71 = vmatprep.subr.mxu0 %v40
  %72 = vmatpush1.msra.mxu0 %v39
  %73 = vmatprep.subr.mxu0 %v42
  %74 = vmatpush1.msra.mxu0 %v41
  %75 = vmatprep.subr.mxu0 %v44
  %76 = vmatpush1.msra.mxu0 %v43
  %77 = vmatprep.subr.mxu0 %v46
  %78 = vmatpush1.msra.mxu0 %v45
  %79 = vmatprep.subr.mxu0 %v48
  %80 = vmatpush1.msra.mxu0 %v47
  %81 = vmatprep.subr.mxu0 %v50
  %82 = vmatpush1.msra.mxu0 %v49
  %83 = vmatprep.subr.mxu0 %v52
  %84 = vmatpush1.msra.mxu0 %v51
  %85 = vmatprep.subr.mxu0 %v54
  %86 = vmatpush1.msra.mxu0 %v53
  %87 = vmatprep.subr.mxu0 %v56
  %88 = vmatpush1.msra.mxu0 %v55
  %89 = vmatprep.subr.mxu0 %v58
  %90 = vmatpush1.msra.mxu0 %v57
  %91 = vmatprep.subr.mxu0 %v60
  %92 = vmatpush1.msra.mxu0 %v59
  %93 = vmatprep.subr.mxu0 %v62
  %94 = vmatpush1.msra.mxu0 %v61
  %95 = vmatprep.subr.mxu0 %v64
  %96 = vmatpush1.msra.mxu0 %v63
  %97 = vmatprep.subr.mxu0 %v66
  %98 = vmatpush1.msra.mxu0 %v65
  %99 = vmatprep.subr.mxu0 %v68
  %100 = vmatpush1.msra.mxu0 %v67
  %101 = vmatprep.subr.mxu0 0.0
  %102 = vmatpush1.msra.mxu0 0.0
  %103 = vmatprep.subr.mxu0 0.0
  %104 = vmatpush1.msra.mxu0 0.0
  %105 = vmatprep.subr.mxu0 0.0
  %106 = vmatpush1.msra.mxu0 0.0
  %107 = vmatprep.subr.mxu0 0.0
  %108 = vmatpush1.msra.mxu0 0.0
  %109 = vmatprep.subr.mxu0 0.0
  %110 = vmatpush1.msra.mxu0 0.0
  %111 = vmatprep.subr.mxu0 0.0
  %112 = vmatpush1.msra.mxu0 0.0
  %113 = vmatprep.subr.mxu0 0.0
  %114 = vmatpush1.msra.mxu0 0.0
  %115 = vmatprep.subr.mxu0 0.0
  %116 = vmatpush1.msra.mxu0 0.0
  %117 = vmatprep.subr.mxu0 0.0
  %118 = vmatpush1.msra.mxu0 0.0
  %119 = vmatprep.subr.mxu0 0.0
  %120 = vmatpush1.msra.mxu0 0.0
  %121 = vmatprep.subr.mxu0 0.0
  %122 = vmatpush1.msra.mxu0 0.0
  %123 = vmatprep.subr.mxu0 0.0
  %124 = vmatpush1.msra.mxu0 0.0
  %125 = vmatprep.subr.mxu0 0.0
  %126 = vmatpush1.msra.mxu0 0.0
  %127 = vmatprep.subr.mxu0 0.0
  %128 = vmatpush1.msra.mxu0 0.0
  %129 = vmatprep.subr.mxu0 0.0
  %130 = vmatpush1.msra.mxu0 0.0
  %131 = vmatprep.subr.mxu0 0.0
  %132 = vmatpush1.msra.mxu0 0.0
  %133 = vmatprep.mubr.f32.mxu0 0.0
  %134 = vmatmul.mubr.f32.gmra.mrb[0].mxu0 %v19
  %v135 = vpop.f32.mrb[0].mxu0
  %v136 = vadd.f32 0.0, %v135
  %v137 = vpop.f32.mrb[0].mxu0
  %v138 = vadd.f32 0.0, %v137
  %139 = vmatprep.mubr.f32.mxu0 0.0
  %140 = vmatmul.mubr.f32.gmra.mrb[0].mxu0 %v20
  %v141 = vpop.f32.mrb[0].mxu0
  %v142 = vadd.f32 0.0, %v141
  %v143 = vpop.f32.mrb[0].mxu0
  %v144 = vadd.f32 0.0, %v143
  %145 = vdwg.mxu0
  %v146 = vadd.f32 %v136, %v138
  %147 = vadd.xlane.f32.xlu0 %v146
  %v148 = vpop.xlane.xlu0 %147
  %v149 = vadd.f32 %v142, %v144
  %150 = vadd.xlane.f32.xlu0 %v149
  %v151 = vpop.xlane.xlu0 %150
  %v152 = vmul.f32 %v148, 0.0061728396
  %v153 = vmul.f32 %v151, 0.0061728396
  %v154 = vmul.f32 %v136, %v136
  %v155 = vmul.f32 %v138, %v138
  %v156 = vmul.f32 %v142, %v142
  %v157 = vmul.f32 %v144, %v144
  %v158 = vadd.f32 %v154, %v155
  %159 = vadd.xlane.f32.xlu0 %v158
  %v160 = vpop.xlane.xlu0 %159
  %v161 = vadd.f32 %v156, %v157
  %162 = vadd.xlane.f32.xlu0 %v161
  %v163 = vpop.xlane.xlu0 %162
  %v164 = vmul.f32 %v160, 0.0061728396
  %v165 = vmul.f32 %v163, 0.0061728396
  %v166 = vmul.f32 %v152, %v152
  %v167 = vmul.f32 %v153, %v153
  %v168 = vsub.f32 %v164, %v166
  %v169 = vsub.f32 %v165, %v167
  %v170 = vmax.f32 %v168, 0.0
  %v171 = vmax.f32 %v169, 0.0
  %v172 = vld [vmem:[%s2] sm:$0xff]
  %v173 = vld [vmem:[%s2 + $0x8] sm:$0xff]
  %v174 = vadd.f32 %v170, 1e-05
  %v175 = vadd.f32 %v171, 1e-05
  %v176 = vrsqrt.pop %v174
  %v177 = vrsqrt.pop %v175
  %v178 = vmul.f32 %v172, %v176
  %v179 = vmul.f32 %v173, %v177
  %v180 = vld [vmem:[%s3] sm:$0xff]
  %v181 = vld [vmem:[%s3 + $0x8] sm:$0xff]
  %v182 = vmul.f32 %v152, %v178
  %v183 = vmul.f32 %v153, %v179
  %v184 = vsub.f32 %v180, %v182
  %v185 = vsub.f32 %v181, %v183
  %187 = vset.pattern.permute.xlu0 0
  %188 = vperm.xlu0 %187, %v178
  %v189 = vpop.permute.xlu0 %188
  %192 = vset.pattern.permute.xlu0 0
  %193 = vperm.xlu0 %192, %v179
  %v194 = vpop.permute.xlu0 %193
  %v196 = vmul.f32 %v136, %v189
  %v197 = vmul.f32 %v138, %v189
  %v198 = vmul.f32 %v142, %v194
  %v199 = vmul.f32 %v144, %v194
  %201 = vset.pattern.permute.xlu0 0
  %202 = vperm.xlu0 %201, %v184
  %v203 = vpop.permute.xlu0 %202
  %206 = vset.pattern.permute.xlu0 0
  %207 = vperm.xlu0 %206, %v185
  %v208 = vpop.permute.xlu0 %207
  %v210 = vadd.f32 %v196, %v203
  %v211 = vadd.f32 %v197, %v203
  %v212 = vadd.f32 %v198, %v208
  %v213 = vadd.f32 %v199, %v208
  %v214 = vmax.f32 %v210, 0.0
  %v215 = vmax.f32 %v211, 0.0
  %v216 = vmax.f32 %v212, 0.0
  %v217 = vmax.f32 %v213, 0.0
  %v218 = vpack.c.bf16 %v216, %v214
  %v219 = vpack.c.bf16 %v217, %v215
  %v222 = vunpack.c.l.b16 %v218
  %v223 = vunpack.c.l.b16 %v219
  %v224 = vunpack.c.h.b16 %v218
  %v225 = vunpack.c.h.b16 %v219
  %v226 = vpack.c.b16 %v223, %v222
  %v227 = vpack.c.b16 %v225, %v224
  %230 = vst [vmem:[%s4] sm:$0xff] %v226
  %231 = vst [vmem:[%s4 + $0x8] sm:$0xff] %v227
  // Predicated region
  $region18: #{decoder_forward.6} parent=0 // pred_check
    _
  $region19: #{decoder_forward.6} parent=0 // pred_check_branch
    %233 = sbr.rel (0) target = $region21
  $region20: #{decoder_forward.6} parent=0 // pred_region
    _
  $region21: #{decoder_forward.6} parent=0 // pred_fallthru
    _
  // Predicated region
  $region22: #{decoder_forward.6} parent=0 // pred_check
    _
  $region23: #{decoder_forward.6} parent=0 // pred_check_branch
    %235 = sbr.rel (0) target = $region25
  $region24: #{decoder_forward.6} parent=0 // pred_region
    _
  $region25: #{decoder_forward.6} parent=0 // pred_fallthru
    _

// kernel: decoder_forward.7
$region0: #{decoder_forward.7}
  #allocation0 [shape = 'u32[]', space=smem, size = 0x4, offset = 0x4, fixed_abs, tag = 'smem constant byte address 0x4 - core index']
  #allocation1 [shape = 'u32[144,128]{1,0:T(1,128)}', space=vmem, size = 0x12000, scoped, tag = 'internal scratch']
  %s0 = inlined_call_operand.vmem [shape: bf16[64,640], index: 0, kind: input, shape index: {}]
  %s1 = inlined_call_operand.vmem [shape: bf16[8,64], index: 1, kind: input, shape index: {}]
  %s2 = inlined_call_operand.vmem [shape: f32[8,1], index: 2, kind: input, shape index: {}]
  %s3 = inlined_call_operand.vmem [shape: f32[8,1], index: 3, kind: input, shape index: {}]
  %s4 = inlined_call_operand.vmem [shape: bf16[8,640], index: 4, kind: output, shape index: {}]
  %s5 = sld [smem:[#allocation0]]
  $region26: #{decoder_forward.7} parent=0
    _
  %s7 = ssub.s32 1, %s5
  %s8 = scalar_select 0, %s7, %s5
  // Predicated region
  $region2: #{decoder_forward.7} parent=0 // pred_check
    _
  $region3: #{decoder_forward.7} parent=0 // pred_check_branch
    %10 = sbr.rel (0) target = $region5
  $region4: #{decoder_forward.7} parent=0 // pred_region
    _
  $region5: #{decoder_forward.7} parent=0 // pred_fallthru
    _
  // Predicated region
  $region6: #{decoder_forward.7} parent=0 // pred_check
    _
  $region7: #{decoder_forward.7} parent=0 // pred_check_branch
    %12 = sbr.rel (0) target = $region9
  $region8: #{decoder_forward.7} parent=0 // pred_region
    _
  $region9: #{decoder_forward.7} parent=0 // pred_fallthru
    _
  // Predicated region
  $region10: #{decoder_forward.7} parent=0 // pred_check
    _
  $region11: #{decoder_forward.7} parent=0 // pred_check_branch
    %14 = sbr.rel (0) target = $region13
  $region12: #{decoder_forward.7} parent=0 // pred_region
    _
  $region13: #{decoder_forward.7} parent=0 // pred_fallthru
    _
  // Predicated region
  $region14: #{decoder_forward.7} parent=0 // pred_check
    _
  $region15: #{decoder_forward.7} parent=0 // pred_check_branch
    %16 = sbr.rel (0) target = $region17
  $region16: #{decoder_forward.7} parent=0 // pred_region
    _
  $region17: #{decoder_forward.7} parent=0 // pred_fallthru
    _
  %v17 = vld [vmem:[%s1] sm:$0xf]
  %v18 = vunpack.c.l.bf16 %v17
  %v19 = vld [vmem:[%s0] sm:$0xff]
  %v20 = vld [vmem:[%s0 + $0x8] sm:$0xff]
  %v21 = vld [vmem:[%s0 + $0x10] sm:$0xf]
  %v22 = vld [vmem:[%s0 + $0x14] sm:$0xff]
  %v23 = vld [vmem:[%s0 + $0x1c] sm:$0xff]
  %v24 = vld [vmem:[%s0 + $0x24] sm:$0xf]
  %v25 = vld [vmem:[%s0 + $0x28] sm:$0xff]
  %v26 = vld [vmem:[%s0 + $0x30] sm:$0xff]
  %v27 = vld [vmem:[%s0 + $0x38] sm:$0xf]
  %v28 = vld [vmem:[%s0 + $0x3c] sm:$0xff]
  %v29 = vld [vmem:[%s0 + $0x44] sm:$0xff]
  %v30 = vld [vmem:[%s0 + $0x4c] sm:$0xf]
  %v31 = vld [vmem:[%s0 + $0x50] sm:$0xff]
  %v32 = vld [vmem:[%s0 + $0x58] sm:$0xff]
  %v33 = vld [vmem:[%s0 + $0x60] sm:$0xf]
  %v34 = vld [vmem:[%s0 + $0x64] sm:$0xff]
  %v35 = vld [vmem:[%s0 + $0x6c] sm:$0xff]
  %v36 = vld [vmem:[%s0 + $0x74] sm:$0xf]
  %v37 = vld [vmem:[%s0 + $0x78] sm:$0xff]
  %v38 = vld [vmem:[%s0 + $0x80] sm:$0xff]
  %v39 = vld [vmem:[%s0 + $0x88] sm:$0xf]
  %v40 = vld [vmem:[%s0 + $0x8c] sm:$0xff]
  %v41 = vld [vmem:[%s0 + $0x94] sm:$0xff]
  %v42 = vld [vmem:[%s0 + $0x9c] sm:$0xf]
  %v43 = vunpack.c.l.bf16 %v19
  %v44 = vunpack.c.h.bf16 %v19
  %v45 = vunpack.c.l.bf16 %v20
  %v46 = vunpack.c.h.bf16 %v20
  %v47 = vunpack.c.l.bf16 %v21
  %v48 = vunpack.c.l.bf16 %v22
  %v49 = vunpack.c.h.bf16 %v22
  %v50 = vunpack.c.l.bf16 %v23
  %v51 = vunpack.c.h.bf16 %v23
  %v52 = vunpack.c.l.bf16 %v24
  %v53 = vunpack.c.l.bf16 %v25
  %v54 = vunpack.c.h.bf16 %v25
  %v55 = vunpack.c.l.bf16 %v26
  %v56 = vunpack.c.h.bf16 %v26
  %v57 = vunpack.c.l.bf16 %v27
  %v58 = vunpack.c.l.bf16 %v28
  %v59 = vunpack.c.h.bf16 %v28
  %v60 = vunpack.c.l.bf16 %v29
  %v61 = vunpack.c.h.bf16 %v29
  %v62 = vunpack.c.l.bf16 %v30
  %v63 = vunpack.c.l.bf16 %v31
  %v64 = vunpack.c.h.bf16 %v31
  %v65 = vunpack.c.l.bf16 %v32
  %v66 = vunpack.c.h.bf16 %v32
  %v67 = vunpack.c.l.bf16 %v33
  %v68 = vunpack.c.l.bf16 %v34
  %v69 = vunpack.c.h.bf16 %v34
  %v70 = vunpack.c.l.bf16 %v35
  %v71 = vunpack.c.h.bf16 %v35
  %v72 = vunpack.c.l.bf16 %v36
  %v73 = vunpack.c.l.bf16 %v37
  %v74 = vunpack.c.h.bf16 %v37
  %v75 = vunpack.c.l.bf16 %v38
  %v76 = vunpack.c.h.bf16 %v38
  %v77 = vunpack.c.l.bf16 %v39
  %v78 = vunpack.c.l.bf16 %v40
  %v79 = vunpack.c.h.bf16 %v40
  %v80 = vunpack.c.l.bf16 %v41
  %v81 = vunpack.c.h.bf16 %v41
  %v82 = vunpack.c.l.bf16 %v42
  %vm83 = vcmask 523264
  %v85 = vsel %vm83, %v18, 0
  %87 = vmatprep.subr.mxu0 %v44
  %88 = vmatpush1.msra.mxu0 %v43
  %89 = vmatprep.subr.mxu0 %v49
  %90 = vmatpush1.msra.mxu0 %v48
  %91 = vmatprep.subr.mxu0 %v54
  %92 = vmatpush1.msra.mxu0 %v53
  %93 = vmatprep.subr.mxu0 %v59
  %94 = vmatpush1.msra.mxu0 %v58
  %95 = vmatprep.subr.mxu0 %v64
  %96 = vmatpush1.msra.mxu0 %v63
  %97 = vmatprep.subr.mxu0 %v69
  %98 = vmatpush1.msra.mxu0 %v68
  %99 = vmatprep.subr.mxu0 %v74
  %100 = vmatpush1.msra.mxu0 %v73
  %101 = vmatprep.subr.mxu0 %v79
  %102 = vmatpush1.msra.mxu0 %v78
  %103 = vmatprep.subr.mxu0 0.0
  %104 = vmatpush1.msra.mxu0 0.0
  %105 = vmatprep.subr.mxu0 0.0
  %106 = vmatpush1.msra.mxu0 0.0
  %107 = vmatprep.subr.mxu0 0.0
  %108 = vmatpush1.msra.mxu0 0.0
  %109 = vmatprep.subr.mxu0 0.0
  %110 = vmatpush1.msra.mxu0 0.0
  %111 = vmatprep.subr.mxu0 0.0
  %112 = vmatpush1.msra.mxu0 0.0
  %113 = vmatprep.subr.mxu0 0.0
  %114 = vmatpush1.msra.mxu0 0.0
  %115 = vmatprep.subr.mxu0 0.0
  %116 = vmatpush1.msra.mxu0 0.0
  %117 = vmatprep.subr.mxu0 0.0
  %118 = vmatpush1.msra.mxu0 0.0
  %119 = vmatprep.subr.mxu0 0.0
  %120 = vmatpush1.msra.mxu0 0.0
  %121 = vmatprep.subr.mxu0 0.0
  %122 = vmatpush1.msra.mxu0 0.0
  %123 = vmatprep.subr.mxu0 0.0
  %124 = vmatpush1.msra.mxu0 0.0
  %125 = vmatprep.subr.mxu0 0.0
  %126 = vmatpush1.msra.mxu0 0.0
  %127 = vmatprep.subr.mxu0 0.0
  %128 = vmatpush1.msra.mxu0 0.0
  %129 = vmatprep.subr.mxu0 0.0
  %130 = vmatpush1.msra.mxu0 0.0
  %131 = vmatprep.subr.mxu0 0.0
  %132 = vmatpush1.msra.mxu0 0.0
  %133 = vmatprep.subr.mxu0 0.0
  %134 = vmatpush1.msra.mxu0 0.0
  %135 = vmatprep.subr.mxu0 0.0
  %136 = vmatpush1.msra.mxu0 0.0
  %137 = vmatprep.subr.mxu0 0.0
  %138 = vmatpush1.msra.mxu0 0.0
  %139 = vmatprep.subr.mxu0 0.0
  %140 = vmatpush1.msra.mxu0 0.0
  %141 = vmatprep.subr.mxu0 0.0
  %142 = vmatpush1.msra.mxu0 0.0
  %143 = vmatprep.subr.mxu0 0.0
  %144 = vmatpush1.msra.mxu0 0.0
  %145 = vmatprep.subr.mxu0 0.0
  %146 = vmatpush1.msra.mxu0 0.0
  %147 = vmatprep.subr.mxu0 0.0
  %148 = vmatpush1.msra.mxu0 0.0
  %149 = vmatprep.subr.mxu0 0.0
  %150 = vmatpush1.msra.mxu0 0.0
  %151 = vmatprep.mubr.f32.mxu0 0.0
  %152 = vmatmul.mubr.f32.gmra.mrb[0].mxu0 %v85
  %v153 = vpop.f32.mrb[0].mxu0
  %v154 = vadd.f32 0.0, %v153
  %v155 = vpop.f32.mrb[0].mxu0
  %v156 = vadd.f32 0.0, %v155
  %157 = vdwg.mxu0
  %158 = vmatprep.subr.mxu0 %v46
  %159 = vmatpush1.msra.mxu0 %v45
  %160 = vmatprep.subr.mxu0 %v51
  %161 = vmatpush1.msra.mxu0 %v50
  %162 = vmatprep.subr.mxu0 %v56
  %163 = vmatpush1.msra.mxu0 %v55
  %164 = vmatprep.subr.mxu0 %v61
  %165 = vmatpush1.msra.mxu0 %v60
  %166 = vmatprep.subr.mxu0 %v66
  %167 = vmatpush1.msra.mxu0 %v65
  %168 = vmatprep.subr.mxu0 %v71
  %169 = vmatpush1.msra.mxu0 %v70
  %170 = vmatprep.subr.mxu0 %v76
  %171 = vmatpush1.msra.mxu0 %v75
  %172 = vmatprep.subr.mxu0 %v81
  %173 = vmatpush1.msra.mxu0 %v80
  %174 = vmatprep.subr.mxu0 0.0
  %175 = vmatpush1.msra.mxu0 0.0
  %176 = vmatprep.subr.mxu0 0.0
  %177 = vmatpush1.msra.mxu0 0.0
  %178 = vmatprep.subr.mxu0 0.0
  %179 = vmatpush1.msra.mxu0 0.0
  %180 = vmatprep.subr.mxu0 0.0
  %181 = vmatpush1.msra.mxu0 0.0
  %182 = vmatprep.subr.mxu0 0.0
  %183 = vmatpush1.msra.mxu0 0.0
  %184 = vmatprep.subr.mxu0 0.0
  %185 = vmatpush1.msra.mxu0 0.0
  %186 = vmatprep.subr.mxu0 0.0
  %187 = vmatpush1.msra.mxu0 0.0
  %188 = vmatprep.subr.mxu0 0.0
  %189 = vmatpush1.msra.mxu0 0.0
  %190 = vmatprep.subr.mxu0 0.0
  %191 = vmatpush1.msra.mxu0 0.0
  %192 = vmatprep.subr.mxu0 0.0
  %193 = vmatpush1.msra.mxu0 0.0
  %194 = vmatprep.subr.mxu0 0.0
  %195 = vmatpush1.msra.mxu0 0.0
  %196 = vmatprep.subr.mxu0 0.0
  %197 = vmatpush1.msra.mxu0 0.0
  %198 = vmatprep.subr.mxu0 0.0
  %199 = vmatpush1.msra.mxu0 0.0
  %200 = vmatprep.subr.mxu0 0.0
  %201 = vmatpush1.msra.mxu0 0.0
  %202 = vmatprep.subr.mxu0 0.0
  %203 = vmatpush1.msra.mxu0 0.0
  %204 = vmatprep.subr.mxu0 0.0
  %205 = vmatpush1.msra.mxu0 0.0
  %206 = vmatprep.subr.mxu0 0.0
  %207 = vmatpush1.msra.mxu0 0.0
  %208 = vmatprep.subr.mxu0 0.0
  %209 = vmatpush1.msra.mxu0 0.0
  %210 = vmatprep.subr.mxu0 0.0
  %211 = vmatpush1.msra.mxu0 0.0
  %212 = vmatprep.subr.mxu0 0.0
  %213 = vmatpush1.msra.mxu0 0.0
  %214 = vmatprep.subr.mxu0 0.0
  %215 = vmatpush1.msra.mxu0 0.0
  %216 = vmatprep.subr.mxu0 0.0
  %217 = vmatpush1.msra.mxu0 0.0
  %218 = vmatprep.subr.mxu0 0.0
  %219 = vmatpush1.msra.mxu0 0.0
  %220 = vmatprep.subr.mxu0 0.0
  %221 = vmatpush1.msra.mxu0 0.0
  %222 = vmatprep.mubr.f32.mxu0 0.0
  %223 = vmatmul.mubr.f32.gmra.mrb[0].mxu0 %v85
  %v224 = vpop.f32.mrb[0].mxu0
  %v225 = vadd.f32 0.0, %v224
  %v226 = vpop.f32.mrb[0].mxu0
  %v227 = vadd.f32 0.0, %v226
  %228 = vdwg.mxu0
  %229 = vmatprep.subr.mxu0 0.0
  %230 = vmatpush1.msra.mxu0 %v47
  %231 = vmatprep.subr.mxu0 0.0
  %232 = vmatpush1.msra.mxu0 %v52
  %233 = vmatprep.subr.mxu0 0.0
  %234 = vmatpush1.msra.mxu0 %v57
  %235 = vmatprep.subr.mxu0 0.0
  %236 = vmatpush1.msra.mxu0 %v62
  %237 = vmatprep.subr.mxu0 0.0
  %238 = vmatpush1.msra.mxu0 %v67
  %239 = vmatprep.subr.mxu0 0.0
  %240 = vmatpush1.msra.mxu0 %v72
  %241 = vmatprep.subr.mxu0 0.0
  %242 = vmatpush1.msra.mxu0 %v77
  %243 = vmatprep.subr.mxu0 0.0
  %244 = vmatpush1.msra.mxu0 %v82
  %245 = vmatprep.subr.mxu0 0.0
  %246 = vmatpush1.msra.mxu0 0.0
  %247 = vmatprep.subr.mxu0 0.0
  %248 = vmatpush1.msra.mxu0 0.0
  %249 = vmatprep.subr.mxu0 0.0
  %250 = vmatpush1.msra.mxu0 0.0
  %251 = vmatprep.subr.mxu0 0.0
  %252 = vmatpush1.msra.mxu0 0.0
  %253 = vmatprep.subr.mxu0 0.0
  %254 = vmatpush1.msra.mxu0 0.0
  %255 = vmatprep.subr.mxu0 0.0
  %256 = vmatpush1.msra.mxu0 0.0
  %257 = vmatprep.subr.mxu0 0.0
  %258 = vmatpush1.msra.mxu0 0.0
  %259 = vmatprep.subr.mxu0 0.0
  %260 = vmatpush1.msra.mxu0 0.0
  %261 = vmatprep.subr.mxu0 0.0
  %262 = vmatpush1.msra.mxu0 0.0
  %263 = vmatprep.subr.mxu0 0.0
  %264 = vmatpush1.msra.mxu0 0.0
  %265 = vmatprep.subr.mxu0 0.0
  %266 = vmatpush1.msra.mxu0 0.0
  %267 = vmatprep.subr.mxu0 0.0
  %268 = vmatpush1.msra.mxu0 0.0
  %269 = vmatprep.subr.mxu0 0.0
  %270 = vmatpush1.msra.mxu0 0.0
  %271 = vmatprep.subr.mxu0 0.0
  %272 = vmatpush1.msra.mxu0 0.0
  %273 = vmatprep.subr.mxu0 0.0
  %274 = vmatpush1.msra.mxu0 0.0
  %275 = vmatprep.subr.mxu0 0.0
  %276 = vmatpush1.msra.mxu0 0.0
  %277 = vmatprep.subr.mxu0 0.0
  %278 = vmatpush1.msra.mxu0 0.0
  %279 = vmatprep.subr.mxu0 0.0
  %280 = vmatpush1.msra.mxu0 0.0
  %281 = vmatprep.subr.mxu0 0.0
  %282 = vmatpush1.msra.mxu0 0.0
  %283 = vmatprep.subr.mxu0 0.0
  %284 = vmatpush1.msra.mxu0 0.0
  %285 = vmatprep.subr.mxu0 0.0
  %286 = vmatpush1.msra.mxu0 0.0
  %287 = vmatprep.subr.mxu0 0.0
  %288 = vmatpush1.msra.mxu0 0.0
  %289 = vmatprep.subr.mxu0 0.0
  %290 = vmatpush1.msra.mxu0 0.0
  %291 = vmatprep.subr.mxu0 0.0
  %292 = vmatpush1.msra.mxu0 0.0
  %293 = vmatprep.mubr.f32.mxu0 0.0
  %294 = vmatmul.mubr.f32.gmra.mrb[0].mxu0 %v85
  %v295 = vpop.f32.mrb[0].mxu0
  %v296 = vadd.f32 0.0, %v295
  %v297 = vpop.f32.mrb[0].mxu0
  %298 = vdwg.mxu0
  %v299 = vadd.f32 %v154, %v156
  %v300 = vadd.f32 %v299, %v225
  %v301 = vadd.f32 %v300, %v227
  %v302 = vadd.f32 %v301, %v296
  %303 = vadd.xlane.f32.xlu0 %v302
  %v304 = vpop.xlane.xlu0 %303
  %v305 = vmul.f32 %v304, 0.0017301039
  %v306 = vmul.f32 %v154, %v154
  %v307 = vmul.f32 %v156, %v156
  %v308 = vmul.f32 %v225, %v225
  %v309 = vmul.f32 %v227, %v227
  %v310 = vmul.f32 %v296, %v296
  %v311 = vadd.f32 %v306, %v307
  %v312 = vadd.f32 %v311, %v308
  %v313 = vadd.f32 %v312, %v309
  %v314 = vadd.f32 %v313, %v310
  %315 = vadd.xlane.f32.xlu0 %v314
  %v316 = vpop.xlane.xlu0 %315
  %v317 = vmul.f32 %v316, 0.0017301039
  %v318 = vmul.f32 %v305, %v305
  %v319 = vsub.f32 %v317, %v318
  %v320 = vmax.f32 %v319, 0.0
  %v321 = vld [vmem:[%s2] sm:$0xff]
  %v322 = vadd.f32 %v320, 1e-05
  %v323 = vrsqrt.pop %v322
  %v324 = vmul.f32 %v321, %v323
  %v325 = vld [vmem:[%s3] sm:$0xff]
  %v326 = vmul.f32 %v305, %v324
  %v327 = vsub.f32 %v325, %v326
  %329 = vset.pattern.permute.xlu0 0
  %330 = vperm.xlu0 %329, %v324
  %v331 = vpop.permute.xlu0 %330
  %v333 = vmul.f32 %v154, %v331
  %v334 = vmul.f32 %v156, %v331
  %v335 = vmul.f32 %v225, %v331
  %v336 = vmul.f32 %v227, %v331
  %v337 = vmul.f32 %v296, %v331
  %339 = vset.pattern.permute.xlu0 0
  %340 = vperm.xlu0 %339, %v327
  %v341 = vpop.permute.xlu0 %340
  %v343 = vadd.f32 %v333, %v341
  %v344 = vadd.f32 %v334, %v341
  %v345 = vadd.f32 %v335, %v341
  %v346 = vadd.f32 %v336, %v341
  %v347 = vadd.f32 %v337, %v341
  %v348 = vmax.f32 %v343, 0.0
  %v349 = vmax.f32 %v344, 0.0
  %v350 = vmax.f32 %v345, 0.0
  %v351 = vmax.f32 %v346, 0.0
  %v352 = vmax.f32 %v347, 0.0
  %v353 = vpack.c.bf16 %v348, %v348
  %v354 = vpack.c.bf16 %v349, %v349
  %v355 = vpack.c.bf16 %v350, %v350
  %v356 = vpack.c.bf16 %v351, %v351
  %v357 = vpack.c.bf16 %v352, %v352
  %v363 = vunpack.c.l.b16 %v353
  %v364 = vunpack.c.l.b16 %v354
  %v365 = vunpack.c.l.b16 %v355
  %v366 = vunpack.c.l.b16 %v356
  %v367 = vunpack.c.l.b16 %v357
  %v368 = vpack.c.b16 %v364, %v363
  %v369 = vpack.c.b16 %v366, %v365
  %v370 = vpack.c.b16 %v367, %v367
  %374 = vst [vmem:[%s4] sm:$0xff] %v368
  %375 = vst [vmem:[%s4 + $0x8] sm:$0xff] %v369
  %376 = vst [vmem:[%s4 + $0x10] sm:$0xf] %v370
  // Predicated region
  $region18: #{decoder_forward.7} parent=0 // pred_check
    _
  $region19: #{decoder_forward.7} parent=0 // pred_check_branch
    %378 = sbr.rel (0) target = $region21
  $region20: #{decoder_forward.7} parent=0 // pred_region
    _
  $region21: #{decoder_forward.7} parent=0 // pred_fallthru
    _
  // Predicated region
  $region22: #{decoder_forward.7} parent=0 // pred_check
    _
  $region23: #{decoder_forward.7} parent=0 // pred_check_branch
    %380 = sbr.rel (0) target = $region25
  $region24: #{decoder_forward.7} parent=0 // pred_region
    _
  $region25: #{decoder_forward.7} parent=0 // pred_fallthru
    _

// kernel: decoder_forward.8
$region0: #{decoder_forward.8}
  #allocation0 [shape = 'u32[]', space=smem, size = 0x4, offset = 0x4, fixed_abs, tag = 'smem constant byte address 0x4 - core index']
  #allocation1 [shape = 'u32[144,128]{1,0:T(1,128)}', space=vmem, size = 0x12000, scoped, tag = 'internal scratch']
  %s0 = inlined_call_operand.vmem [shape: bf16[32,2304], index: 0, kind: input, shape index: {}]
  %s1 = inlined_call_operand.vmem [shape: bf16[8,32], index: 1, kind: input, shape index: {}]
  %s2 = inlined_call_operand.vmem [shape: f32[8,1], index: 2, kind: input, shape index: {}]
  %s3 = inlined_call_operand.vmem [shape: f32[8,1], index: 3, kind: input, shape index: {}]
  %s4 = inlined_call_operand.vmem [shape: bf16[8,2304], index: 4, kind: output, shape index: {}]
  %s5 = sld [smem:[#allocation0]]
  $region26: #{decoder_forward.8} parent=0
    _
  %s7 = ssub.s32 1, %s5
  %s8 = scalar_select 0, %s7, %s5
  // Predicated region
  $region2: #{decoder_forward.8} parent=0 // pred_check
    _
  $region3: #{decoder_forward.8} parent=0 // pred_check_branch
    %10 = sbr.rel (0) target = $region5
  $region4: #{decoder_forward.8} parent=0 // pred_region
    _
  $region5: #{decoder_forward.8} parent=0 // pred_fallthru
    _
  // Predicated region
  $region6: #{decoder_forward.8} parent=0 // pred_check
    _
  $region7: #{decoder_forward.8} parent=0 // pred_check_branch
    %12 = sbr.rel (0) target = $region9
  $region8: #{decoder_forward.8} parent=0 // pred_region
    _
  $region9: #{decoder_forward.8} parent=0 // pred_fallthru
    _
  // Predicated region
  $region10: #{decoder_forward.8} parent=0 // pred_check
    _
  $region11: #{decoder_forward.8} parent=0 // pred_check_branch
    %14 = sbr.rel (0) target = $region13
  $region12: #{decoder_forward.8} parent=0 // pred_region
    _
  $region13: #{decoder_forward.8} parent=0 // pred_fallthru
    _
  // Predicated region
  $region14: #{decoder_forward.8} parent=0 // pred_check
    _
  $region15: #{decoder_forward.8} parent=0 // pred_check_branch
    %16 = sbr.rel (0) target = $region17
  $region16: #{decoder_forward.8} parent=0 // pred_region
    _
  $region17: #{decoder_forward.8} parent=0 // pred_fallthru
    _
  %v17 = vld [vmem:[%s1] sm:$0xf]
  %v18 = vunpack.c.l.bf16 %v17
  %v19 = vld [vmem:[%s0] sm:$0xff]
  %v20 = vld [vmem:[%s0 + $0x8] sm:$0xff]
  %v21 = vld [vmem:[%s0 + $0x10] sm:$0xff]
  %v22 = vld [vmem:[%s0 + $0x18] sm:$0xff]
  %v23 = vld [vmem:[%s0 + $0x20] sm:$0xff]
  %v24 = vld [vmem:[%s0 + $0x28] sm:$0xff]
  %v25 = vld [vmem:[%s0 + $0x30] sm:$0xff]
  %v26 = vld [vmem:[%s0 + $0x38] sm:$0xff]
  %v27 = vld [vmem:[%s0 + $0x40] sm:$0xff]
  %v28 = vld [vmem:[%s0 + $0x48] sm:$0xff]
  %v29 = vld [vmem:[%s0 + $0x50] sm:$0xff]
  %v30 = vld [vmem:[%s0 + $0x58] sm:$0xff]
  %v31 = vld [vmem:[%s0 + $0x60] sm:$0xff]
  %v32 = vld [vmem:[%s0 + $0x68] sm:$0xff]
  %v33 = vld [vmem:[%s0 + $0x70] sm:$0xff]
  %v34 = vld [vmem:[%s0 + $0x78] sm:$0xff]
  %v35 = vld [vmem:[%s0 + $0x80] sm:$0xff]
  %v36 = vld [vmem:[%s0 + $0x88] sm:$0xff]
  %v37 = vld [vmem:[%s0 + $0x90] sm:$0xff]
  %v38 = vld [vmem:[%s0 + $0x98] sm:$0xff]
  %v39 = vld [vmem:[%s0 + $0xa0] sm:$0xff]
  %v40 = vld [vmem:[%s0 + $0xa8] sm:$0xff]
  %v41 = vld [vmem:[%s0 + $0xb0] sm:$0xff]
  %v42 = vld [vmem:[%s0 + $0xb8] sm:$0xff]
  %v43 = vld [vmem:[%s0 + $0xc0] sm:$0xff]
  %v44 = vld [vmem:[%s0 + $0xc8] sm:$0xff]
  %v45 = vld [vmem:[%s0 + $0xd0] sm:$0xff]
  %v46 = vld [vmem:[%s0 + $0xd8] sm:$0xff]
  %v47 = vld [vmem:[%s0 + $0xe0] sm:$0xff]
  %v48 = vld [vmem:[%s0 + $0xe8] sm:$0xff]
  %v49 = vld [vmem:[%s0 + $0xf0] sm:$0xff]
  %v50 = vld [vmem:[%s0 + $0xf8] sm:$0xff]
  %v51 = vld [vmem:[%s0 + $0x100] sm:$0xff]
  %v52 = vld [vmem:[%s0 + $0x108] sm:$0xff]
  %v53 = vld [vmem:[%s0 + $0x110] sm:$0xff]
  %v54 = vld [vmem:[%s0 + $0x118] sm:$0xff]
  %v55 = vunpack.c.l.bf16 %v19
  %v56 = vunpack.c.h.bf16 %v19
  %v57 = vunpack.c.l.bf16 %v20
  %v58 = vunpack.c.h.bf16 %v20
  %v59 = vunpack.c.l.bf16 %v21
  %v60 = vunpack.c.h.bf16 %v21
  %v61 = vunpack.c.l.bf16 %v22
  %v62 = vunpack.c.h.bf16 %v22
  %v63 = vunpack.c.l.bf16 %v23
  %v64 = vunpack.c.h.bf16 %v23
  %v65 = vunpack.c.l.bf16 %v24
  %v66 = vunpack.c.h.bf16 %v24
  %v67 = vunpack.c.l.bf16 %v25
  %v68 = vunpack.c.h.bf16 %v25
  %v69 = vunpack.c.l.bf16 %v26
  %v70 = vunpack.c.h.bf16 %v26
  %v71 = vunpack.c.l.bf16 %v27
  %v72 = vunpack.c.h.bf16 %v27
  %v73 = vunpack.c.l.bf16 %v28
  %v74 = vunpack.c.h.bf16 %v28
  %v75 = vunpack.c.l.bf16 %v29
  %v76 = vunpack.c.h.bf16 %v29
  %v77 = vunpack.c.l.bf16 %v30
  %v78 = vunpack.c.h.bf16 %v30
  %v79 = vunpack.c.l.bf16 %v31
  %v80 = vunpack.c.h.bf16 %v31
  %v81 = vunpack.c.l.bf16 %v32
  %v82 = vunpack.c.h.bf16 %v32
  %v83 = vunpack.c.l.bf16 %v33
  %v84 = vunpack.c.h.bf16 %v33
  %v85 = vunpack.c.l.bf16 %v34
  %v86 = vunpack.c.h.bf16 %v34
  %v87 = vunpack.c.l.bf16 %v35
  %v88 = vunpack.c.h.bf16 %v35
  %v89 = vunpack.c.l.bf16 %v36
  %v90 = vunpack.c.h.bf16 %v36
  %v91 = vunpack.c.l.bf16 %v37
  %v92 = vunpack.c.h.bf16 %v37
  %v93 = vunpack.c.l.bf16 %v38
  %v94 = vunpack.c.h.bf16 %v38
  %v95 = vunpack.c.l.bf16 %v39
  %v96 = vunpack.c.h.bf16 %v39
  %v97 = vunpack.c.l.bf16 %v40
  %v98 = vunpack.c.h.bf16 %v40
  %v99 = vunpack.c.l.bf16 %v41
  %v100 = vunpack.c.h.bf16 %v41
  %v101 = vunpack.c.l.bf16 %v42
  %v102 = vunpack.c.h.bf16 %v42
  %v103 = vunpack.c.l.bf16 %v43
  %v104 = vunpack.c.h.bf16 %v43
  %v105 = vunpack.c.l.bf16 %v44
  %v106 = vunpack.c.h.bf16 %v44
  %v107 = vunpack.c.l.bf16 %v45
  %v108 = vunpack.c.h.bf16 %v45
  %v109 = vunpack.c.l.bf16 %v46
  %v110 = vunpack.c.h.bf16 %v46
  %v111 = vunpack.c.l.bf16 %v47
  %v112 = vunpack.c.h.bf16 %v47
  %v113 = vunpack.c.l.bf16 %v48
  %v114 = vunpack.c.h.bf16 %v48
  %v115 = vunpack.c.l.bf16 %v49
  %v116 = vunpack.c.h.bf16 %v49
  %v117 = vunpack.c.l.bf16 %v50
  %v118 = vunpack.c.h.bf16 %v50
  %v119 = vunpack.c.l.bf16 %v51
  %v120 = vunpack.c.h.bf16 %v51
  %v121 = vunpack.c.l.bf16 %v52
  %v122 = vunpack.c.h.bf16 %v52
  %v123 = vunpack.c.l.bf16 %v53
  %v124 = vunpack.c.h.bf16 %v53
  %v125 = vunpack.c.l.bf16 %v54
  %v126 = vunpack.c.h.bf16 %v54
  %vm127 = vcmask 261120
  %v129 = vsel %vm127, %v18, 0
  %131 = vmatprep.subr.mxu0 %v56
  %132 = vmatpush1.msra.mxu0 %v55
  %133 = vmatprep.subr.mxu0 %v74
  %134 = vmatpush1.msra.mxu0 %v73
  %135 = vmatprep.subr.mxu0 %v92
  %136 = vmatpush1.msra.mxu0 %v91
  %137 = vmatprep.subr.mxu0 %v110
  %138 = vmatpush1.msra.mxu0 %v109
  %139 = vmatprep.subr.mxu0 0.0
  %140 = vmatpush1.msra.mxu0 0.0
  %141 = vmatprep.subr.mxu0 0.0
  %142 = vmatpush1.msra.mxu0 0.0
  %143 = vmatprep.subr.mxu0 0.0
  %144 = vmatpush1.msra.mxu0 0.0
  %145 = vmatprep.subr.mxu0 0.0
  %146 = vmatpush1.msra.mxu0 0.0
  %147 = vmatprep.subr.mxu0 0.0
  %148 = vmatpush1.msra.mxu0 0.0
  %149 = vmatprep.subr.mxu0 0.0
  %150 = vmatpush1.msra.mxu0 0.0
  %151 = vmatprep.subr.mxu0 0.0
  %152 = vmatpush1.msra.mxu0 0.0
  %153 = vmatprep.subr.mxu0 0.0
  %154 = vmatpush1.msra.mxu0 0.0
  %155 = vmatprep.subr.mxu0 0.0
  %156 = vmatpush1.msra.mxu0 0.0
  %157 = vmatprep.subr.mxu0 0.0
  %158 = vmatpush1.msra.mxu0 0.0
  %159 = vmatprep.subr.mxu0 0.0
  %160 = vmatpush1.msra.mxu0 0.0
  %161 = vmatprep.subr.mxu0 0.0
  %162 = vmatpush1.msra.mxu0 0.0
  %163 = vmatprep.subr.mxu0 0.0
  %164 = vmatpush1.msra.mxu0 0.0
  %165 = vmatprep.subr.mxu0 0.0
  %166 = vmatpush1.msra.mxu0 0.0
  %167 = vmatprep.subr.mxu0 0.0
  %168 = vmatpush1.msra.mxu0 0.0
  %169 = vmatprep.subr.mxu0 0.0
  %170 = vmatpush1.msra.mxu0 0.0
  %171 = vmatprep.subr.mxu0 0.0
  %172 = vmatpush1.msra.mxu0 0.0
  %173 = vmatprep.subr.mxu0 0.0
  %174 = vmatpush1.msra.mxu0 0.0
  %175 = vmatprep.subr.mxu0 0.0
  %176 = vmatpush1.msra.mxu0 0.0
  %177 = vmatprep.subr.mxu0 0.0
  %178 = vmatpush1.msra.mxu0 0.0
  %179 = vmatprep.subr.mxu0 0.0
  %180 = vmatpush1.msra.mxu0 0.0
  %181 = vmatprep.subr.mxu0 0.0
  %182 = vmatpush1.msra.mxu0 0.0
  %183 = vmatprep.subr.mxu0 0.0
  %184 = vmatpush1.msra.mxu0 0.0
  %185 = vmatprep.subr.mxu0 0.0
  %186 = vmatpush1.msra.mxu0 0.0
  %187 = vmatprep.subr.mxu0 0.0
  %188 = vmatpush1.msra.mxu0 0.0
  %189 = vmatprep.subr.mxu0 0.0
  %190 = vmatpush1.msra.mxu0 0.0
  %191 = vmatprep.subr.mxu0 0.0
  %192 = vmatpush1.msra.mxu0 0.0
  %193 = vmatprep.subr.mxu0 0.0
  %194 = vmatpush1.msra.mxu0 0.0
  %195 = vmatprep.mubr.f32.mxu0 0.0
  %196 = vmatmul.mubr.f32.gmra.mrb[0].mxu0 %v129
  %v197 = vpop.f32.mrb[0].mxu0
  %v198 = vadd.f32 0.0, %v197
  %v199 = vpop.f32.mrb[0].mxu0
  %v200 = vadd.f32 0.0, %v199
  %201 = vdwg.mxu0
  %202 = vmatprep.subr.mxu0 %v58
  %203 = vmatpush1.msra.mxu0 %v57
  %204 = vmatprep.subr.mxu0 %v76
  %205 = vmatpush1.msra.mxu0 %v75
  %206 = vmatprep.subr.mxu0 %v94
  %207 = vmatpush1.msra.mxu0 %v93
  %208 = vmatprep.subr.mxu0 %v112
  %209 = vmatpush1.msra.mxu0 %v111
  %210 = vmatprep.subr.mxu0 0.0
  %211 = vmatpush1.msra.mxu0 0.0
  %212 = vmatprep.subr.mxu0 0.0
  %213 = vmatpush1.msra.mxu0 0.0
  %214 = vmatprep.subr.mxu0 0.0
  %215 = vmatpush1.msra.mxu0 0.0
  %216 = vmatprep.subr.mxu0 0.0
  %217 = vmatpush1.msra.mxu0 0.0
  %218 = vmatprep.subr.mxu0 0.0
  %219 = vmatpush1.msra.mxu0 0.0
  %220 = vmatprep.subr.mxu0 0.0
  %221 = vmatpush1.msra.mxu0 0.0
  %222 = vmatprep.subr.mxu0 0.0
  %223 = vmatpush1.msra.mxu0 0.0
  %224 = vmatprep.subr.mxu0 0.0
  %225 = vmatpush1.msra.mxu0 0.0
  %226 = vmatprep.subr.mxu0 0.0
  %227 = vmatpush1.msra.mxu0 0.0
  %228 = vmatprep.subr.mxu0 0.0
  %229 = vmatpush1.msra.mxu0 0.0
  %230 = vmatprep.subr.mxu0 0.0
  %231 = vmatpush1.msra.mxu0 0.0
  %232 = vmatprep.subr.mxu0 0.0
  %233 = vmatpush1.msra.mxu0 0.0
  %234 = vmatprep.subr.mxu0 0.0
  %235 = vmatpush1.msra.mxu0 0.0
  %236 = vmatprep.subr.mxu0 0.0
  %237 = vmatpush1.msra.mxu0 0.0
  %238 = vmatprep.subr.mxu0 0.0
  %239 = vmatpush1.msra.mxu0 0.0
  %240 = vmatprep.subr.mxu0 0.0
  %241 = vmatpush1.msra.mxu0 0.0
  %242 = vmatprep.subr.mxu0 0.0
  %243 = vmatpush1.msra.mxu0 0.0
  %244 = vmatprep.subr.mxu0 0.0
  %245 = vmatpush1.msra.mxu0 0.0
  %246 = vmatprep.subr.mxu0 0.0
  %247 = vmatpush1.msra.mxu0 0.0
  %248 = vmatprep.subr.mxu0 0.0
  %249 = vmatpush1.msra.mxu0 0.0
  %250 = vmatprep.subr.mxu0 0.0
  %251 = vmatpush1.msra.mxu0 0.0
  %252 = vmatprep.subr.mxu0 0.0
  %253 = vmatpush1.msra.mxu0 0.0
  %254 = vmatprep.subr.mxu0 0.0
  %255 = vmatpush1.msra.mxu0 0.0
  %256 = vmatprep.subr.mxu0 0.0
  %257 = vmatpush1.msra.mxu0 0.0
  %258 = vmatprep.subr.mxu0 0.0
  %259 = vmatpush1.msra.mxu0 0.0
  %260 = vmatprep.subr.mxu0 0.0
  %261 = vmatpush1.msra.mxu0 0.0
  %262 = vmatprep.subr.mxu0 0.0
  %263 = vmatpush1.msra.mxu0 0.0
  %264 = vmatprep.subr.mxu0 0.0
  %265 = vmatpush1.msra.mxu0 0.0
  %266 = vmatprep.mubr.f32.mxu0 0.0
  %267 = vmatmul.mubr.f32.gmra.mrb[0].mxu0 %v129
  %v268 = vpop.f32.mrb[0].mxu0
  %v269 = vadd.f32 0.0, %v268
  %v270 = vpop.f32.mrb[0].mxu0
  %v271 = vadd.f32 0.0, %v270
  %272 = vdwg.mxu0
  %273 = vmatprep.subr.mxu0 %v60
  %274 = vmatpush1.msra.mxu0 %v59
  %275 = vmatprep.subr.mxu0 %v78
  %276 = vmatpush1.msra.mxu0 %v77
  %277 = vmatprep.subr.mxu0 %v96
  %278 = vmatpush1.msra.mxu0 %v95
  %279 = vmatprep.subr.mxu0 %v114
  %280 = vmatpush1.msra.mxu0 %v113
  %281 = vmatprep.subr.mxu0 0.0
  %282 = vmatpush1.msra.mxu0 0.0
  %283 = vmatprep.subr.mxu0 0.0
  %284 = vmatpush1.msra.mxu0 0.0
  %285 = vmatprep.subr.mxu0 0.0
  %286 = vmatpush1.msra.mxu0 0.0
  %287 = vmatprep.subr.mxu0 0.0
  %288 = vmatpush1.msra.mxu0 0.0
  %289 = vmatprep.subr.mxu0 0.0
  %290 = vmatpush1.msra.mxu0 0.0
  %291 = vmatprep.subr.mxu0 0.0
  %292 = vmatpush1.msra.mxu0 0.0
  %293 = vmatprep.subr.mxu0 0.0
  %294 = vmatpush1.msra.mxu0 0.0
  %295 = vmatprep.subr.mxu0 0.0
  %296 = vmatpush1.msra.mxu0 0.0
  %297 = vmatprep.subr.mxu0 0.0
  %298 = vmatpush1.msra.mxu0 0.0
  %299 = vmatprep.subr.mxu0 0.0
  %300 = vmatpush1.msra.mxu0 0.0
  %301 = vmatprep.subr.mxu0 0.0
  %302 = vmatpush1.msra.mxu0 0.0
  %303 = vmatprep.subr.mxu0 0.0
  %304 = vmatpush1.msra.mxu0 0.0
  %305 = vmatprep.subr.mxu0 0.0
  %306 = vmatpush1.msra.mxu0 0.0
  %307 = vmatprep.subr.mxu0 0.0
  %308 = vmatpush1.msra.mxu0 0.0
  %309 = vmatprep.subr.mxu0 0.0
  %310 = vmatpush1.msra.mxu0 0.0
  %311 = vmatprep.subr.mxu0 0.0
  %312 = vmatpush1.msra.mxu0 0.0
  %313 = vmatprep.subr.mxu0 0.0
  %314 = vmatpush1.msra.mxu0 0.0
  %315 = vmatprep.subr.mxu0 0.0
  %316 = vmatpush1.msra.mxu0 0.0
  %317 = vmatprep.subr.mxu0 0.0
  %318 = vmatpush1.msra.mxu0 0.0
  %319 = vmatprep.subr.mxu0 0.0
  %320 = vmatpush1.msra.mxu0 0.0
  %321 = vmatprep.subr.mxu0 0.0
  %322 = vmatpush1.msra.mxu0 0.0
  %323 = vmatprep.subr.mxu0 0.0
  %324 = vmatpush1.msra.mxu0 0.0
  %325 = vmatprep.subr.mxu0 0.0
  %326 = vmatpush1.msra.mxu0 0.0
  %327 = vmatprep.subr.mxu0 0.0
  %328 = vmatpush1.msra.mxu0 0.0
  %329 = vmatprep.subr.mxu0 0.0
  %330 = vmatpush1.msra.mxu0 0.0
  %331 = vmatprep.subr.mxu0 0.0
  %332 = vmatpush1.msra.mxu0 0.0
  %333 = vmatprep.subr.mxu0 0.0
  %334 = vmatpush1.msra.mxu0 0.0
  %335 = vmatprep.subr.mxu0 0.0
  %336 = vmatpush1.msra.mxu0 0.0
  %337 = vmatprep.mubr.f32.mxu0 0.0
  %338 = vmatmul.mubr.f32.gmra.mrb[0].mxu0 %v129
  %v339 = vpop.f32.mrb[0].mxu0
  %v340 = vadd.f32 0.0, %v339
  %v341 = vpop.f32.mrb[0].mxu0
  %v342 = vadd.f32 0.0, %v341
  %343 = vdwg.mxu0
  %344 = vmatprep.subr.mxu0 %v62
  %345 = vmatpush1.msra.mxu0 %v61
  %346 = vmatprep.subr.mxu0 %v80
  %347 = vmatpush1.msra.mxu0 %v79
  %348 = vmatprep.subr.mxu0 %v98
  %349 = vmatpush1.msra.mxu0 %v97
  %350 = vmatprep.subr.mxu0 %v116
  %351 = vmatpush1.msra.mxu0 %v115
  %352 = vmatprep.subr.mxu0 0.0
  %353 = vmatpush1.msra.mxu0 0.0
  %354 = vmatprep.subr.mxu0 0.0
  %355 = vmatpush1.msra.mxu0 0.0
  %356 = vmatprep.subr.mxu0 0.0
  %357 = vmatpush1.msra.mxu0 0.0
  %358 = vmatprep.subr.mxu0 0.0
  %359 = vmatpush1.msra.mxu0 0.0
  %360 = vmatprep.subr.mxu0 0.0
  %361 = vmatpush1.msra.mxu0 0.0
  %362 = vmatprep.subr.mxu0 0.0
  %363 = vmatpush1.msra.mxu0 0.0
  %364 = vmatprep.subr.mxu0 0.0
  %365 = vmatpush1.msra.mxu0 0.0
  %366 = vmatprep.subr.mxu0 0.0
  %367 = vmatpush1.msra.mxu0 0.0
  %368 = vmatprep.subr.mxu0 0.0
  %369 = vmatpush1.msra.mxu0 0.0
  %370 = vmatprep.subr.mxu0 0.0
  %371 = vmatpush1.msra.mxu0 0.0
  %372 = vmatprep.subr.mxu0 0.0
  %373 = vmatpush1.msra.mxu0 0.0
  %374 = vmatprep.subr.mxu0 0.0
  %375 = vmatpush1.msra.mxu0 0.0
  %376 = vmatprep.subr.mxu0 0.0
  %377 = vmatpush1.msra.mxu0 0.0
  %378 = vmatprep.subr.mxu0 0.0
  %379 = vmatpush1.msra.mxu0 0.0
  %380 = vmatprep.subr.mxu0 0.0
  %381 = vmatpush1.msra.mxu0 0.0
  %382 = vmatprep.subr.mxu0 0.0
  %383 = vmatpush1.msra.mxu0 0.0
  %384 = vmatprep.subr.mxu0 0.0
  %385 = vmatpush1.msra.mxu0 0.0
  %386 = vmatprep.subr.mxu0 0.0
  %387 = vmatpush1.msra.mxu0 0.0
  %388 = vmatprep.subr.mxu0 0.0
  %389 = vmatpush1.msra.mxu0 0.0
  %390 = vmatprep.subr.mxu0 0.0
  %391 = vmatpush1.msra.mxu0 0.0
  %392 = vmatprep.subr.mxu0 0.0
  %393 = vmatpush1.msra.mxu0 0.0
  %394 = vmatprep.subr.mxu0 0.0
  %395 = vmatpush1.msra.mxu0 0.0
  %396 = vmatprep.subr.mxu0 0.0
  %397 = vmatpush1.msra.mxu0 0.0
  %398 = vmatprep.subr.mxu0 0.0
  %399 = vmatpush1.msra.mxu0 0.0
  %400 = vmatprep.subr.mxu0 0.0
  %401 = vmatpush1.msra.mxu0 0.0
  %402 = vmatprep.subr.mxu0 0.0
  %403 = vmatpush1.msra.mxu0 0.0
  %404 = vmatprep.subr.mxu0 0.0
  %405 = vmatpush1.msra.mxu0 0.0
  %406 = vmatprep.subr.mxu0 0.0
  %407 = vmatpush1.msra.mxu0 0.0
  %408 = vmatprep.mubr.f32.mxu0 0.0
  %409 = vmatmul.mubr.f32.gmra.mrb[0].mxu0 %v129
  %v410 = vpop.f32.mrb[0].mxu0
  %v411 = vadd.f32 0.0, %v410
  %v412 = vpop.f32.mrb[0].mxu0
  %v413 = vadd.f32 0.0, %v412
  %414 = vdwg.mxu0
  %415 = vmatprep.subr.mxu0 %v64
  %416 = vmatpush1.msra.mxu0 %v63
  %417 = vmatprep.subr.mxu0 %v82
  %418 = vmatpush1.msra.mxu0 %v81
  %419 = vmatprep.subr.mxu0 %v100
  %420 = vmatpush1.msra.mxu0 %v99
  %421 = vmatprep.subr.mxu0 %v118
  %422 = vmatpush1.msra.mxu0 %v117
  %423 = vmatprep.subr.mxu0 0.0
  %424 = vmatpush1.msra.mxu0 0.0
  %425 = vmatprep.subr.mxu0 0.0
  %426 = vmatpush1.msra.mxu0 0.0
  %427 = vmatprep.subr.mxu0 0.0
  %428 = vmatpush1.msra.mxu0 0.0
  %429 = vmatprep.subr.mxu0 0.0
  %430 = vmatpush1.msra.mxu0 0.0
  %431 = vmatprep.subr.mxu0 0.0
  %432 = vmatpush1.msra.mxu0 0.0
  %433 = vmatprep.subr.mxu0 0.0
  %434 = vmatpush1.msra.mxu0 0.0
  %435 = vmatprep.subr.mxu0 0.0
  %436 = vmatpush1.msra.mxu0 0.0
  %437 = vmatprep.subr.mxu0 0.0
  %438 = vmatpush1.msra.mxu0 0.0
  %439 = vmatprep.subr.mxu0 0.0
  %440 = vmatpush1.msra.mxu0 0.0
  %441 = vmatprep.subr.mxu0 0.0
  %442 = vmatpush1.msra.mxu0 0.0
  %443 = vmatprep.subr.mxu0 0.0
  %444 = vmatpush1.msra.mxu0 0.0
  %445 = vmatprep.subr.mxu0 0.0
  %446 = vmatpush1.msra.mxu0 0.0
  %447 = vmatprep.subr.mxu0 0.0
  %448 = vmatpush1.msra.mxu0 0.0
  %449 = vmatprep.subr.mxu0 0.0
  %450 = vmatpush1.msra.mxu0 0.0
  %451 = vmatprep.subr.mxu0 0.0
  %452 = vmatpush1.msra.mxu0 0.0
  %453 = vmatprep.subr.mxu0 0.0
  %454 = vmatpush1.msra.mxu0 0.0
  %455 = vmatprep.subr.mxu0 0.0
  %456 = vmatpush1.msra.mxu0 0.0
  %457 = vmatprep.subr.mxu0 0.0
  %458 = vmatpush1.msra.mxu0 0.0
  %459 = vmatprep.subr.mxu0 0.0
  %460 = vmatpush1.msra.mxu0 0.0
  %461 = vmatprep.subr.mxu0 0.0
  %462 = vmatpush1.msra.mxu0 0.0
  %463 = vmatprep.subr.mxu0 0.0
  %464 = vmatpush1.msra.mxu0 0.0
  %465 = vmatprep.subr.mxu0 0.0
  %466 = vmatpush1.msra.mxu0 0.0
  %467 = vmatprep.subr.mxu0 0.0
  %468 = vmatpush1.msra.mxu0 0.0
  %469 = vmatprep.subr.mxu0 0.0
  %470 = vmatpush1.msra.mxu0 0.0
  %471 = vmatprep.subr.mxu0 0.0
  %472 = vmatpush1.msra.mxu0 0.0
  %473 = vmatprep.subr.mxu0 0.0
  %474 = vmatpush1.msra.mxu0 0.0
  %475 = vmatprep.subr.mxu0 0.0
  %476 = vmatpush1.msra.mxu0 0.0
  %477 = vmatprep.subr.mxu0 0.0
  %478 = vmatpush1.msra.mxu0 0.0
  %479 = vmatprep.mubr.f32.mxu0 0.0
  %480 = vmatmul.mubr.f32.gmra.mrb[0].mxu0 %v129
  %v481 = vpop.f32.mrb[0].mxu0
  %v482 = vadd.f32 0.0, %v481
  %v483 = vpop.f32.mrb[0].mxu0
  %v484 = vadd.f32 0.0, %v483
  %485 = vdwg.mxu0
  %486 = vmatprep.subr.mxu0 %v66
  %487 = vmatpush1.msra.mxu0 %v65
  %488 = vmatprep.subr.mxu0 %v84
  %489 = vmatpush1.msra.mxu0 %v83
  %490 = vmatprep.subr.mxu0 %v102
  %491 = vmatpush1.msra.mxu0 %v101
  %492 = vmatprep.subr.mxu0 %v120
  %493 = vmatpush1.msra.mxu0 %v119
  %494 = vmatprep.subr.mxu0 0.0
  %495 = vmatpush1.msra.mxu0 0.0
  %496 = vmatprep.subr.mxu0 0.0
  %497 = vmatpush1.msra.mxu0 0.0
  %498 = vmatprep.subr.mxu0 0.0
  %499 = vmatpush1.msra.mxu0 0.0
  %500 = vmatprep.subr.mxu0 0.0
  %501 = vmatpush1.msra.mxu0 0.0
  %502 = vmatprep.subr.mxu0 0.0
  %503 = vmatpush1.msra.mxu0 0.0
  %504 = vmatprep.subr.mxu0 0.0
  %505 = vmatpush1.msra.mxu0 0.0
  %506 = vmatprep.subr.mxu0 0.0
  %507 = vmatpush1.msra.mxu0 0.0
  %508 = vmatprep.subr.mxu0 0.0
  %509 = vmatpush1.msra.mxu0 0.0
  %510 = vmatprep.subr.mxu0 0.0
  %511 = vmatpush1.msra.mxu0 0.0
  %512 = vmatprep.subr.mxu0 0.0
  %513 = vmatpush1.msra.mxu0 0.0
  %514 = vmatprep.subr.mxu0 0.0
  %515 = vmatpush1.msra.mxu0 0.0
  %516 = vmatprep.subr.mxu0 0.0
  %517 = vmatpush1.msra.mxu0 0.0
  %518 = vmatprep.subr.mxu0 0.0
  %519 = vmatpush1.msra.mxu0 0.0
  %520 = vmatprep.subr.mxu0 0.0
  %521 = vmatpush1.msra.mxu0 0.0
  %522 = vmatprep.subr.mxu0 0.0
  %523 = vmatpush1.msra.mxu0 0.0
  %524 = vmatprep.subr.mxu0 0.0
  %525 = vmatpush1.msra.mxu0 0.0
  %526 = vmatprep.subr.mxu0 0.0
  %527 = vmatpush1.msra.mxu0 0.0
  %528 = vmatprep.subr.mxu0 0.0
  %529 = vmatpush1.msra.mxu0 0.0
  %530 = vmatprep.subr.mxu0 0.0
  %531 = vmatpush1.msra.mxu0 0.0
  %532 = vmatprep.subr.mxu0 0.0
  %533 = vmatpush1.msra.mxu0 0.0
  %534 = vmatprep.subr.mxu0 0.0
  %535 = vmatpush1.msra.mxu0 0.0
  %536 = vmatprep.subr.mxu0 0.0
  %537 = vmatpush1.msra.mxu0 0.0
  %538 = vmatprep.subr.mxu0 0.0
  %539 = vmatpush1.msra.mxu0 0.0
  %540 = vmatprep.subr.mxu0 0.0
  %541 = vmatpush1.msra.mxu0 0.0
  %542 = vmatprep.subr.mxu0 0.0
  %543 = vmatpush1.msra.mxu0 0.0
  %544 = vmatprep.subr.mxu0 0.0
  %545 = vmatpush1.msra.mxu0 0.0
  %546 = vmatprep.subr.mxu0 0.0
  %547 = vmatpush1.msra.mxu0 0.0
  %548 = vmatprep.subr.mxu0 0.0
  %549 = vmatpush1.msra.mxu0 0.0
  %550 = vmatprep.mubr.f32.mxu0 0.0
  %551 = vmatmul.mubr.f32.gmra.mrb[0].mxu0 %v129
  %v552 = vpop.f32.mrb[0].mxu0
  %v553 = vadd.f32 0.0, %v552
  %v554 = vpop.f32.mrb[0].mxu0
  %v555 = vadd.f32 0.0, %v554
  %556 = vdwg.mxu0
  %557 = vmatprep.subr.mxu0 %v68
  %558 = vmatpush1.msra.mxu0 %v67
  %559 = vmatprep.subr.mxu0 %v86
  %560 = vmatpush1.msra.mxu0 %v85
  %561 = vmatprep.subr.mxu0 %v104
  %562 = vmatpush1.msra.mxu0 %v103
  %563 = vmatprep.subr.mxu0 %v122
  %564 = vmatpush1.msra.mxu0 %v121
  %565 = vmatprep.subr.mxu0 0.0
  %566 = vmatpush1.msra.mxu0 0.0
  %567 = vmatprep.subr.mxu0 0.0
  %568 = vmatpush1.msra.mxu0 0.0
  %569 = vmatprep.subr.mxu0 0.0
  %570 = vmatpush1.msra.mxu0 0.0
  %571 = vmatprep.subr.mxu0 0.0
  %572 = vmatpush1.msra.mxu0 0.0
  %573 = vmatprep.subr.mxu0 0.0
  %574 = vmatpush1.msra.mxu0 0.0
  %575 = vmatprep.subr.mxu0 0.0
  %576 = vmatpush1.msra.mxu0 0.0
  %577 = vmatprep.subr.mxu0 0.0
  %578 = vmatpush1.msra.mxu0 0.0
  %579 = vmatprep.subr.mxu0 0.0
  %580 = vmatpush1.msra.mxu0 0.0
  %581 = vmatprep.subr.mxu0 0.0
  %582 = vmatpush1.msra.mxu0 0.0
  %583 = vmatprep.subr.mxu0 0.0
  %584 = vmatpush1.msra.mxu0 0.0
  %585 = vmatprep.subr.mxu0 0.0
  %586 = vmatpush1.msra.mxu0 0.0
  %587 = vmatprep.subr.mxu0 0.0
  %588 = vmatpush1.msra.mxu0 0.0
  %589 = vmatprep.subr.mxu0 0.0
  %590 = vmatpush1.msra.mxu0 0.0
  %591 = vmatprep.subr.mxu0 0.0
  %592 = vmatpush1.msra.mxu0 0.0
  %593 = vmatprep.subr.mxu0 0.0
  %594 = vmatpush1.msra.mxu0 0.0
  %595 = vmatprep.subr.mxu0 0.0
  %596 = vmatpush1.msra.mxu0 0.0
  %597 = vmatprep.subr.mxu0 0.0
  %598 = vmatpush1.msra.mxu0 0.0
  %599 = vmatprep.subr.mxu0 0.0
  %600 = vmatpush1.msra.mxu0 0.0
  %601 = vmatprep.subr.mxu0 0.0
  %602 = vmatpush1.msra.mxu0 0.0
  %603 = vmatprep.subr.mxu0 0.0
  %604 = vmatpush1.msra.mxu0 0.0
  %605 = vmatprep.subr.mxu0 0.0
  %606 = vmatpush1.msra.mxu0 0.0
  %607 = vmatprep.subr.mxu0 0.0
  %608 = vmatpush1.msra.mxu0 0.0
  %609 = vmatprep.subr.mxu0 0.0
  %610 = vmatpush1.msra.mxu0 0.0
  %611 = vmatprep.subr.mxu0 0.0
  %612 = vmatpush1.msra.mxu0 0.0
  %613 = vmatprep.subr.mxu0 0.0
  %614 = vmatpush1.msra.mxu0 0.0
  %615 = vmatprep.subr.mxu0 0.0
  %616 = vmatpush1.msra.mxu0 0.0
  %617 = vmatprep.subr.mxu0 0.0
  %618 = vmatpush1.msra.mxu0 0.0
  %619 = vmatprep.subr.mxu0 0.0
  %620 = vmatpush1.msra.mxu0 0.0
  %621 = vmatprep.mubr.f32.mxu0 0.0
  %622 = vmatmul.mubr.f32.gmra.mrb[0].mxu0 %v129
  %v623 = vpop.f32.mrb[0].mxu0
  %v624 = vadd.f32 0.0, %v623
  %v625 = vpop.f32.mrb[0].mxu0
  %v626 = vadd.f32 0.0, %v625
  %627 = vdwg.mxu0
  %628 = vmatprep.subr.mxu0 %v70
  %629 = vmatpush1.msra.mxu0 %v69
  %630 = vmatprep.subr.mxu0 %v88
  %631 = vmatpush1.msra.mxu0 %v87
  %632 = vmatprep.subr.mxu0 %v106
  %633 = vmatpush1.msra.mxu0 %v105
  %634 = vmatprep.subr.mxu0 %v124
  %635 = vmatpush1.msra.mxu0 %v123
  %636 = vmatprep.subr.mxu0 0.0
  %637 = vmatpush1.msra.mxu0 0.0
  %638 = vmatprep.subr.mxu0 0.0
  %639 = vmatpush1.msra.mxu0 0.0
  %640 = vmatprep.subr.mxu0 0.0
  %641 = vmatpush1.msra.mxu0 0.0
  %642 = vmatprep.subr.mxu0 0.0
  %643 = vmatpush1.msra.mxu0 0.0
  %644 = vmatprep.subr.mxu0 0.0
  %645 = vmatpush1.msra.mxu0 0.0
  %646 = vmatprep.subr.mxu0 0.0
  %647 = vmatpush1.msra.mxu0 0.0
  %648 = vmatprep.subr.mxu0 0.0
  %649 = vmatpush1.msra.mxu0 0.0
  %650 = vmatprep.subr.mxu0 0.0
  %651 = vmatpush1.msra.mxu0 0.0
  %652 = vmatprep.subr.mxu0 0.0
  %653 = vmatpush1.msra.mxu0 0.0
  %654 = vmatprep.subr.mxu0 0.0
  %655 = vmatpush1.msra.mxu0 0.0
  %656 = vmatprep.subr.mxu0 0.0
  %657 = vmatpush1.msra.mxu0 0.0
  %658 = vmatprep.subr.mxu0 0.0
  %659 = vmatpush1.msra.mxu0 0.0
  %660 = vmatprep.subr.mxu0 0.0
  %661 = vmatpush1.msra.mxu0 0.0
  %662 = vmatprep.subr.mxu0 0.0
  %663 = vmatpush1.msra.mxu0 0.0
  %664 = vmatprep.subr.mxu0 0.0
  %665 = vmatpush1.msra.mxu0 0.0
  %666 = vmatprep.subr.mxu0 0.0
  %667 = vmatpush1.msra.mxu0 0.0
  %668 = vmatprep.subr.mxu0 0.0
  %669 = vmatpush1.msra.mxu0 0.0
  %670 = vmatprep.subr.mxu0 0.0
  %671 = vmatpush1.msra.mxu0 0.0
  %672 = vmatprep.subr.mxu0 0.0
  %673 = vmatpush1.msra.mxu0 0.0
  %674 = vmatprep.subr.mxu0 0.0
  %675 = vmatpush1.msra.mxu0 0.0
  %676 = vmatprep.subr.mxu0 0.0
  %677 = vmatpush1.msra.mxu0 0.0
  %678 = vmatprep.subr.mxu0 0.0
  %679 = vmatpush1.msra.mxu0 0.0
  %680 = vmatprep.subr.mxu0 0.0
  %681 = vmatpush1.msra.mxu0 0.0
  %682 = vmatprep.subr.mxu0 0.0
  %683 = vmatpush1.msra.mxu0 0.0
  %684 = vmatprep.subr.mxu0 0.0
  %685 = vmatpush1.msra.mxu0 0.0
  %686 = vmatprep.subr.mxu0 0.0
  %687 = vmatpush1.msra.mxu0 0.0
  %688 = vmatprep.subr.mxu0 0.0
  %689 = vmatpush1.msra.mxu0 0.0
  %690 = vmatprep.subr.mxu0 0.0
  %691 = vmatpush1.msra.mxu0 0.0
  %692 = vmatprep.mubr.f32.mxu0 0.0
  %693 = vmatmul.mubr.f32.gmra.mrb[0].mxu0 %v129
  %v694 = vpop.f32.mrb[0].mxu0
  %v695 = vadd.f32 0.0, %v694
  %v696 = vpop.f32.mrb[0].mxu0
  %v697 = vadd.f32 0.0, %v696
  %698 = vdwg.mxu0
  %699 = vmatprep.subr.mxu0 %v72
  %700 = vmatpush1.msra.mxu0 %v71
  %701 = vmatprep.subr.mxu0 %v90
  %702 = vmatpush1.msra.mxu0 %v89
  %703 = vmatprep.subr.mxu0 %v108
  %704 = vmatpush1.msra.mxu0 %v107
  %705 = vmatprep.subr.mxu0 %v126
  %706 = vmatpush1.msra.mxu0 %v125
  %707 = vmatprep.subr.mxu0 0.0
  %708 = vmatpush1.msra.mxu0 0.0
  %709 = vmatprep.subr.mxu0 0.0
  %710 = vmatpush1.msra.mxu0 0.0
  %711 = vmatprep.subr.mxu0 0.0
  %712 = vmatpush1.msra.mxu0 0.0
  %713 = vmatprep.subr.mxu0 0.0
  %714 = vmatpush1.msra.mxu0 0.0
  %715 = vmatprep.subr.mxu0 0.0
  %716 = vmatpush1.msra.mxu0 0.0
  %717 = vmatprep.subr.mxu0 0.0
  %718 = vmatpush1.msra.mxu0 0.0
  %719 = vmatprep.subr.mxu0 0.0
  %720 = vmatpush1.msra.mxu0 0.0
  %721 = vmatprep.subr.mxu0 0.0
  %722 = vmatpush1.msra.mxu0 0.0
  %723 = vmatprep.subr.mxu0 0.0
  %724 = vmatpush1.msra.mxu0 0.0
  %725 = vmatprep.subr.mxu0 0.0
  %726 = vmatpush1.msra.mxu0 0.0
  %727 = vmatprep.subr.mxu0 0.0
  %728 = vmatpush1.msra.mxu0 0.0
  %729 = vmatprep.subr.mxu0 0.0
  %730 = vmatpush1.msra.mxu0 0.0
  %731 = vmatprep.subr.mxu0 0.0
  %732 = vmatpush1.msra.mxu0 0.0
  %733 = vmatprep.subr.mxu0 0.0
  %734 = vmatpush1.msra.mxu0 0.0
  %735 = vmatprep.subr.mxu0 0.0
  %736 = vmatpush1.msra.mxu0 0.0
  %737 = vmatprep.subr.mxu0 0.0
  %738 = vmatpush1.msra.mxu0 0.0
  %739 = vmatprep.subr.mxu0 0.0
  %740 = vmatpush1.msra.mxu0 0.0
  %741 = vmatprep.subr.mxu0 0.0
  %742 = vmatpush1.msra.mxu0 0.0
  %743 = vmatprep.subr.mxu0 0.0
  %744 = vmatpush1.msra.mxu0 0.0
  %745 = vmatprep.subr.mxu0 0.0
  %746 = vmatpush1.msra.mxu0 0.0
  %747 = vmatprep.subr.mxu0 0.0
  %748 = vmatpush1.msra.mxu0 0.0
  %749 = vmatprep.subr.mxu0 0.0
  %750 = vmatpush1.msra.mxu0 0.0
  %751 = vmatprep.subr.mxu0 0.0
  %752 = vmatpush1.msra.mxu0 0.0
  %753 = vmatprep.subr.mxu0 0.0
  %754 = vmatpush1.msra.mxu0 0.0
  %755 = vmatprep.subr.mxu0 0.0
  %756 = vmatpush1.msra.mxu0 0.0
  %757 = vmatprep.subr.mxu0 0.0
  %758 = vmatpush1.msra.mxu0 0.0
  %759 = vmatprep.subr.mxu0 0.0
  %760 = vmatpush1.msra.mxu0 0.0
  %761 = vmatprep.subr.mxu0 0.0
  %762 = vmatpush1.msra.mxu0 0.0
  %763 = vmatprep.mubr.f32.mxu0 0.0
  %764 = vmatmul.mubr.f32.gmra.mrb[0].mxu0 %v129
  %v765 = vpop.f32.mrb[0].mxu0
  %v766 = vadd.f32 0.0, %v765
  %v767 = vpop.f32.mrb[0].mxu0
  %v768 = vadd.f32 0.0, %v767
  %769 = vdwg.mxu0
  %v770 = vadd.f32 %v198, %v200
  %v771 = vadd.f32 %v770, %v269
  %v772 = vadd.f32 %v771, %v271
  %v773 = vadd.f32 %v772, %v340
  %v774 = vadd.f32 %v773, %v342
  %v775 = vadd.f32 %v774, %v411
  %v776 = vadd.f32 %v775, %v413
  %v777 = vadd.f32 %v776, %v482
  %v778 = vadd.f32 %v777, %v484
  %v779 = vadd.f32 %v778, %v553
  %v780 = vadd.f32 %v779, %v555
  %v781 = vadd.f32 %v780, %v624
  %v782 = vadd.f32 %v781, %v626
  %v783 = vadd.f32 %v782, %v695
  %v784 = vadd.f32 %v783, %v697
  %v785 = vadd.f32 %v784, %v766
  %v786 = vadd.f32 %v785, %v768
  %787 = vadd.xlane.f32.xlu0 %v786
  %v788 = vpop.xlane.xlu0 %787
  %v789 = vmul.f32 %v788, 0.00045913682
  %v790 = vmul.f32 %v198, %v198
  %v791 = vmul.f32 %v200, %v200
  %v792 = vmul.f32 %v269, %v269
  %v793 = vmul.f32 %v271, %v271
  %v794 = vmul.f32 %v340, %v340
  %v795 = vmul.f32 %v342, %v342
  %v796 = vmul.f32 %v411, %v411
  %v797 = vmul.f32 %v413, %v413
  %v798 = vmul.f32 %v482, %v482
  %v799 = vmul.f32 %v484, %v484
  %v800 = vmul.f32 %v553, %v553
  %v801 = vmul.f32 %v555, %v555
  %v802 = vmul.f32 %v624, %v624
  %v803 = vmul.f32 %v626, %v626
  %v804 = vmul.f32 %v695, %v695
  %v805 = vmul.f32 %v697, %v697
  %v806 = vmul.f32 %v766, %v766
  %v807 = vmul.f32 %v768, %v768
  %v808 = vadd.f32 %v790, %v791
  %v809 = vadd.f32 %v808, %v792
  %v810 = vadd.f32 %v809, %v793
  %v811 = vadd.f32 %v810, %v794
  %v812 = vadd.f32 %v811, %v795
  %v813 = vadd.f32 %v812, %v796
  %v814 = vadd.f32 %v813, %v797
  %v815 = vadd.f32 %v814, %v798
  %v816 = vadd.f32 %v815, %v799
  %v817 = vadd.f32 %v816, %v800
  %v818 = vadd.f32 %v817, %v801
  %v819 = vadd.f32 %v818, %v802
  %v820 = vadd.f32 %v819, %v803
  %v821 = vadd.f32 %v820, %v804
  %v822 = vadd.f32 %v821, %v805
  %v823 = vadd.f32 %v822, %v806
  %v824 = vadd.f32 %v823, %v807
  %825 = vadd.xlane.f32.xlu0 %v824
  %v826 = vpop.xlane.xlu0 %825
  %v827 = vmul.f32 %v826, 0.00045913682
  %v828 = vmul.f32 %v789, %v789
  %v829 = vsub.f32 %v827, %v828
  %v830 = vmax.f32 %v829, 0.0
  %v831 = vld [vmem:[%s2] sm:$0xff]
  %v832 = vadd.f32 %v830, 1e-05
  %v833 = vrsqrt.pop %v832
  %v834 = vmul.f32 %v831, %v833
  %v835 = vld [vmem:[%s3] sm:$0xff]
  %v836 = vmul.f32 %v789, %v834
  %v837 = vsub.f32 %v835, %v836
  %839 = vset.pattern.permute.xlu0 0
  %840 = vperm.xlu0 %839, %v834
  %v841 = vpop.permute.xlu0 %840
  %v843 = vmul.f32 %v198, %v841
  %v844 = vmul.f32 %v200, %v841
  %v845 = vmul.f32 %v269, %v841
  %v846 = vmul.f32 %v271, %v841
  %v847 = vmul.f32 %v340, %v841
  %v848 = vmul.f32 %v342, %v841
  %v849 = vmul.f32 %v411, %v841
  %v850 = vmul.f32 %v413, %v841
  %v851 = vmul.f32 %v482, %v841
  %v852 = vmul.f32 %v484, %v841
  %v853 = vmul.f32 %v553, %v841
  %v854 = vmul.f32 %v555, %v841
  %v855 = vmul.f32 %v624, %v841
  %v856 = vmul.f32 %v626, %v841
  %v857 = vmul.f32 %v695, %v841
  %v858 = vmul.f32 %v697, %v841
  %v859 = vmul.f32 %v766, %v841
  %v860 = vmul.f32 %v768, %v841
  %862 = vset.pattern.permute.xlu0 0
  %863 = vperm.xlu0 %862, %v837
  %v864 = vpop.permute.xlu0 %863
  %v866 = vadd.f32 %v843, %v864
  %v867 = vadd.f32 %v844, %v864
  %v868 = vadd.f32 %v845, %v864
  %v869 = vadd.f32 %v846, %v864
  %v870 = vadd.f32 %v847, %v864
  %v871 = vadd.f32 %v848, %v864
  %v872 = vadd.f32 %v849, %v864
  %v873 = vadd.f32 %v850, %v864
  %v874 = vadd.f32 %v851, %v864
  %v875 = vadd.f32 %v852, %v864
  %v876 = vadd.f32 %v853, %v864
  %v877 = vadd.f32 %v854, %v864
  %v878 = vadd.f32 %v855, %v864
  %v879 = vadd.f32 %v856, %v864
  %v880 = vadd.f32 %v857, %v864
  %v881 = vadd.f32 %v858, %v864
  %v882 = vadd.f32 %v859, %v864
  %v883 = vadd.f32 %v860, %v864
  %v884 = vmax.f32 %v866, 0.0
  %v885 = vmax.f32 %v867, 0.0
  %v886 = vmax.f32 %v868, 0.0
  %v887 = vmax.f32 %v869, 0.0
  %v888 = vmax.f32 %v870, 0.0
  %v889 = vmax.f32 %v871, 0.0
  %v890 = vmax.f32 %v872, 0.0
  %v891 = vmax.f32 %v873, 0.0
  %v892 = vmax.f32 %v874, 0.0
  %v893 = vmax.f32 %v875, 0.0
  %v894 = vmax.f32 %v876, 0.0
  %v895 = vmax.f32 %v877, 0.0
  %v896 = vmax.f32 %v878, 0.0
  %v897 = vmax.f32 %v879, 0.0
  %v898 = vmax.f32 %v880, 0.0
  %v899 = vmax.f32 %v881, 0.0
  %v900 = vmax.f32 %v882, 0.0
  %v901 = vmax.f32 %v883, 0.0
  %v902 = vpack.c.bf16 %v884, %v884
  %v903 = vpack.c.bf16 %v885, %v885
  %v904 = vpack.c.bf16 %v886, %v886
  %v905 = vpack.c.bf16 %v887, %v887
  %v906 = vpack.c.bf16 %v888, %v888
  %v907 = vpack.c.bf16 %v889, %v889
  %v908 = vpack.c.bf16 %v890, %v890
  %v909 = vpack.c.bf16 %v891, %v891
  %v910 = vpack.c.bf16 %v892, %v892
  %v911 = vpack.c.bf16 %v893, %v893
  %v912 = vpack.c.bf16 %v894, %v894
  %v913 = vpack.c.bf16 %v895, %v895
  %v914 = vpack.c.bf16 %v896, %v896
  %v915 = vpack.c.bf16 %v897, %v897
  %v916 = vpack.c.bf16 %v898, %v898
  %v917 = vpack.c.bf16 %v899, %v899
  %v918 = vpack.c.bf16 %v900, %v900
  %v919 = vpack.c.bf16 %v901, %v901
  %v938 = vunpack.c.l.b16 %v902
  %v939 = vunpack.c.l.b16 %v903
  %v940 = vunpack.c.l.b16 %v904
  %v941 = vunpack.c.l.b16 %v905
  %v942 = vunpack.c.l.b16 %v906
  %v943 = vunpack.c.l.b16 %v907
  %v944 = vunpack.c.l.b16 %v908
  %v945 = vunpack.c.l.b16 %v909
  %v946 = vunpack.c.l.b16 %v910
  %v947 = vunpack.c.l.b16 %v911
  %v948 = vunpack.c.l.b16 %v912
  %v949 = vunpack.c.l.b16 %v913
  %v950 = vunpack.c.l.b16 %v914
  %v951 = vunpack.c.l.b16 %v915
  %v952 = vunpack.c.l.b16 %v916
  %v953 = vunpack.c.l.b16 %v917
  %v954 = vunpack.c.l.b16 %v918
  %v955 = vunpack.c.l.b16 %v919
  %v956 = vpack.c.b16 %v939, %v938
  %v957 = vpack.c.b16 %v941, %v940
  %v958 = vpack.c.b16 %v943, %v942
  %v959 = vpack.c.b16 %v945, %v944
  %v960 = vpack.c.b16 %v947, %v946
  %v961 = vpack.c.b16 %v949, %v948
  %v962 = vpack.c.b16 %v951, %v950
  %v963 = vpack.c.b16 %v953, %v952
  %v964 = vpack.c.b16 %v955, %v954
  %974 = vst [vmem:[%s4] sm:$0xff] %v956
  %975 = vst [vmem:[%s4 + $0x8] sm:$0xff] %v957
  %976 = vst [vmem:[%s4 + $0x10] sm:$0xff] %v958
  %977 = vst [vmem:[%s4 + $0x18] sm:$0xff] %v959
  %978 = vst [vmem:[%s4 + $0x20] sm:$0xff] %v960
  %979 = vst [vmem:[%s4 + $0x28] sm:$0xff] %v961
  %980 = vst [vmem:[%s4 + $0x30] sm:$0xff] %v962
  %981 = vst [vmem:[%s4 + $0x38] sm:$0xff] %v963
  %982 = vst [vmem:[%s4 + $0x40] sm:$0xff] %v964
  // Predicated region
  $region18: #{decoder_forward.8} parent=0 // pred_check
    _
  $region19: #{decoder_forward.8} parent=0 // pred_check_branch
    %984 = sbr.rel (0) target = $region21
  $region20: #{decoder_forward.8} parent=0 // pred_region
    _
  $region21: #{decoder_forward.8} parent=0 // pred_fallthru
    _
  // Predicated region
  $region22: #{decoder_forward.8} parent=0 // pred_check
    _
  $region23: #{decoder_forward.8} parent=0 // pred_check_branch
    %986 = sbr.rel (0) target = $region25
  $region24: #{decoder_forward.8} parent=0 // pred_region
    _
  $region25: #{decoder_forward.8} parent=0 // pred_fallthru
    _

// kernel: decoder_forward.9
$region0: #{decoder_forward.9}
  #allocation0 [shape = 'u32[]', space=smem, size = 0x4, offset = 0x4, fixed_abs, tag = 'smem constant byte address 0x4 - core index']
  #allocation1 [shape = 'u32[144,128]{1,0:T(1,128)}', space=vmem, size = 0x12000, scoped, tag = 'internal scratch']
  %s0 = inlined_call_operand.vmem [shape: bf16[36,8192], index: 0, kind: input, shape index: {}]
  %s1 = inlined_call_operand.vmem [shape: bf16[8,36], index: 1, kind: input, shape index: {}]
  %s2 = inlined_call_operand.vmem [shape: f32[8,1], index: 2, kind: input, shape index: {}]
  %s3 = inlined_call_operand.vmem [shape: f32[8,1], index: 3, kind: input, shape index: {}]
  %s4 = inlined_call_operand.vmem [shape: f32[8,8192], index: 4, kind: output, shape index: {}]
  %s5 = sld [smem:[#allocation0]]
  $region26: #{decoder_forward.9} parent=0
    _
  %s7 = ssub.s32 1, %s5
  %s8 = scalar_select 0, %s7, %s5
  // Predicated region
  $region2: #{decoder_forward.9} parent=0 // pred_check
    _
  $region3: #{decoder_forward.9} parent=0 // pred_check_branch
    %10 = sbr.rel (0) target = $region5
  $region4: #{decoder_forward.9} parent=0 // pred_region
    _
  $region5: #{decoder_forward.9} parent=0 // pred_fallthru
    _
  // Predicated region
  $region6: #{decoder_forward.9} parent=0 // pred_check
    _
  $region7: #{decoder_forward.9} parent=0 // pred_check_branch
    %12 = sbr.rel (0) target = $region9
  $region8: #{decoder_forward.9} parent=0 // pred_region
    _
  $region9: #{decoder_forward.9} parent=0 // pred_fallthru
    _
  // Predicated region
  $region10: #{decoder_forward.9} parent=0 // pred_check
    _
  $region11: #{decoder_forward.9} parent=0 // pred_check_branch
    %14 = sbr.rel (0) target = $region13
  $region12: #{decoder_forward.9} parent=0 // pred_region
    _
  $region13: #{decoder_forward.9} parent=0 // pred_fallthru
    _
  // Predicated region
  $region14: #{decoder_forward.9} parent=0 // pred_check
    _
  $region15: #{decoder_forward.9} parent=0 // pred_check_branch
    %16 = sbr.rel (0) target = $region17
  $region16: #{decoder_forward.9} parent=0 // pred_region
    _
  $region17: #{decoder_forward.9} parent=0 // pred_fallthru
    _
  %v17 = vld [vmem:[%s1] sm:$0xf]
  %v18 = vunpack.c.l.bf16 %v17
  %v19 = vld [vmem:[%s0] sm:$0xff]
  %v20 = vld [vmem:[%s0 + $0x8] sm:$0xff]
  %v21 = vld [vmem:[%s0 + $0x10] sm:$0xff]
  %v22 = vld [vmem:[%s0 + $0x18] sm:$0xff]
  %v23 = vld [vmem:[%s0 + $0x20] sm:$0xff]
  %v24 = vld [vmem:[%s0 + $0x28] sm:$0xff]
  %v25 = vld [vmem:[%s0 + $0x30] sm:$0xff]
  %v26 = vld [vmem:[%s0 + $0x38] sm:$0xff]
  %v27 = vld [vmem:[%s0 + $0x40] sm:$0xff]
  %v28 = vld [vmem:[%s0 + $0x48] sm:$0xff]
  %v29 = vld [vmem:[%s0 + $0x50] sm:$0xff]
  %v30 = vld [vmem:[%s0 + $0x58] sm:$0xff]
  %v31 = vld [vmem:[%s0 + $0x60] sm:$0xff]
  %v32 = vld [vmem:[%s0 + $0x68] sm:$0xff]
  %v33 = vld [vmem:[%s0 + $0x70] sm:$0xff]
  %v34 = vld [vmem:[%s0 + $0x78] sm:$0xff]
  %v35 = vld [vmem:[%s0 + $0x80] sm:$0xff]
  %v36 = vld [vmem:[%s0 + $0x88] sm:$0xff]
  %v37 = vld [vmem:[%s0 + $0x90] sm:$0xff]
  %v38 = vld [vmem:[%s0 + $0x98] sm:$0xff]
  %v39 = vld [vmem:[%s0 + $0xa0] sm:$0xff]
  %v40 = vld [vmem:[%s0 + $0xa8] sm:$0xff]
  %v41 = vld [vmem:[%s0 + $0xb0] sm:$0xff]
  %v42 = vld [vmem:[%s0 + $0xb8] sm:$0xff]
  %v43 = vld [vmem:[%s0 + $0xc0] sm:$0xff]
  %v44 = vld [vmem:[%s0 + $0xc8] sm:$0xff]
  %v45 = vld [vmem:[%s0 + $0xd0] sm:$0xff]
  %v46 = vld [vmem:[%s0 + $0xd8] sm:$0xff]
  %v47 = vld [vmem:[%s0 + $0xe0] sm:$0xff]
  %v48 = vld [vmem:[%s0 + $0xe8] sm:$0xff]
  %v49 = vld [vmem:[%s0 + $0xf0] sm:$0xff]
  %v50 = vld [vmem:[%s0 + $0xf8] sm:$0xff]
  %v51 = vld [vmem:[%s0 + $0x100] sm:$0xff]
  %v52 = vld [vmem:[%s0 + $0x108] sm:$0xff]
  %v53 = vld [vmem:[%s0 + $0x110] sm:$0xff]
  %v54 = vld [vmem:[%s0 + $0x118] sm:$0xff]
  %v55 = vld [vmem:[%s0 + $0x120] sm:$0xff]
  %v56 = vld [vmem:[%s0 + $0x128] sm:$0xff]
  %v57 = vld [vmem:[%s0 + $0x130] sm:$0xff]
  %v58 = vld [vmem:[%s0 + $0x138] sm:$0xff]
  %v59 = vld [vmem:[%s0 + $0x140] sm:$0xff]
  %v60 = vld [vmem:[%s0 + $0x148] sm:$0xff]
  %v61 = vld [vmem:[%s0 + $0x150] sm:$0xff]
  %v62 = vld [vmem:[%s0 + $0x158] sm:$0xff]
  %v63 = vld [vmem:[%s0 + $0x160] sm:$0xff]
  %v64 = vld [vmem:[%s0 + $0x168] sm:$0xff]
  %v65 = vld [vmem:[%s0 + $0x170] sm:$0xff]
  %v66 = vld [vmem:[%s0 + $0x178] sm:$0xff]
  %v67 = vld [vmem:[%s0 + $0x180] sm:$0xff]
  %v68 = vld [vmem:[%s0 + $0x188] sm:$0xff]
  %v69 = vld [vmem:[%s0 + $0x190] sm:$0xff]
  %v70 = vld [vmem:[%s0 + $0x198] sm:$0xff]
  %v71 = vld [vmem:[%s0 + $0x1a0] sm:$0xff]
  %v72 = vld [vmem:[%s0 + $0x1a8] sm:$0xff]
  %v73 = vld [vmem:[%s0 + $0x1b0] sm:$0xff]
  %v74 = vld [vmem:[%s0 + $0x1b8] sm:$0xff]
  %v75 = vld [vmem:[%s0 + $0x1c0] sm:$0xff]
  %v76 = vld [vmem:[%s0 + $0x1c8] sm:$0xff]
  %v77 = vld [vmem:[%s0 + $0x1d0] sm:$0xff]
  %v78 = vld [vmem:[%s0 + $0x1d8] sm:$0xff]
  %v79 = vld [vmem:[%s0 + $0x1e0] sm:$0xff]
  %v80 = vld [vmem:[%s0 + $0x1e8] sm:$0xff]
  %v81 = vld [vmem:[%s0 + $0x1f0] sm:$0xff]
  %v82 = vld [vmem:[%s0 + $0x1f8] sm:$0xff]
  %v83 = vld [vmem:[%s0 + $0x200] sm:$0xff]
  %v84 = vld [vmem:[%s0 + $0x208] sm:$0xff]
  %v85 = vld [vmem:[%s0 + $0x210] sm:$0xff]
  %v86 = vld [vmem:[%s0 + $0x218] sm:$0xff]
  %v87 = vld [vmem:[%s0 + $0x220] sm:$0xff]
  %v88 = vld [vmem:[%s0 + $0x228] sm:$0xff]
  %v89 = vld [vmem:[%s0 + $0x230] sm:$0xff]
  %v90 = vld [vmem:[%s0 + $0x238] sm:$0xff]
  %v91 = vld [vmem:[%s0 + $0x240] sm:$0xff]
  %v92 = vld [vmem:[%s0 + $0x248] sm:$0xff]
  %v93 = vld [vmem:[%s0 + $0x250] sm:$0xff]
  %v94 = vld [vmem:[%s0 + $0x258] sm:$0xff]
  %v95 = vld [vmem:[%s0 + $0x260] sm:$0xff]
  %v96 = vld [vmem:[%s0 + $0x268] sm:$0xff]
  %v97 = vld [vmem:[%s0 + $0x270] sm:$0xff]
  %v98 = vld [vmem:[%s0 + $0x278] sm:$0xff]
  %v99 = vld [vmem:[%s0 + $0x280] sm:$0xff]
  %v100 = vld [vmem:[%s0 + $0x288] sm:$0xff]
  %v101 = vld [vmem:[%s0 + $0x290] sm:$0xff]
  %v102 = vld [vmem:[%s0 + $0x298] sm:$0xff]
  %v103 = vld [vmem:[%s0 + $0x2a0] sm:$0xff]
  %v104 = vld [vmem:[%s0 + $0x2a8] sm:$0xff]
  %v105 = vld [vmem:[%s0 + $0x2b0] sm:$0xff]
  %v106 = vld [vmem:[%s0 + $0x2b8] sm:$0xff]
  %v107 = vld [vmem:[%s0 + $0x2c0] sm:$0xff]
  %v108 = vld [vmem:[%s0 + $0x2c8] sm:$0xff]
  %v109 = vld [vmem:[%s0 + $0x2d0] sm:$0xff]
  %v110 = vld [vmem:[%s0 + $0x2d8] sm:$0xff]
  %v111 = vld [vmem:[%s0 + $0x2e0] sm:$0xff]
  %v112 = vld [vmem:[%s0 + $0x2e8] sm:$0xff]
  %v113 = vld [vmem:[%s0 + $0x2f0] sm:$0xff]
  %v114 = vld [vmem:[%s0 + $0x2f8] sm:$0xff]
  %v115 = vld [vmem:[%s0 + $0x300] sm:$0xff]
  %v116 = vld [vmem:[%s0 + $0x308] sm:$0xff]
  %v117 = vld [vmem:[%s0 + $0x310] sm:$0xff]
  %v118 = vld [vmem:[%s0 + $0x318] sm:$0xff]
  %v119 = vld [vmem:[%s0 + $0x320] sm:$0xff]
  %v120 = vld [vmem:[%s0 + $0x328] sm:$0xff]
  %v121 = vld [vmem:[%s0 + $0x330] sm:$0xff]
  %v122 = vld [vmem:[%s0 + $0x338] sm:$0xff]
  %v123 = vld [vmem:[%s0 + $0x340] sm:$0xff]
  %v124 = vld [vmem:[%s0 + $0x348] sm:$0xff]
  %v125 = vld [vmem:[%s0 + $0x350] sm:$0xff]
  %v126 = vld [vmem:[%s0 + $0x358] sm:$0xff]
  %v127 = vld [vmem:[%s0 + $0x360] sm:$0xff]
  %v128 = vld [vmem:[%s0 + $0x368] sm:$0xff]
  %v129 = vld [vmem:[%s0 + $0x370] sm:$0xff]
  %v130 = vld [vmem:[%s0 + $0x378] sm:$0xff]
  %v131 = vld [vmem:[%s0 + $0x380] sm:$0xff]
  %v132 = vld [vmem:[%s0 + $0x388] sm:$0xff]
  %v133 = vld [vmem:[%s0 + $0x390] sm:$0xff]
  %v134 = vld [vmem:[%s0 + $0x398] sm:$0xff]
  %v135 = vld [vmem:[%s0 + $0x3a0] sm:$0xff]
  %v136 = vld [vmem:[%s0 + $0x3a8] sm:$0xff]
  %v137 = vld [vmem:[%s0 + $0x3b0] sm:$0xff]
  %v138 = vld [vmem:[%s0 + $0x3b8] sm:$0xff]
  %v139 = vld [vmem:[%s0 + $0x3c0] sm:$0xff]
  %v140 = vld [vmem:[%s0 + $0x3c8] sm:$0xff]
  %v141 = vld [vmem:[%s0 + $0x3d0] sm:$0xff]
  %v142 = vld [vmem:[%s0 + $0x3d8] sm:$0xff]
  %v143 = vld [vmem:[%s0 + $0x3e0] sm:$0xff]
  %v144 = vld [vmem:[%s0 + $0x3e8] sm:$0xff]
  %v145 = vld [vmem:[%s0 + $0x3f0] sm:$0xff]
  %v146 = vld [vmem:[%s0 + $0x3f8] sm:$0xff]
  %v147 = vld [vmem:[%s0 + $0x400] sm:$0x33]
  %v148 = vld [vmem:[%s0 + $0x408] sm:$0x33]
  %v149 = vld [vmem:[%s0 + $0x410] sm:$0x33]
  %v150 = vld [vmem:[%s0 + $0x418] sm:$0x33]
  %v151 = vld [vmem:[%s0 + $0x420] sm:$0x33]
  %v152 = vld [vmem:[%s0 + $0x428] sm:$0x33]
  %v153 = vld [vmem:[%s0 + $0x430] sm:$0x33]
  %v154 = vld [vmem:[%s0 + $0x438] sm:$0x33]
  %v155 = vld [vmem:[%s0 + $0x440] sm:$0x33]
  %v156 = vld [vmem:[%s0 + $0x448] sm:$0x33]
  %v157 = vld [vmem:[%s0 + $0x450] sm:$0x33]
  %v158 = vld [vmem:[%s0 + $0x458] sm:$0x33]
  %v159 = vld [vmem:[%s0 + $0x460] sm:$0x33]
  %v160 = vld [vmem:[%s0 + $0x468] sm:$0x33]
  %v161 = vld [vmem:[%s0 + $0x470] sm:$0x33]
  %v162 = vld [vmem:[%s0 + $0x478] sm:$0x33]
  %v163 = vld [vmem:[%s0 + $0x480] sm:$0x33]
  %v164 = vld [vmem:[%s0 + $0x488] sm:$0x33]
  %v165 = vld [vmem:[%s0 + $0x490] sm:$0x33]
  %v166 = vld [vmem:[%s0 + $0x498] sm:$0x33]
  %v167 = vld [vmem:[%s0 + $0x4a0] sm:$0x33]
  %v168 = vld [vmem:[%s0 + $0x4a8] sm:$0x33]
  %v169 = vld [vmem:[%s0 + $0x4b0] sm:$0x33]
  %v170 = vld [vmem:[%s0 + $0x4b8] sm:$0x33]
  %v171 = vld [vmem:[%s0 + $0x4c0] sm:$0x33]
  %v172 = vld [vmem:[%s0 + $0x4c8] sm:$0x33]
  %v173 = vld [vmem:[%s0 + $0x4d0] sm:$0x33]
  %v174 = vld [vmem:[%s0 + $0x4d8] sm:$0x33]
  %v175 = vld [vmem:[%s0 + $0x4e0] sm:$0x33]
  %v176 = vld [vmem:[%s0 + $0x4e8] sm:$0x33]
  %v177 = vld [vmem:[%s0 + $0x4f0] sm:$0x33]
  %v178 = vld [vmem:[%s0 + $0x4f8] sm:$0x33]
  %v179 = vunpack.c.l.bf16 %v19
  %v180 = vunpack.c.h.bf16 %v19
  %v181 = vunpack.c.l.bf16 %v20
  %v182 = vunpack.c.h.bf16 %v20
  %v183 = vunpack.c.l.bf16 %v21
  %v184 = vunpack.c.h.bf16 %v21
  %v185 = vunpack.c.l.bf16 %v22
  %v186 = vunpack.c.h.bf16 %v22
  %v187 = vunpack.c.l.bf16 %v23
  %v188 = vunpack.c.h.bf16 %v23
  %v189 = vunpack.c.l.bf16 %v24
  %v190 = vunpack.c.h.bf16 %v24
  %v191 = vunpack.c.l.bf16 %v25
  %v192 = vunpack.c.h.bf16 %v25
  %v193 = vunpack.c.l.bf16 %v26
  %v194 = vunpack.c.h.bf16 %v26
  %v195 = vunpack.c.l.bf16 %v27
  %v196 = vunpack.c.h.bf16 %v27
  %v197 = vunpack.c.l.bf16 %v28
  %v198 = vunpack.c.h.bf16 %v28
  %v199 = vunpack.c.l.bf16 %v29
  %v200 = vunpack.c.h.bf16 %v29
  %v201 = vunpack.c.l.bf16 %v30
  %v202 = vunpack.c.h.bf16 %v30
  %v203 = vunpack.c.l.bf16 %v31
  %v204 = vunpack.c.h.bf16 %v31
  %v205 = vunpack.c.l.bf16 %v32
  %v206 = vunpack.c.h.bf16 %v32
  %v207 = vunpack.c.l.bf16 %v33
  %v208 = vunpack.c.h.bf16 %v33
  %v209 = vunpack.c.l.bf16 %v34
  %v210 = vunpack.c.h.bf16 %v34
  %v211 = vunpack.c.l.bf16 %v35
  %v212 = vunpack.c.h.bf16 %v35
  %v213 = vunpack.c.l.bf16 %v36
  %v214 = vunpack.c.h.bf16 %v36
  %v215 = vunpack.c.l.bf16 %v37
  %v216 = vunpack.c.h.bf16 %v37
  %v217 = vunpack.c.l.bf16 %v38
  %v218 = vunpack.c.h.bf16 %v38
  %v219 = vunpack.c.l.bf16 %v39
  %v220 = vunpack.c.h.bf16 %v39
  %v221 = vunpack.c.l.bf16 %v40
  %v222 = vunpack.c.h.bf16 %v40
  %v223 = vunpack.c.l.bf16 %v41
  %v224 = vunpack.c.h.bf16 %v41
  %v225 = vunpack.c.l.bf16 %v42
  %v226 = vunpack.c.h.bf16 %v42
  %v227 = vunpack.c.l.bf16 %v43
  %v228 = vunpack.c.h.bf16 %v43
  %v229 = vunpack.c.l.bf16 %v44
  %v230 = vunpack.c.h.bf16 %v44
  %v231 = vunpack.c.l.bf16 %v45
  %v232 = vunpack.c.h.bf16 %v45
  %v233 = vunpack.c.l.bf16 %v46
  %v234 = vunpack.c.h.bf16 %v46
  %v235 = vunpack.c.l.bf16 %v47
  %v236 = vunpack.c.h.bf16 %v47
  %v237 = vunpack.c.l.bf16 %v48
  %v238 = vunpack.c.h.bf16 %v48
  %v239 = vunpack.c.l.bf16 %v49
  %v240 = vunpack.c.h.bf16 %v49
  %v241 = vunpack.c.l.bf16 %v50
  %v242 = vunpack.c.h.bf16 %v50
  %v243 = vunpack.c.l.bf16 %v51
  %v244 = vunpack.c.h.bf16 %v51
  %v245 = vunpack.c.l.bf16 %v52
  %v246 = vunpack.c.h.bf16 %v52
  %v247 = vunpack.c.l.bf16 %v53
  %v248 = vunpack.c.h.bf16 %v53
  %v249 = vunpack.c.l.bf16 %v54
  %v250 = vunpack.c.h.bf16 %v54
  %v251 = vunpack.c.l.bf16 %v55
  %v252 = vunpack.c.h.bf16 %v55
  %v253 = vunpack.c.l.bf16 %v56
  %v254 = vunpack.c.h.bf16 %v56
  %v255 = vunpack.c.l.bf16 %v57
  %v256 = vunpack.c.h.bf16 %v57
  %v257 = vunpack.c.l.bf16 %v58
  %v258 = vunpack.c.h.bf16 %v58
  %v259 = vunpack.c.l.bf16 %v59
  %v260 = vunpack.c.h.bf16 %v59
  %v261 = vunpack.c.l.bf16 %v60
  %v262 = vunpack.c.h.bf16 %v60
  %v263 = vunpack.c.l.bf16 %v61
  %v264 = vunpack.c.h.bf16 %v61
  %v265 = vunpack.c.l.bf16 %v62
  %v266 = vunpack.c.h.bf16 %v62
  %v267 = vunpack.c.l.bf16 %v63
  %v268 = vunpack.c.h.bf16 %v63
  %v269 = vunpack.c.l.bf16 %v64
  %v270 = vunpack.c.h.bf16 %v64
  %v271 = vunpack.c.l.bf16 %v65
  %v272 = vunpack.c.h.bf16 %v65
  %v273 = vunpack.c.l.bf16 %v66
  %v274 = vunpack.c.h.bf16 %v66
  %v275 = vunpack.c.l.bf16 %v67
  %v276 = vunpack.c.h.bf16 %v67
  %v277 = vunpack.c.l.bf16 %v68
  %v278 = vunpack.c.h.bf16 %v68
  %v279 = vunpack.c.l.bf16 %v69
  %v280 = vunpack.c.h.bf16 %v69
  %v281 = vunpack.c.l.bf16 %v70
  %v282 = vunpack.c.h.bf16 %v70
  %v283 = vunpack.c.l.bf16 %v71
  %v284 = vunpack.c.h.bf16 %v71
  %v285 = vunpack.c.l.bf16 %v72
  %v286 = vunpack.c.h.bf16 %v72
  %v287 = vunpack.c.l.bf16 %v73
  %v288 = vunpack.c.h.bf16 %v73
  %v289 = vunpack.c.l.bf16 %v74
  %v290 = vunpack.c.h.bf16 %v74
  %v291 = vunpack.c.l.bf16 %v75
  %v292 = vunpack.c.h.bf16 %v75
  %v293 = vunpack.c.l.bf16 %v76
  %v294 = vunpack.c.h.bf16 %v76
  %v295 = vunpack.c.l.bf16 %v77
  %v296 = vunpack.c.h.bf16 %v77
  %v297 = vunpack.c.l.bf16 %v78
  %v298 = vunpack.c.h.bf16 %v78
  %v299 = vunpack.c.l.bf16 %v79
  %v300 = vunpack.c.h.bf16 %v79
  %v301 = vunpack.c.l.bf16 %v80
  %v302 = vunpack.c.h.bf16 %v80
  %v303 = vunpack.c.l.bf16 %v81
  %v304 = vunpack.c.h.bf16 %v81
  %v305 = vunpack.c.l.bf16 %v82
  %v306 = vunpack.c.h.bf16 %v82
  %v307 = vunpack.c.l.bf16 %v83
  %v308 = vunpack.c.h.bf16 %v83
  %v309 = vunpack.c.l.bf16 %v84
  %v310 = vunpack.c.h.bf16 %v84
  %v311 = vunpack.c.l.bf16 %v85
  %v312 = vunpack.c.h.bf16 %v85
  %v313 = vunpack.c.l.bf16 %v86
  %v314 = vunpack.c.h.bf16 %v86
  %v315 = vunpack.c.l.bf16 %v87
  %v316 = vunpack.c.h.bf16 %v87
  %v317 = vunpack.c.l.bf16 %v88
  %v318 = vunpack.c.h.bf16 %v88
  %v319 = vunpack.c.l.bf16 %v89
  %v320 = vunpack.c.h.bf16 %v89
  %v321 = vunpack.c.l.bf16 %v90
  %v322 = vunpack.c.h.bf16 %v90
  %v323 = vunpack.c.l.bf16 %v91
  %v324 = vunpack.c.h.bf16 %v91
  %v325 = vunpack.c.l.bf16 %v92
  %v326 = vunpack.c.h.bf16 %v92
  %v327 = vunpack.c.l.bf16 %v93
  %v328 = vunpack.c.h.bf16 %v93
  %v329 = vunpack.c.l.bf16 %v94
  %v330 = vunpack.c.h.bf16 %v94
  %v331 = vunpack.c.l.bf16 %v95
  %v332 = vunpack.c.h.bf16 %v95
  %v333 = vunpack.c.l.bf16 %v96
  %v334 = vunpack.c.h.bf16 %v96
  %v335 = vunpack.c.l.bf16 %v97
  %v336 = vunpack.c.h.bf16 %v97
  %v337 = vunpack.c.l.bf16 %v98
  %v338 = vunpack.c.h.bf16 %v98
  %v339 = vunpack.c.l.bf16 %v99
  %v340 = vunpack.c.h.bf16 %v99
  %v341 = vunpack.c.l.bf16 %v100
  %v342 = vunpack.c.h.bf16 %v100
  %v343 = vunpack.c.l.bf16 %v101
  %v344 = vunpack.c.h.bf16 %v101
  %v345 = vunpack.c.l.bf16 %v102
  %v346 = vunpack.c.h.bf16 %v102
  %v347 = vunpack.c.l.bf16 %v103
  %v348 = vunpack.c.h.bf16 %v103
  %v349 = vunpack.c.l.bf16 %v104
  %v350 = vunpack.c.h.bf16 %v104
  %v351 = vunpack.c.l.bf16 %v105
  %v352 = vunpack.c.h.bf16 %v105
  %v353 = vunpack.c.l.bf16 %v106
  %v354 = vunpack.c.h.bf16 %v106
  %v355 = vunpack.c.l.bf16 %v107
  %v356 = vunpack.c.h.bf16 %v107
  %v357 = vunpack.c.l.bf16 %v108
  %v358 = vunpack.c.h.bf16 %v108
  %v359 = vunpack.c.l.bf16 %v109
  %v360 = vunpack.c.h.bf16 %v109
  %v361 = vunpack.c.l.bf16 %v110
  %v362 = vunpack.c.h.bf16 %v110
  %v363 = vunpack.c.l.bf16 %v111
  %v364 = vunpack.c.h.bf16 %v111
  %v365 = vunpack.c.l.bf16 %v112
  %v366 = vunpack.c.h.bf16 %v112
  %v367 = vunpack.c.l.bf16 %v113
  %v368 = vunpack.c.h.bf16 %v113
  %v369 = vunpack.c.l.bf16 %v114
  %v370 = vunpack.c.h.bf16 %v114
  %v371 = vunpack.c.l.bf16 %v115
  %v372 = vunpack.c.h.bf16 %v115
  %v373 = vunpack.c.l.bf16 %v116
  %v374 = vunpack.c.h.bf16 %v116
  %v375 = vunpack.c.l.bf16 %v117
  %v376 = vunpack.c.h.bf16 %v117
  %v377 = vunpack.c.l.bf16 %v118
  %v378 = vunpack.c.h.bf16 %v118
  %v379 = vunpack.c.l.bf16 %v119
  %v380 = vunpack.c.h.bf16 %v119
  %v381 = vunpack.c.l.bf16 %v120
  %v382 = vunpack.c.h.bf16 %v120
  %v383 = vunpack.c.l.bf16 %v121
  %v384 = vunpack.c.h.bf16 %v121
  %v385 = vunpack.c.l.bf16 %v122
  %v386 = vunpack.c.h.bf16 %v122
  %v387 = vunpack.c.l.bf16 %v123
  %v388 = vunpack.c.h.bf16 %v123
  %v389 = vunpack.c.l.bf16 %v124
  %v390 = vunpack.c.h.bf16 %v124
  %v391 = vunpack.c.l.bf16 %v125
  %v392 = vunpack.c.h.bf16 %v125
  %v393 = vunpack.c.l.bf16 %v126
  %v394 = vunpack.c.h.bf16 %v126
  %v395 = vunpack.c.l.bf16 %v127
  %v396 = vunpack.c.h.bf16 %v127
  %v397 = vunpack.c.l.bf16 %v128
  %v398 = vunpack.c.h.bf16 %v128
  %v399 = vunpack.c.l.bf16 %v129
  %v400 = vunpack.c.h.bf16 %v129
  %v401 = vunpack.c.l.bf16 %v130
  %v402 = vunpack.c.h.bf16 %v130
  %v403 = vunpack.c.l.bf16 %v131
  %v404 = vunpack.c.h.bf16 %v131
  %v405 = vunpack.c.l.bf16 %v132
  %v406 = vunpack.c.h.bf16 %v132
  %v407 = vunpack.c.l.bf16 %v133
  %v408 = vunpack.c.h.bf16 %v133
  %v409 = vunpack.c.l.bf16 %v134
  %v410 = vunpack.c.h.bf16 %v134
  %v411 = vunpack.c.l.bf16 %v135
  %v412 = vunpack.c.h.bf16 %v135
  %v413 = vunpack.c.l.bf16 %v136
  %v414 = vunpack.c.h.bf16 %v136
  %v415 = vunpack.c.l.bf16 %v137
  %v416 = vunpack.c.h.bf16 %v137
  %v417 = vunpack.c.l.bf16 %v138
  %v418 = vunpack.c.h.bf16 %v138
  %v419 = vunpack.c.l.bf16 %v139
  %v420 = vunpack.c.h.bf16 %v139
  %v421 = vunpack.c.l.bf16 %v140
  %v422 = vunpack.c.h.bf16 %v140
  %v423 = vunpack.c.l.bf16 %v141
  %v424 = vunpack.c.h.bf16 %v141
  %v425 = vunpack.c.l.bf16 %v142
  %v426 = vunpack.c.h.bf16 %v142
  %v427 = vunpack.c.l.bf16 %v143
  %v428 = vunpack.c.h.bf16 %v143
  %v429 = vunpack.c.l.bf16 %v144
  %v430 = vunpack.c.h.bf16 %v144
  %v431 = vunpack.c.l.bf16 %v145
  %v432 = vunpack.c.h.bf16 %v145
  %v433 = vunpack.c.l.bf16 %v146
  %v434 = vunpack.c.h.bf16 %v146
  %v435 = vunpack.c.l.bf16 %v147
  %v436 = vunpack.c.h.bf16 %v147
  %v437 = vunpack.c.l.bf16 %v148
  %v438 = vunpack.c.h.bf16 %v148
  %v439 = vunpack.c.l.bf16 %v149
  %v440 = vunpack.c.h.bf16 %v149
  %v441 = vunpack.c.l.bf16 %v150
  %v442 = vunpack.c.h.bf16 %v150
  %v443 = vunpack.c.l.bf16 %v151
  %v444 = vunpack.c.h.bf16 %v151
  %v445 = vunpack.c.l.bf16 %v152
  %v446 = vunpack.c.h.bf16 %v152
  %v447 = vunpack.c.l.bf16 %v153
  %v448 = vunpack.c.h.bf16 %v153
  %v449 = vunpack.c.l.bf16 %v154
  %v450 = vunpack.c.h.bf16 %v154
  %v451 = vunpack.c.l.bf16 %v155
  %v452 = vunpack.c.h.bf16 %v155
  %v453 = vunpack.c.l.bf16 %v156
  %v454 = vunpack.c.h.bf16 %v156
  %v455 = vunpack.c.l.bf16 %v157
  %v456 = vunpack.c.h.bf16 %v157
  %v457 = vunpack.c.l.bf16 %v158
  %v458 = vunpack.c.h.bf16 %v158
  %v459 = vunpack.c.l.bf16 %v159
  %v460 = vunpack.c.h.bf16 %v159
  %v461 = vunpack.c.l.bf16 %v160
  %v462 = vunpack.c.h.bf16 %v160
  %v463 = vunpack.c.l.bf16 %v161
  %v464 = vunpack.c.h.bf16 %v161
  %v465 = vunpack.c.l.bf16 %v162
  %v466 = vunpack.c.h.bf16 %v162
  %v467 = vunpack.c.l.bf16 %v163
  %v468 = vunpack.c.h.bf16 %v163
  %v469 = vunpack.c.l.bf16 %v164
  %v470 = vunpack.c.h.bf16 %v164
  %v471 = vunpack.c.l.bf16 %v165
  %v472 = vunpack.c.h.bf16 %v165
  %v473 = vunpack.c.l.bf16 %v166
  %v474 = vunpack.c.h.bf16 %v166
  %v475 = vunpack.c.l.bf16 %v167
  %v476 = vunpack.c.h.bf16 %v167
  %v477 = vunpack.c.l.bf16 %v168
  %v478 = vunpack.c.h.bf16 %v168
  %v479 = vunpack.c.l.bf16 %v169
  %v480 = vunpack.c.h.bf16 %v169
  %v481 = vunpack.c.l.bf16 %v170
  %v482 = vunpack.c.h.bf16 %v170
  %v483 = vunpack.c.l.bf16 %v171
  %v484 = vunpack.c.h.bf16 %v171
  %v485 = vunpack.c.l.bf16 %v172
  %v486 = vunpack.c.h.bf16 %v172
  %v487 = vunpack.c.l.bf16 %v173
  %v488 = vunpack.c.h.bf16 %v173
  %v489 = vunpack.c.l.bf16 %v174
  %v490 = vunpack.c.h.bf16 %v174
  %v491 = vunpack.c.l.bf16 %v175
  %v492 = vunpack.c.h.bf16 %v175
  %v493 = vunpack.c.l.bf16 %v176
  %v494 = vunpack.c.h.bf16 %v176
  %v495 = vunpack.c.l.bf16 %v177
  %v496 = vunpack.c.h.bf16 %v177
  %v497 = vunpack.c.l.bf16 %v178
  %v498 = vunpack.c.h.bf16 %v178
  %vm499 = vcmask 293888
  %v501 = vsel %vm499, %v18, 0
  %vm503 = vcmask 1043456
  %v505 = vsel %vm503, %v435, 0
  %v508 = vsel %vm503, %v436, 0
  %v511 = vsel %vm503, %v437, 0
  %v514 = vsel %vm503, %v438, 0
  %v517 = vsel %vm503, %v439, 0
  %v520 = vsel %vm503, %v440, 0
  %v523 = vsel %vm503, %v441, 0
  %v526 = vsel %vm503, %v442, 0
  %v529 = vsel %vm503, %v443, 0
  %v532 = vsel %vm503, %v444, 0
  %v535 = vsel %vm503, %v445, 0
  %v538 = vsel %vm503, %v446, 0
  %v541 = vsel %vm503, %v447, 0
  %v544 = vsel %vm503, %v448, 0
  %v547 = vsel %vm503, %v449, 0
  %v550 = vsel %vm503, %v450, 0
  %v553 = vsel %vm503, %v451, 0
  %v556 = vsel %vm503, %v452, 0
  %v559 = vsel %vm503, %v453, 0
  %v562 = vsel %vm503, %v454, 0
  %v565 = vsel %vm503, %v455, 0
  %v568 = vsel %vm503, %v456, 0
  %v571 = vsel %vm503, %v457, 0
  %v574 = vsel %vm503, %v458, 0
  %v577 = vsel %vm503, %v459, 0
  %v580 = vsel %vm503, %v460, 0
  %v583 = vsel %vm503, %v461, 0
  %v586 = vsel %vm503, %v462, 0
  %v589 = vsel %vm503, %v463, 0
  %v592 = vsel %vm503, %v464, 0
  %v595 = vsel %vm503, %v465, 0
  %v598 = vsel %vm503, %v466, 0
  %v601 = vsel %vm503, %v467, 0
  %v604 = vsel %vm503, %v468, 0
  %v607 = vsel %vm503, %v469, 0
  %v610 = vsel %vm503, %v470, 0
  %v613 = vsel %vm503, %v471, 0
  %v616 = vsel %vm503, %v472, 0
  %v619 = vsel %vm503, %v473, 0
  %v622 = vsel %vm503, %v474, 0
  %v625 = vsel %vm503, %v475, 0
  %v628 = vsel %vm503, %v476, 0
  %v631 = vsel %vm503, %v477, 0
  %v634 = vsel %vm503, %v478, 0
  %v637 = vsel %vm503, %v479, 0
  %v640 = vsel %vm503, %v480, 0
  %v643 = vsel %vm503, %v481, 0
  %v646 = vsel %vm503, %v482, 0
  %v649 = vsel %vm503, %v483, 0
  %v652 = vsel %vm503, %v484, 0
  %v655 = vsel %vm503, %v485, 0
  %v658 = vsel %vm503, %v486, 0
  %v661 = vsel %vm503, %v487, 0
  %v664 = vsel %vm503, %v488, 0
  %v667 = vsel %vm503, %v489, 0
  %v670 = vsel %vm503, %v490, 0
  %v673 = vsel %vm503, %v491, 0
  %v676 = vsel %vm503, %v492, 0
  %v679 = vsel %vm503, %v493, 0
  %v682 = vsel %vm503, %v494, 0
  %v685 = vsel %vm503, %v495, 0
  %v688 = vsel %vm503, %v496, 0
  %v691 = vsel %vm503, %v497, 0
  %v694 = vsel %vm503, %v498, 0
  %696 = vmatprep.subr.mxu0 %v180
  %697 = vmatpush1.msra.mxu0 %v179
  %698 = vmatprep.subr.mxu0 %v244
  %699 = vmatpush1.msra.mxu0 %v243
  %700 = vmatprep.subr.mxu0 %v308
  %701 = vmatpush1.msra.mxu0 %v307
  %702 = vmatprep.subr.mxu0 %v372
  %703 = vmatpush1.msra.mxu0 %v371
  %704 = vmatprep.subr.mxu0 %v508
  %705 = vmatpush1.msra.mxu0 %v505
  %706 = vmatprep.subr.mxu0 0.0
  %707 = vmatpush1.msra.mxu0 0.0
  %708 = vmatprep.subr.mxu0 0.0
  %709 = vmatpush1.msra.mxu0 0.0
  %710 = vmatprep.subr.mxu0 0.0
  %711 = vmatpush1.msra.mxu0 0.0
  %712 = vmatprep.subr.mxu0 0.0
  %713 = vmatpush1.msra.mxu0 0.0
  %714 = vmatprep.subr.mxu0 0.0
  %715 = vmatpush1.msra.mxu0 0.0
  %716 = vmatprep.subr.mxu0 0.0
  %717 = vmatpush1.msra.mxu0 0.0
  %718 = vmatprep.subr.mxu0 0.0
  %719 = vmatpush1.msra.mxu0 0.0
  %720 = vmatprep.subr.mxu0 0.0
  %721 = vmatpush1.msra.mxu0 0.0
  %722 = vmatprep.subr.mxu0 0.0
  %723 = vmatpush1.msra.mxu0 0.0
  %724 = vmatprep.subr.mxu0 0.0
  %725 = vmatpush1.msra.mxu0 0.0
  %726 = vmatprep.subr.mxu0 0.0
  %727 = vmatpush1.msra.mxu0 0.0
  %728 = vmatprep.subr.mxu0 0.0
  %729 = vmatpush1.msra.mxu0 0.0
  %730 = vmatprep.subr.mxu0 0.0
  %731 = vmatpush1.msra.mxu0 0.0
  %732 = vmatprep.subr.mxu0 0.0
  %733 = vmatpush1.msra.mxu0 0.0
  %734 = vmatprep.subr.mxu0 0.0
  %735 = vmatpush1.msra.mxu0 0.0
  %736 = vmatprep.subr.mxu0 0.0
  %737 = vmatpush1.msra.mxu0 0.0
  %738 = vmatprep.subr.mxu0 0.0
  %739 = vmatpush1.msra.mxu0 0.0
  %740 = vmatprep.subr.mxu0 0.0
  %741 = vmatpush1.msra.mxu0 0.0
  %742 = vmatprep.subr.mxu0 0.0
  %743 = vmatpush1.msra.mxu0 0.0
  %744 = vmatprep.subr.mxu0 0.0
  %745 = vmatpush1.msra.mxu0 0.0
  %746 = vmatprep.subr.mxu0 0.0
  %747 = vmatpush1.msra.mxu0 0.0
  %748 = vmatprep.subr.mxu0 0.0
  %749 = vmatpush1.msra.mxu0 0.0
  %750 = vmatprep.subr.mxu0 0.0
  %751 = vmatpush1.msra.mxu0 0.0
  %752 = vmatprep.subr.mxu0 0.0
  %753 = vmatpush1.msra.mxu0 0.0
  %754 = vmatprep.subr.mxu0 0.0
  %755 = vmatpush1.msra.mxu0 0.0
  %756 = vmatprep.subr.mxu0 0.0
  %757 = vmatpush1.msra.mxu0 0.0
  %758 = vmatprep.subr.mxu0 0.0
  %759 = vmatpush1.msra.mxu0 0.0
  %760 = vmatprep.mubr.f32.mxu0 0.0
  %761 = vmatmul.mubr.f32.gmra.mrb[0].mxu0 %v501
  %v762 = vpop.f32.mrb[0].mxu0
  %v763 = vadd.f32 0.0, %v762
  %v764 = vpop.f32.mrb[0].mxu0
  %v765 = vadd.f32 0.0, %v764
  %766 = vdwg.mxu0
  %767 = vmatprep.subr.mxu0 %v182
  %768 = vmatpush1.msra.mxu0 %v181
  %769 = vmatprep.subr.mxu0 %v246
  %770 = vmatpush1.msra.mxu0 %v245
  %771 = vmatprep.subr.mxu0 %v310
  %772 = vmatpush1.msra.mxu0 %v309
  %773 = vmatprep.subr.mxu0 %v374
  %774 = vmatpush1.msra.mxu0 %v373
  %775 = vmatprep.subr.mxu0 %v514
  %776 = vmatpush1.msra.mxu0 %v511
  %777 = vmatprep.subr.mxu0 0.0
  %778 = vmatpush1.msra.mxu0 0.0
  %779 = vmatprep.subr.mxu0 0.0
  %780 = vmatpush1.msra.mxu0 0.0
  %781 = vmatprep.subr.mxu0 0.0
  %782 = vmatpush1.msra.mxu0 0.0
  %783 = vmatprep.subr.mxu0 0.0
  %784 = vmatpush1.msra.mxu0 0.0
  %785 = vmatprep.subr.mxu0 0.0
  %786 = vmatpush1.msra.mxu0 0.0
  %787 = vmatprep.subr.mxu0 0.0
  %788 = vmatpush1.msra.mxu0 0.0
  %789 = vmatprep.subr.mxu0 0.0
  %790 = vmatpush1.msra.mxu0 0.0
  %791 = vmatprep.subr.mxu0 0.0
  %792 = vmatpush1.msra.mxu0 0.0
  %793 = vmatprep.subr.mxu0 0.0
  %794 = vmatpush1.msra.mxu0 0.0
  %795 = vmatprep.subr.mxu0 0.0
  %796 = vmatpush1.msra.mxu0 0.0
  %797 = vmatprep.subr.mxu0 0.0
  %798 = vmatpush1.msra.mxu0 0.0
  %799 = vmatprep.subr.mxu0 0.0
  %800 = vmatpush1.msra.mxu0 0.0
  %801 = vmatprep.subr.mxu0 0.0
  %802 = vmatpush1.msra.mxu0 0.0
  %803 = vmatprep.subr.mxu0 0.0
  %804 = vmatpush1.msra.mxu0 0.0
  %805 = vmatprep.subr.mxu0 0.0
  %806 = vmatpush1.msra.mxu0 0.0
  %807 = vmatprep.subr.mxu0 0.0
  %808 = vmatpush1.msra.mxu0 0.0
  %809 = vmatprep.subr.mxu0 0.0
  %810 = vmatpush1.msra.mxu0 0.0
  %811 = vmatprep.subr.mxu0 0.0
  %812 = vmatpush1.msra.mxu0 0.0
  %813 = vmatprep.subr.mxu0 0.0
  %814 = vmatpush1.msra.mxu0 0.0
  %815 = vmatprep.subr.mxu0 0.0
  %816 = vmatpush1.msra.mxu0 0.0
  %817 = vmatprep.subr.mxu0 0.0
  %818 = vmatpush1.msra.mxu0 0.0
  %819 = vmatprep.subr.mxu0 0.0
  %820 = vmatpush1.msra.mxu0 0.0
  %821 = vmatprep.subr.mxu0 0.0
  %822 = vmatpush1.msra.mxu0 0.0
  %823 = vmatprep.subr.mxu0 0.0
  %824 = vmatpush1.msra.mxu0 0.0
  %825 = vmatprep.subr.mxu0 0.0
  %826 = vmatpush1.msra.mxu0 0.0
  %827 = vmatprep.subr.mxu0 0.0
  %828 = vmatpush1.msra.mxu0 0.0
  %829 = vmatprep.subr.mxu0 0.0
  %830 = vmatpush1.msra.mxu0 0.0
  %831 = vmatprep.mubr.f32.mxu0 0.0
  %832 = vmatmul.mubr.f32.gmra.mrb[0].mxu0 %v501
  %v833 = vpop.f32.mrb[0].mxu0
  %v834 = vadd.f32 0.0, %v833
  %v835 = vpop.f32.mrb[0].mxu0
  %v836 = vadd.f32 0.0, %v835
  %837 = vdwg.mxu0
  %838 = vmatprep.subr.mxu0 %v184
  %839 = vmatpush1.msra.mxu0 %v183
  %840 = vmatprep.subr.mxu0 %v248
  %841 = vmatpush1.msra.mxu0 %v247
  %842 = vmatprep.subr.mxu0 %v312
  %843 = vmatpush1.msra.mxu0 %v311
  %844 = vmatprep.subr.mxu0 %v376
  %845 = vmatpush1.msra.mxu0 %v375
  %846 = vmatprep.subr.mxu0 %v520
  %847 = vmatpush1.msra.mxu0 %v517
  %848 = vmatprep.subr.mxu0 0.0
  %849 = vmatpush1.msra.mxu0 0.0
  %850 = vmatprep.subr.mxu0 0.0
  %851 = vmatpush1.msra.mxu0 0.0
  %852 = vmatprep.subr.mxu0 0.0
  %853 = vmatpush1.msra.mxu0 0.0
  %854 = vmatprep.subr.mxu0 0.0
  %855 = vmatpush1.msra.mxu0 0.0
  %856 = vmatprep.subr.mxu0 0.0
  %857 = vmatpush1.msra.mxu0 0.0
  %858 = vmatprep.subr.mxu0 0.0
  %859 = vmatpush1.msra.mxu0 0.0
  %860 = vmatprep.subr.mxu0 0.0
  %861 = vmatpush1.msra.mxu0 0.0
  %862 = vmatprep.subr.mxu0 0.0
  %863 = vmatpush1.msra.mxu0 0.0
  %864 = vmatprep.subr.mxu0 0.0
  %865 = vmatpush1.msra.mxu0 0.0
  %866 = vmatprep.subr.mxu0 0.0
  %867 = vmatpush1.msra.mxu0 0.0
  %868 = vmatprep.subr.mxu0 0.0
  %869 = vmatpush1.msra.mxu0 0.0
  %870 = vmatprep.subr.mxu0 0.0
  %871 = vmatpush1.msra.mxu0 0.0
  %872 = vmatprep.subr.mxu0 0.0
  %873 = vmatpush1.msra.mxu0 0.0
  %874 = vmatprep.subr.mxu0 0.0
  %875 = vmatpush1.msra.mxu0 0.0
  %876 = vmatprep.subr.mxu0 0.0
  %877 = vmatpush1.msra.mxu0 0.0
  %878 = vmatprep.subr.mxu0 0.0
  %879 = vmatpush1.msra.mxu0 0.0
  %880 = vmatprep.subr.mxu0 0.0
  %881 = vmatpush1.msra.mxu0 0.0
  %882 = vmatprep.subr.mxu0 0.0
  %883 = vmatpush1.msra.mxu0 0.0
  %884 = vmatprep.subr.mxu0 0.0
  %885 = vmatpush1.msra.mxu0 0.0
  %886 = vmatprep.subr.mxu0 0.0
  %887 = vmatpush1.msra.mxu0 0.0
  %888 = vmatprep.subr.mxu0 0.0
  %889 = vmatpush1.msra.mxu0 0.0
  %890 = vmatprep.subr.mxu0 0.0
  %891 = vmatpush1.msra.mxu0 0.0
  %892 = vmatprep.subr.mxu0 0.0
  %893 = vmatpush1.msra.mxu0 0.0
  %894 = vmatprep.subr.mxu0 0.0
  %895 = vmatpush1.msra.mxu0 0.0
  %896 = vmatprep.subr.mxu0 0.0
  %897 = vmatpush1.msra.mxu0 0.0
  %898 = vmatprep.subr.mxu0 0.0
  %899 = vmatpush1.msra.mxu0 0.0
  %900 = vmatprep.subr.mxu0 0.0
  %901 = vmatpush1.msra.mxu0 0.0
  %902 = vmatprep.mubr.f32.mxu0 0.0
  %903 = vmatmul.mubr.f32.gmra.mrb[0].mxu0 %v501
  %v904 = vpop.f32.mrb[0].mxu0
  %v905 = vadd.f32 0.0, %v904
  %v906 = vpop.f32.mrb[0].mxu0
  %v907 = vadd.f32 0.0, %v906
  %908 = vdwg.mxu0
  %909 = vmatprep.subr.mxu0 %v186
  %910 = vmatpush1.msra.mxu0 %v185
  %911 = vmatprep.subr.mxu0 %v250
  %912 = vmatpush1.msra.mxu0 %v249
  %913 = vmatprep.subr.mxu0 %v314
  %914 = vmatpush1.msra.mxu0 %v313
  %915 = vmatprep.subr.mxu0 %v378
  %916 = vmatpush1.msra.mxu0 %v377
  %917 = vmatprep.subr.mxu0 %v526
  %918 = vmatpush1.msra.mxu0 %v523
  %919 = vmatprep.subr.mxu0 0.0
  %920 = vmatpush1.msra.mxu0 0.0
  %921 = vmatprep.subr.mxu0 0.0
  %922 = vmatpush1.msra.mxu0 0.0
  %923 = vmatprep.subr.mxu0 0.0
  %924 = vmatpush1.msra.mxu0 0.0
  %925 = vmatprep.subr.mxu0 0.0
  %926 = vmatpush1.msra.mxu0 0.0
  %927 = vmatprep.subr.mxu0 0.0
  %928 = vmatpush1.msra.mxu0 0.0
  %929 = vmatprep.subr.mxu0 0.0
  %930 = vmatpush1.msra.mxu0 0.0
  %931 = vmatprep.subr.mxu0 0.0
  %932 = vmatpush1.msra.mxu0 0.0
  %933 = vmatprep.subr.mxu0 0.0
  %934 = vmatpush1.msra.mxu0 0.0
  %935 = vmatprep.subr.mxu0 0.0
  %936 = vmatpush1.msra.mxu0 0.0
  %937 = vmatprep.subr.mxu0 0.0
  %938 = vmatpush1.msra.mxu0 0.0
  %939 = vmatprep.subr.mxu0 0.0
  %940 = vmatpush1.msra.mxu0 0.0
  %941 = vmatprep.subr.mxu0 0.0
  %942 = vmatpush1.msra.mxu0 0.0
  %943 = vmatprep.subr.mxu0 0.0
  %944 = vmatpush1.msra.mxu0 0.0
  %945 = vmatprep.subr.mxu0 0.0
  %946 = vmatpush1.msra.mxu0 0.0
  %947 = vmatprep.subr.mxu0 0.0
  %948 = vmatpush1.msra.mxu0 0.0
  %949 = vmatprep.subr.mxu0 0.0
  %950 = vmatpush1.msra.mxu0 0.0
  %951 = vmatprep.subr.mxu0 0.0
  %952 = vmatpush1.msra.mxu0 0.0
  %953 = vmatprep.subr.mxu0 0.0
  %954 = vmatpush1.msra.mxu0 0.0
  %955 = vmatprep.subr.mxu0 0.0
  %956 = vmatpush1.msra.mxu0 0.0
  %957 = vmatprep.subr.mxu0 0.0
  %958 = vmatpush1.msra.mxu0 0.0
  %959 = vmatprep.subr.mxu0 0.0
  %960 = vmatpush1.msra.mxu0 0.0
  %961 = vmatprep.subr.mxu0 0.0
  %962 = vmatpush1.msra.mxu0 0.0
  %963 = vmatprep.subr.mxu0 0.0
  %964 = vmatpush1.msra.mxu0 0.0
  %965 = vmatprep.subr.mxu0 0.0
  %966 = vmatpush1.msra.mxu0 0.0
  %967 = vmatprep.subr.mxu0 0.0
  %968 = vmatpush1.msra.mxu0 0.0
  %969 = vmatprep.subr.mxu0 0.0
  %970 = vmatpush1.msra.mxu0 0.0
  %971 = vmatprep.subr.mxu0 0.0
  %972 = vmatpush1.msra.mxu0 0.0
  %973 = vmatprep.mubr.f32.mxu0 0.0
  %974 = vmatmul.mubr.f32.gmra.mrb[0].mxu0 %v501
  %v975 = vpop.f32.mrb[0].mxu0
  %v976 = vadd.f32 0.0, %v975
  %v977 = vpop.f32.mrb[0].mxu0
  %v978 = vadd.f32 0.0, %v977
  %979 = vdwg.mxu0
  %980 = vmatprep.subr.mxu0 %v188
  %981 = vmatpush1.msra.mxu0 %v187
  %982 = vmatprep.subr.mxu0 %v252
  %983 = vmatpush1.msra.mxu0 %v251
  %984 = vmatprep.subr.mxu0 %v316
  %985 = vmatpush1.msra.mxu0 %v315
  %986 = vmatprep.subr.mxu0 %v380
  %987 = vmatpush1.msra.mxu0 %v379
  %988 = vmatprep.subr.mxu0 %v532
  %989 = vmatpush1.msra.mxu0 %v529
  %990 = vmatprep.subr.mxu0 0.0
  %991 = vmatpush1.msra.mxu0 0.0
  %992 = vmatprep.subr.mxu0 0.0
  %993 = vmatpush1.msra.mxu0 0.0
  %994 = vmatprep.subr.mxu0 0.0
  %995 = vmatpush1.msra.mxu0 0.0
  %996 = vmatprep.subr.mxu0 0.0
  %997 = vmatpush1.msra.mxu0 0.0
  %998 = vmatprep.subr.mxu0 0.0
  %999 = vmatpush1.msra.mxu0 0.0
  %1000 = vmatprep.subr.mxu0 0.0
  %1001 = vmatpush1.msra.mxu0 0.0
  %1002 = vmatprep.subr.mxu0 0.0
  %1003 = vmatpush1.msra.mxu0 0.0
  %1004 = vmatprep.subr.mxu0 0.0
  %1005 = vmatpush1.msra.mxu0 0.0
  %1006 = vmatprep.subr.mxu0 0.0
  %1007 = vmatpush1.msra.mxu0 0.0
  %1008 = vmatprep.subr.mxu0 0.0
  %1009 = vmatpush1.msra.mxu0 0.0
  %1010 = vmatprep.subr.mxu0 0.0
  %1011 = vmatpush1.msra.mxu0 0.0
  %1012 = vmatprep.subr.mxu0 0.0
  %1013 = vmatpush1.msra.mxu0 0.0
  %1014 = vmatprep.subr.mxu0 0.0
  %1015 = vmatpush1.msra.mxu0 0.0
  %1016 = vmatprep.subr.mxu0 0.0
  %1017 = vmatpush1.msra.mxu0 0.0
  %1018 = vmatprep.subr.mxu0 0.0
  %1019 = vmatpush1.msra.mxu0 0.0
  %1020 = vmatprep.subr.mxu0 0.0
  %1021 = vmatpush1.msra.mxu0 0.0
  %1022 = vmatprep.subr.mxu0 0.0
  %1023 = vmatpush1.msra.mxu0 0.0
  %1024 = vmatprep.subr.mxu0 0.0
  %1025 = vmatpush1.msra.mxu0 0.0
  %1026 = vmatprep.subr.mxu0 0.0
  %1027 = vmatpush1.msra.mxu0 0.0
  %1028 = vmatprep.subr.mxu0 0.0
  %1029 = vmatpush1.msra.mxu0 0.0
  %1030 = vmatprep.subr.mxu0 0.0
  %1031 = vmatpush1.msra.mxu0 0.0
  %1032 = vmatprep.subr.mxu0 0.0
  %1033 = vmatpush1.msra.mxu0 0.0
  %1034 = vmatprep.subr.mxu0 0.0
  %1035 = vmatpush1.msra.mxu0 0.0
  %1036 = vmatprep.subr.mxu0 0.0
  %1037 = vmatpush1.msra.mxu0 0.0
  %1038 = vmatprep.subr.mxu0 0.0
  %1039 = vmatpush1.msra.mxu0 0.0
  %1040 = vmatprep.subr.mxu0 0.0
  %1041 = vmatpush1.msra.mxu0 0.0
  %1042 = vmatprep.subr.mxu0 0.0
  %1043 = vmatpush1.msra.mxu0 0.0
  %1044 = vmatprep.mubr.f32.mxu0 0.0
  %1045 = vmatmul.mubr.f32.gmra.mrb[0].mxu0 %v501
  %v1046 = vpop.f32.mrb[0].mxu0
  %v1047 = vadd.f32 0.0, %v1046
  %v1048 = vpop.f32.mrb[0].mxu0
  %v1049 = vadd.f32 0.0, %v1048
  %1050 = vdwg.mxu0
  %1051 = vmatprep.subr.mxu0 %v190
  %1052 = vmatpush1.msra.mxu0 %v189
  %1053 = vmatprep.subr.mxu0 %v254
  %1054 = vmatpush1.msra.mxu0 %v253
  %1055 = vmatprep.subr.mxu0 %v318
  %1056 = vmatpush1.msra.mxu0 %v317
  %1057 = vmatprep.subr.mxu0 %v382
  %1058 = vmatpush1.msra.mxu0 %v381
  %1059 = vmatprep.subr.mxu0 %v538
  %1060 = vmatpush1.msra.mxu0 %v535
  %1061 = vmatprep.subr.mxu0 0.0
  %1062 = vmatpush1.msra.mxu0 0.0
  %1063 = vmatprep.subr.mxu0 0.0
  %1064 = vmatpush1.msra.mxu0 0.0
  %1065 = vmatprep.subr.mxu0 0.0
  %1066 = vmatpush1.msra.mxu0 0.0
  %1067 = vmatprep.subr.mxu0 0.0
  %1068 = vmatpush1.msra.mxu0 0.0
  %1069 = vmatprep.subr.mxu0 0.0
  %1070 = vmatpush1.msra.mxu0 0.0
  %1071 = vmatprep.subr.mxu0 0.0
  %1072 = vmatpush1.msra.mxu0 0.0
  %1073 = vmatprep.subr.mxu0 0.0
  %1074 = vmatpush1.msra.mxu0 0.0
  %1075 = vmatprep.subr.mxu0 0.0
  %1076 = vmatpush1.msra.mxu0 0.0
  %1077 = vmatprep.subr.mxu0 0.0
  %1078 = vmatpush1.msra.mxu0 0.0
  %1079 = vmatprep.subr.mxu0 0.0
  %1080 = vmatpush1.msra.mxu0 0.0
  %1081 = vmatprep.subr.mxu0 0.0
  %1082 = vmatpush1.msra.mxu0 0.0
  %1083 = vmatprep.subr.mxu0 0.0
  %1084 = vmatpush1.msra.mxu0 0.0
  %1085 = vmatprep.subr.mxu0 0.0
  %1086 = vmatpush1.msra.mxu0 0.0
  %1087 = vmatprep.subr.mxu0 0.0
  %1088 = vmatpush1.msra.mxu0 0.0
  %1089 = vmatprep.subr.mxu0 0.0
  %1090 = vmatpush1.msra.mxu0 0.0
  %1091 = vmatprep.subr.mxu0 0.0
  %1092 = vmatpush1.msra.mxu0 0.0
  %1093 = vmatprep.subr.mxu0 0.0
  %1094 = vmatpush1.msra.mxu0 0.0
  %1095 = vmatprep.subr.mxu0 0.0
  %1096 = vmatpush1.msra.mxu0 0.0
  %1097 = vmatprep.subr.mxu0 0.0
  %1098 = vmatpush1.msra.mxu0 0.0
  %1099 = vmatprep.subr.mxu0 0.0
  %1100 = vmatpush1.msra.mxu0 0.0
  %1101 = vmatprep.subr.mxu0 0.0
  %1102 = vmatpush1.msra.mxu0 0.0
  %1103 = vmatprep.subr.mxu0 0.0
  %1104 = vmatpush1.msra.mxu0 0.0
  %1105 = vmatprep.subr.mxu0 0.0
  %1106 = vmatpush1.msra.mxu0 0.0
  %1107 = vmatprep.subr.mxu0 0.0
  %1108 = vmatpush1.msra.mxu0 0.0
  %1109 = vmatprep.subr.mxu0 0.0
  %1110 = vmatpush1.msra.mxu0 0.0
  %1111 = vmatprep.subr.mxu0 0.0
  %1112 = vmatpush1.msra.mxu0 0.0
  %1113 = vmatprep.subr.mxu0 0.0
  %1114 = vmatpush1.msra.mxu0 0.0
  %1115 = vmatprep.mubr.f32.mxu0 0.0
  %1116 = vmatmul.mubr.f32.gmra.mrb[0].mxu0 %v501
  %v1117 = vpop.f32.mrb[0].mxu0
  %v1118 = vadd.f32 0.0, %v1117
  %v1119 = vpop.f32.mrb[0].mxu0
  %v1120 = vadd.f32 0.0, %v1119
  %1121 = vdwg.mxu0
  %1122 = vmatprep.subr.mxu0 %v192
  %1123 = vmatpush1.msra.mxu0 %v191
  %1124 = vmatprep.subr.mxu0 %v256
  %1125 = vmatpush1.msra.mxu0 %v255
  %1126 = vmatprep.subr.mxu0 %v320
  %1127 = vmatpush1.msra.mxu0 %v319
  %1128 = vmatprep.subr.mxu0 %v384
  %1129 = vmatpush1.msra.mxu0 %v383
  %1130 = vmatprep.subr.mxu0 %v544
  %1131 = vmatpush1.msra.mxu0 %v541
  %1132 = vmatprep.subr.mxu0 0.0
  %1133 = vmatpush1.msra.mxu0 0.0
  %1134 = vmatprep.subr.mxu0 0.0
  %1135 = vmatpush1.msra.mxu0 0.0
  %1136 = vmatprep.subr.mxu0 0.0
  %1137 = vmatpush1.msra.mxu0 0.0
  %1138 = vmatprep.subr.mxu0 0.0
  %1139 = vmatpush1.msra.mxu0 0.0
  %1140 = vmatprep.subr.mxu0 0.0
  %1141 = vmatpush1.msra.mxu0 0.0
  %1142 = vmatprep.subr.mxu0 0.0
  %1143 = vmatpush1.msra.mxu0 0.0
  %1144 = vmatprep.subr.mxu0 0.0
  %1145 = vmatpush1.msra.mxu0 0.0
  %1146 = vmatprep.subr.mxu0 0.0
  %1147 = vmatpush1.msra.mxu0 0.0
  %1148 = vmatprep.subr.mxu0 0.0
  %1149 = vmatpush1.msra.mxu0 0.0
  %1150 = vmatprep.subr.mxu0 0.0
  %1151 = vmatpush1.msra.mxu0 0.0
  %1152 = vmatprep.subr.mxu0 0.0
  %1153 = vmatpush1.msra.mxu0 0.0
  %1154 = vmatprep.subr.mxu0 0.0
  %1155 = vmatpush1.msra.mxu0 0.0
  %1156 = vmatprep.subr.mxu0 0.0
  %1157 = vmatpush1.msra.mxu0 0.0
  %1158 = vmatprep.subr.mxu0 0.0
  %1159 = vmatpush1.msra.mxu0 0.0
  %1160 = vmatprep.subr.mxu0 0.0
  %1161 = vmatpush1.msra.mxu0 0.0
  %1162 = vmatprep.subr.mxu0 0.0
  %1163 = vmatpush1.msra.mxu0 0.0
  %1164 = vmatprep.subr.mxu0 0.0
  %1165 = vmatpush1.msra.mxu0 0.0
  %1166 = vmatprep.subr.mxu0 0.0
  %1167 = vmatpush1.msra.mxu0 0.0
  %1168 = vmatprep.subr.mxu0 0.0
  %1169 = vmatpush1.msra.mxu0 0.0
  %1170 = vmatprep.subr.mxu0 0.0
  %1171 = vmatpush1.msra.mxu0 0.0
  %1172 = vmatprep.subr.mxu0 0.0
  %1173 = vmatpush1.msra.mxu0 0.0
  %1174 = vmatprep.subr.mxu0 0.0
  %1175 = vmatpush1.msra.mxu0 0.0
  %1176 = vmatprep.subr.mxu0 0.0
  %1177 = vmatpush1.msra.mxu0 0.0
  %1178 = vmatprep.subr.mxu0 0.0
  %1179 = vmatpush1.msra.mxu0 0.0
  %1180 = vmatprep.subr.mxu0 0.0
  %1181 = vmatpush1.msra.mxu0 0.0
  %1182 = vmatprep.subr.mxu0 0.0
  %1183 = vmatpush1.msra.mxu0 0.0
  %1184 = vmatprep.subr.mxu0 0.0
  %1185 = vmatpush1.msra.mxu0 0.0
  %1186 = vmatprep.mubr.f32.mxu0 0.0
  %1187 = vmatmul.mubr.f32.gmra.mrb[0].mxu0 %v501
  %v1188 = vpop.f32.mrb[0].mxu0
  %v1189 = vadd.f32 0.0, %v1188
  %v1190 = vpop.f32.mrb[0].mxu0
  %v1191 = vadd.f32 0.0, %v1190
  %1192 = vdwg.mxu0
  %1193 = vmatprep.subr.mxu0 %v194
  %1194 = vmatpush1.msra.mxu0 %v193
  %1195 = vmatprep.subr.mxu0 %v258
  %1196 = vmatpush1.msra.mxu0 %v257
  %1197 = vmatprep.subr.mxu0 %v322
  %1198 = vmatpush1.msra.mxu0 %v321
  %1199 = vmatprep.subr.mxu0 %v386
  %1200 = vmatpush1.msra.mxu0 %v385
  %1201 = vmatprep.subr.mxu0 %v550
  %1202 = vmatpush1.msra.mxu0 %v547
  %1203 = vmatprep.subr.mxu0 0.0
  %1204 = vmatpush1.msra.mxu0 0.0
  %1205 = vmatprep.subr.mxu0 0.0
  %1206 = vmatpush1.msra.mxu0 0.0
  %1207 = vmatprep.subr.mxu0 0.0
  %1208 = vmatpush1.msra.mxu0 0.0
  %1209 = vmatprep.subr.mxu0 0.0
  %1210 = vmatpush1.msra.mxu0 0.0
  %1211 = vmatprep.subr.mxu0 0.0
  %1212 = vmatpush1.msra.mxu0 0.0
  %1213 = vmatprep.subr.mxu0 0.0
  %1214 = vmatpush1.msra.mxu0 0.0
  %1215 = vmatprep.subr.mxu0 0.0
  %1216 = vmatpush1.msra.mxu0 0.0
  %1217 = vmatprep.subr.mxu0 0.0
  %1218 = vmatpush1.msra.mxu0 0.0
  %1219 = vmatprep.subr.mxu0 0.0
  %1220 = vmatpush1.msra.mxu0 0.0
  %1221 = vmatprep.subr.mxu0 0.0
  %1222 = vmatpush1.msra.mxu0 0.0
  %1223 = vmatprep.subr.mxu0 0.0
  %1224 = vmatpush1.msra.mxu0 0.0
  %1225 = vmatprep.subr.mxu0 0.0
  %1226 = vmatpush1.msra.mxu0 0.0
  %1227 = vmatprep.subr.mxu0 0.0
  %1228 = vmatpush1.msra.mxu0 0.0
  %1229 = vmatprep.subr.mxu0 0.0
  %1230 = vmatpush1.msra.mxu0 0.0
  %1231 = vmatprep.subr.mxu0 0.0
  %1232 = vmatpush1.msra.mxu0 0.0
  %1233 = vmatprep.subr.mxu0 0.0
  %1234 = vmatpush1.msra.mxu0 0.0
  %1235 = vmatprep.subr.mxu0 0.0
  %1236 = vmatpush1.msra.mxu0 0.0
  %1237 = vmatprep.subr.mxu0 0.0
  %1238 = vmatpush1.msra.mxu0 0.0
  %1239 = vmatprep.subr.mxu0 0.0
  %1240 = vmatpush1.msra.mxu0 0.0
  %1241 = vmatprep.subr.mxu0 0.0
  %1242 = vmatpush1.msra.mxu0 0.0
  %1243 = vmatprep.subr.mxu0 0.0
  %1244 = vmatpush1.msra.mxu0 0.0
  %1245 = vmatprep.subr.mxu0 0.0
  %1246 = vmatpush1.msra.mxu0 0.0
  %1247 = vmatprep.subr.mxu0 0.0
  %1248 = vmatpush1.msra.mxu0 0.0
  %1249 = vmatprep.subr.mxu0 0.0
  %1250 = vmatpush1.msra.mxu0 0.0
  %1251 = vmatprep.subr.mxu0 0.0
  %1252 = vmatpush1.msra.mxu0 0.0
  %1253 = vmatprep.subr.mxu0 0.0
  %1254 = vmatpush1.msra.mxu0 0.0
  %1255 = vmatprep.subr.mxu0 0.0
  %1256 = vmatpush1.msra.mxu0 0.0
  %1257 = vmatprep.mubr.f32.mxu0 0.0
  %1258 = vmatmul.mubr.f32.gmra.mrb[0].mxu0 %v501
  %v1259 = vpop.f32.mrb[0].mxu0
  %v1260 = vadd.f32 0.0, %v1259
  %v1261 = vpop.f32.mrb[0].mxu0
  %v1262 = vadd.f32 0.0, %v1261
  %1263 = vdwg.mxu0
  %1264 = vmatprep.subr.mxu0 %v196
  %1265 = vmatpush1.msra.mxu0 %v195
  %1266 = vmatprep.subr.mxu0 %v260
  %1267 = vmatpush1.msra.mxu0 %v259
  %1268 = vmatprep.subr.mxu0 %v324
  %1269 = vmatpush1.msra.mxu0 %v323
  %1270 = vmatprep.subr.mxu0 %v388
  %1271 = vmatpush1.msra.mxu0 %v387
  %1272 = vmatprep.subr.mxu0 %v556
  %1273 = vmatpush1.msra.mxu0 %v553
  %1274 = vmatprep.subr.mxu0 0.0
  %1275 = vmatpush1.msra.mxu0 0.0
  %1276 = vmatprep.subr.mxu0 0.0
  %1277 = vmatpush1.msra.mxu0 0.0
  %1278 = vmatprep.subr.mxu0 0.0
  %1279 = vmatpush1.msra.mxu0 0.0
  %1280 = vmatprep.subr.mxu0 0.0
  %1281 = vmatpush1.msra.mxu0 0.0
  %1282 = vmatprep.subr.mxu0 0.0
  %1283 = vmatpush1.msra.mxu0 0.0
  %1284 = vmatprep.subr.mxu0 0.0
  %1285 = vmatpush1.msra.mxu0 0.0
  %1286 = vmatprep.subr.mxu0 0.0
  %1287 = vmatpush1.msra.mxu0 0.0
  %1288 = vmatprep.subr.mxu0 0.0
  %1289 = vmatpush1.msra.mxu0 0.0
  %1290 = vmatprep.subr.mxu0 0.0
  %1291 = vmatpush1.msra.mxu0 0.0
  %1292 = vmatprep.subr.mxu0 0.0
  %1293 = vmatpush1.msra.mxu0 0.0
  %1294 = vmatprep.subr.mxu0 0.0
  %1295 = vmatpush1.msra.mxu0 0.0
  %1296 = vmatprep.subr.mxu0 0.0
  %1297 = vmatpush1.msra.mxu0 0.0
  %1298 = vmatprep.subr.mxu0 0.0
  %1299 = vmatpush1.msra.mxu0 0.0
  %1300 = vmatprep.subr.mxu0 0.0
  %1301 = vmatpush1.msra.mxu0 0.0
  %1302 = vmatprep.subr.mxu0 0.0
  %1303 = vmatpush1.msra.mxu0 0.0
  %1304 = vmatprep.subr.mxu0 0.0
  %1305 = vmatpush1.msra.mxu0 0.0
  %1306 = vmatprep.subr.mxu0 0.0
  %1307 = vmatpush1.msra.mxu0 0.0
  %1308 = vmatprep.subr.mxu0 0.0
  %1309 = vmatpush1.msra.mxu0 0.0
  %1310 = vmatprep.subr.mxu0 0.0
  %1311 = vmatpush1.msra.mxu0 0.0
  %1312 = vmatprep.subr.mxu0 0.0
  %1313 = vmatpush1.msra.mxu0 0.0
  %1314 = vmatprep.subr.mxu0 0.0
  %1315 = vmatpush1.msra.mxu0 0.0
  %1316 = vmatprep.subr.mxu0 0.0
  %1317 = vmatpush1.msra.mxu0 0.0
  %1318 = vmatprep.subr.mxu0 0.0
  %1319 = vmatpush1.msra.mxu0 0.0
  %1320 = vmatprep.subr.mxu0 0.0
  %1321 = vmatpush1.msra.mxu0 0.0
  %1322 = vmatprep.subr.mxu0 0.0
  %1323 = vmatpush1.msra.mxu0 0.0
  %1324 = vmatprep.subr.mxu0 0.0
  %1325 = vmatpush1.msra.mxu0 0.0
  %1326 = vmatprep.subr.mxu0 0.0
  %1327 = vmatpush1.msra.mxu0 0.0
  %1328 = vmatprep.mubr.f32.mxu0 0.0
  %1329 = vmatmul.mubr.f32.gmra.mrb[0].mxu0 %v501
  %v1330 = vpop.f32.mrb[0].mxu0
  %v1331 = vadd.f32 0.0, %v1330
  %v1332 = vpop.f32.mrb[0].mxu0
  %v1333 = vadd.f32 0.0, %v1332
  %1334 = vdwg.mxu0
  %1335 = vmatprep.subr.mxu0 %v198
  %1336 = vmatpush1.msra.mxu0 %v197
  %1337 = vmatprep.subr.mxu0 %v262
  %1338 = vmatpush1.msra.mxu0 %v261
  %1339 = vmatprep.subr.mxu0 %v326
  %1340 = vmatpush1.msra.mxu0 %v325
  %1341 = vmatprep.subr.mxu0 %v390
  %1342 = vmatpush1.msra.mxu0 %v389
  %1343 = vmatprep.subr.mxu0 %v562
  %1344 = vmatpush1.msra.mxu0 %v559
  %1345 = vmatprep.subr.mxu0 0.0
  %1346 = vmatpush1.msra.mxu0 0.0
  %1347 = vmatprep.subr.mxu0 0.0
  %1348 = vmatpush1.msra.mxu0 0.0
  %1349 = vmatprep.subr.mxu0 0.0
  %1350 = vmatpush1.msra.mxu0 0.0
  %1351 = vmatprep.subr.mxu0 0.0
  %1352 = vmatpush1.msra.mxu0 0.0
  %1353 = vmatprep.subr.mxu0 0.0
  %1354 = vmatpush1.msra.mxu0 0.0
  %1355 = vmatprep.subr.mxu0 0.0
  %1356 = vmatpush1.msra.mxu0 0.0
  %1357 = vmatprep.subr.mxu0 0.0
  %1358 = vmatpush1.msra.mxu0 0.0
  %1359 = vmatprep.subr.mxu0 0.0
  %1360 = vmatpush1.msra.mxu0 0.0
  %1361 = vmatprep.subr.mxu0 0.0
  %1362 = vmatpush1.msra.mxu0 0.0
  %1363 = vmatprep.subr.mxu0 0.0
  %1364 = vmatpush1.msra.mxu0 0.0
  %1365 = vmatprep.subr.mxu0 0.0
  %1366 = vmatpush1.msra.mxu0 0.0
  %1367 = vmatprep.subr.mxu0 0.0
  %1368 = vmatpush1.msra.mxu0 0.0
  %1369 = vmatprep.subr.mxu0 0.0
  %1370 = vmatpush1.msra.mxu0 0.0
  %1371 = vmatprep.subr.mxu0 0.0
  %1372 = vmatpush1.msra.mxu0 0.0
  %1373 = vmatprep.subr.mxu0 0.0
  %1374 = vmatpush1.msra.mxu0 0.0
  %1375 = vmatprep.subr.mxu0 0.0
  %1376 = vmatpush1.msra.mxu0 0.0
  %1377 = vmatprep.subr.mxu0 0.0
  %1378 = vmatpush1.msra.mxu0 0.0
  %1379 = vmatprep.subr.mxu0 0.0
  %1380 = vmatpush1.msra.mxu0 0.0
  %1381 = vmatprep.subr.mxu0 0.0
  %1382 = vmatpush1.msra.mxu0 0.0
  %1383 = vmatprep.subr.mxu0 0.0
  %1384 = vmatpush1.msra.mxu0 0.0
  %1385 = vmatprep.subr.mxu0 0.0
  %1386 = vmatpush1.msra.mxu0 0.0
  %1387 = vmatprep.subr.mxu0 0.0
  %1388 = vmatpush1.msra.mxu0 0.0
  %1389 = vmatprep.subr.mxu0 0.0
  %1390 = vmatpush1.msra.mxu0 0.0
  %1391 = vmatprep.subr.mxu0 0.0
  %1392 = vmatpush1.msra.mxu0 0.0
  %1393 = vmatprep.subr.mxu0 0.0
  %1394 = vmatpush1.msra.mxu0 0.0
  %1395 = vmatprep.subr.mxu0 0.0
  %1396 = vmatpush1.msra.mxu0 0.0
  %1397 = vmatprep.subr.mxu0 0.0
  %1398 = vmatpush1.msra.mxu0 0.0
  %1399 = vmatprep.mubr.f32.mxu0 0.0
  %1400 = vmatmul.mubr.f32.gmra.mrb[0].mxu0 %v501
  %v1401 = vpop.f32.mrb[0].mxu0
  %v1402 = vadd.f32 0.0, %v1401
  %v1403 = vpop.f32.mrb[0].mxu0
  %v1404 = vadd.f32 0.0, %v1403
  %1405 = vdwg.mxu0
  %1406 = vmatprep.subr.mxu0 %v200
  %1407 = vmatpush1.msra.mxu0 %v199
  %1408 = vmatprep.subr.mxu0 %v264
  %1409 = vmatpush1.msra.mxu0 %v263
  %1410 = vmatprep.subr.mxu0 %v328
  %1411 = vmatpush1.msra.mxu0 %v327
  %1412 = vmatprep.subr.mxu0 %v392
  %1413 = vmatpush1.msra.mxu0 %v391
  %1414 = vmatprep.subr.mxu0 %v568
  %1415 = vmatpush1.msra.mxu0 %v565
  %1416 = vmatprep.subr.mxu0 0.0
  %1417 = vmatpush1.msra.mxu0 0.0
  %1418 = vmatprep.subr.mxu0 0.0
  %1419 = vmatpush1.msra.mxu0 0.0
  %1420 = vmatprep.subr.mxu0 0.0
  %1421 = vmatpush1.msra.mxu0 0.0
  %1422 = vmatprep.subr.mxu0 0.0
  %1423 = vmatpush1.msra.mxu0 0.0
  %1424 = vmatprep.subr.mxu0 0.0
  %1425 = vmatpush1.msra.mxu0 0.0
  %1426 = vmatprep.subr.mxu0 0.0
  %1427 = vmatpush1.msra.mxu0 0.0
  %1428 = vmatprep.subr.mxu0 0.0
  %1429 = vmatpush1.msra.mxu0 0.0
  %1430 = vmatprep.subr.mxu0 0.0
  %1431 = vmatpush1.msra.mxu0 0.0
  %1432 = vmatprep.subr.mxu0 0.0
  %1433 = vmatpush1.msra.mxu0 0.0
  %1434 = vmatprep.subr.mxu0 0.0
  %1435 = vmatpush1.msra.mxu0 0.0
  %1436 = vmatprep.subr.mxu0 0.0
  %1437 = vmatpush1.msra.mxu0 0.0
  %1438 = vmatprep.subr.mxu0 0.0
  %1439 = vmatpush1.msra.mxu0 0.0
  %1440 = vmatprep.subr.mxu0 0.0
  %1441 = vmatpush1.msra.mxu0 0.0
  %1442 = vmatprep.subr.mxu0 0.0
  %1443 = vmatpush1.msra.mxu0 0.0
  %1444 = vmatprep.subr.mxu0 0.0
  %1445 = vmatpush1.msra.mxu0 0.0
  %1446 = vmatprep.subr.mxu0 0.0
  %1447 = vmatpush1.msra.mxu0 0.0
  %1448 = vmatprep.subr.mxu0 0.0
  %1449 = vmatpush1.msra.mxu0 0.0
  %1450 = vmatprep.subr.mxu0 0.0
  %1451 = vmatpush1.msra.mxu0 0.0
  %1452 = vmatprep.subr.mxu0 0.0
  %1453 = vmatpush1.msra.mxu0 0.0
  %1454 = vmatprep.subr.mxu0 0.0
  %1455 = vmatpush1.msra.mxu0 0.0
  %1456 = vmatprep.subr.mxu0 0.0
  %1457 = vmatpush1.msra.mxu0 0.0
  %1458 = vmatprep.subr.mxu0 0.0
  %1459 = vmatpush1.msra.mxu0 0.0
  %1460 = vmatprep.subr.mxu0 0.0
  %1461 = vmatpush1.msra.mxu0 0.0
  %1462 = vmatprep.subr.mxu0 0.0
  %1463 = vmatpush1.msra.mxu0 0.0
  %1464 = vmatprep.subr.mxu0 0.0
  %1465 = vmatpush1.msra.mxu0 0.0
  %1466 = vmatprep.subr.mxu0 0.0
  %1467 = vmatpush1.msra.mxu0 0.0
  %1468 = vmatprep.subr.mxu0 0.0
  %1469 = vmatpush1.msra.mxu0 0.0
  %1470 = vmatprep.mubr.f32.mxu0 0.0
  %1471 = vmatmul.mubr.f32.gmra.mrb[0].mxu0 %v501
  %v1472 = vpop.f32.mrb[0].mxu0
  %v1473 = vadd.f32 0.0, %v1472
  %v1474 = vpop.f32.mrb[0].mxu0
  %v1475 = vadd.f32 0.0, %v1474
  %1476 = vdwg.mxu0
  %1477 = vmatprep.subr.mxu0 %v202
  %1478 = vmatpush1.msra.mxu0 %v201
  %1479 = vmatprep.subr.mxu0 %v266
  %1480 = vmatpush1.msra.mxu0 %v265
  %1481 = vmatprep.subr.mxu0 %v330
  %1482 = vmatpush1.msra.mxu0 %v329
  %1483 = vmatprep.subr.mxu0 %v394
  %1484 = vmatpush1.msra.mxu0 %v393
  %1485 = vmatprep.subr.mxu0 %v574
  %1486 = vmatpush1.msra.mxu0 %v571
  %1487 = vmatprep.subr.mxu0 0.0
  %1488 = vmatpush1.msra.mxu0 0.0
  %1489 = vmatprep.subr.mxu0 0.0
  %1490 = vmatpush1.msra.mxu0 0.0
  %1491 = vmatprep.subr.mxu0 0.0
  %1492 = vmatpush1.msra.mxu0 0.0
  %1493 = vmatprep.subr.mxu0 0.0
  %1494 = vmatpush1.msra.mxu0 0.0
  %1495 = vmatprep.subr.mxu0 0.0
  %1496 = vmatpush1.msra.mxu0 0.0
  %1497 = vmatprep.subr.mxu0 0.0
  %1498 = vmatpush1.msra.mxu0 0.0
  %1499 = vmatprep.subr.mxu0 0.0
  %1500 = vmatpush1.msra.mxu0 0.0
  %1501 = vmatprep.subr.mxu0 0.0
  %1502 = vmatpush1.msra.mxu0 0.0
  %1503 = vmatprep.subr.mxu0 0.0
  %1504 = vmatpush1.msra.mxu0 0.0
  %1505 = vmatprep.subr.mxu0 0.0
  %1506 = vmatpush1.msra.mxu0 0.0
  %1507 = vmatprep.subr.mxu0 0.0
  %1508 = vmatpush1.msra.mxu0 0.0
  %1509 = vmatprep.subr.mxu0 0.0
  %1510 = vmatpush1.msra.mxu0 0.0
  %1511 = vmatprep.subr.mxu0 0.0
  %1512 = vmatpush1.msra.mxu0 0.0
  %1513 = vmatprep.subr.mxu0 0.0
  %1514 = vmatpush1.msra.mxu0 0.0
  %1515 = vmatprep.subr.mxu0 0.0
  %1516 = vmatpush1.msra.mxu0 0.0
  %1517 = vmatprep.subr.mxu0 0.0
  %1518 = vmatpush1.msra.mxu0 0.0
  %1519 = vmatprep.subr.mxu0 0.0
  %1520 = vmatpush1.msra.mxu0 0.0
  %1521 = vmatprep.subr.mxu0 0.0
  %1522 = vmatpush1.msra.mxu0 0.0
  %1523 = vmatprep.subr.mxu0 0.0
  %1524 = vmatpush1.msra.mxu0 0.0
  %1525 = vmatprep.subr.mxu0 0.0
  %1526 = vmatpush1.msra.mxu0 0.0
  %1527 = vmatprep.subr.mxu0 0.0
  %1528 = vmatpush1.msra.mxu0 0.0
  %1529 = vmatprep.subr.mxu0 0.0
  %1530 = vmatpush1.msra.mxu0 0.0
  %1531 = vmatprep.subr.mxu0 0.0
  %1532 = vmatpush1.msra.mxu0 0.0
  %1533 = vmatprep.subr.mxu0 0.0
  %1534 = vmatpush1.msra.mxu0 0.0
  %1535 = vmatprep.subr.mxu0 0.0
  %1536 = vmatpush1.msra.mxu0 0.0
  %1537 = vmatprep.subr.mxu0 0.0
  %1538 = vmatpush1.msra.mxu0 0.0
  %1539 = vmatprep.subr.mxu0 0.0
  %1540 = vmatpush1.msra.mxu0 0.0
  %1541 = vmatprep.mubr.f32.mxu0 0.0
  %1542 = vmatmul.mubr.f32.gmra.mrb[0].mxu0 %v501
  %v1543 = vpop.f32.mrb[0].mxu0
  %v1544 = vadd.f32 0.0, %v1543
  %v1545 = vpop.f32.mrb[0].mxu0
  %v1546 = vadd.f32 0.0, %v1545
  %1547 = vdwg.mxu0
  %1548 = vmatprep.subr.mxu0 %v204
  %1549 = vmatpush1.msra.mxu0 %v203
  %1550 = vmatprep.subr.mxu0 %v268
  %1551 = vmatpush1.msra.mxu0 %v267
  %1552 = vmatprep.subr.mxu0 %v332
  %1553 = vmatpush1.msra.mxu0 %v331
  %1554 = vmatprep.subr.mxu0 %v396
  %1555 = vmatpush1.msra.mxu0 %v395
  %1556 = vmatprep.subr.mxu0 %v580
  %1557 = vmatpush1.msra.mxu0 %v577
  %1558 = vmatprep.subr.mxu0 0.0
  %1559 = vmatpush1.msra.mxu0 0.0
  %1560 = vmatprep.subr.mxu0 0.0
  %1561 = vmatpush1.msra.mxu0 0.0
  %1562 = vmatprep.subr.mxu0 0.0
  %1563 = vmatpush1.msra.mxu0 0.0
  %1564 = vmatprep.subr.mxu0 0.0
  %1565 = vmatpush1.msra.mxu0 0.0
  %1566 = vmatprep.subr.mxu0 0.0
  %1567 = vmatpush1.msra.mxu0 0.0
  %1568 = vmatprep.subr.mxu0 0.0
  %1569 = vmatpush1.msra.mxu0 0.0
  %1570 = vmatprep.subr.mxu0 0.0
  %1571 = vmatpush1.msra.mxu0 0.0
  %1572 = vmatprep.subr.mxu0 0.0
  %1573 = vmatpush1.msra.mxu0 0.0
  %1574 = vmatprep.subr.mxu0 0.0
  %1575 = vmatpush1.msra.mxu0 0.0
  %1576 = vmatprep.subr.mxu0 0.0
  %1577 = vmatpush1.msra.mxu0 0.0
  %1578 = vmatprep.subr.mxu0 0.0
  %1579 = vmatpush1.msra.mxu0 0.0
  %1580 = vmatprep.subr.mxu0 0.0
  %1581 = vmatpush1.msra.mxu0 0.0
  %1582 = vmatprep.subr.mxu0 0.0
  %1583 = vmatpush1.msra.mxu0 0.0
  %1584 = vmatprep.subr.mxu0 0.0
  %1585 = vmatpush1.msra.mxu0 0.0
  %1586 = vmatprep.subr.mxu0 0.0
  %1587 = vmatpush1.msra.mxu0 0.0
  %1588 = vmatprep.subr.mxu0 0.0
  %1589 = vmatpush1.msra.mxu0 0.0
  %1590 = vmatprep.subr.mxu0 0.0
  %1591 = vmatpush1.msra.mxu0 0.0
  %1592 = vmatprep.subr.mxu0 0.0
  %1593 = vmatpush1.msra.mxu0 0.0
  %1594 = vmatprep.subr.mxu0 0.0
  %1595 = vmatpush1.msra.mxu0 0.0
  %1596 = vmatprep.subr.mxu0 0.0
  %1597 = vmatpush1.msra.mxu0 0.0
  %1598 = vmatprep.subr.mxu0 0.0
  %1599 = vmatpush1.msra.mxu0 0.0
  %1600 = vmatprep.subr.mxu0 0.0
  %1601 = vmatpush1.msra.mxu0 0.0
  %1602 = vmatprep.subr.mxu0 0.0
  %1603 = vmatpush1.msra.mxu0 0.0
  %1604 = vmatprep.subr.mxu0 0.0
  %1605 = vmatpush1.msra.mxu0 0.0
  %1606 = vmatprep.subr.mxu0 0.0
  %1607 = vmatpush1.msra.mxu0 0.0
  %1608 = vmatprep.subr.mxu0 0.0
  %1609 = vmatpush1.msra.mxu0 0.0
  %1610 = vmatprep.subr.mxu0 0.0
  %1611 = vmatpush1.msra.mxu0 0.0
  %1612 = vmatprep.mubr.f32.mxu0 0.0
  %1613 = vmatmul.mubr.f32.gmra.mrb[0].mxu0 %v501
  %v1614 = vpop.f32.mrb[0].mxu0
  %v1615 = vadd.f32 0.0, %v1614
  %v1616 = vpop.f32.mrb[0].mxu0
  %v1617 = vadd.f32 0.0, %v1616
  %1618 = vdwg.mxu0
  %1619 = vmatprep.subr.mxu0 %v206
  %1620 = vmatpush1.msra.mxu0 %v205
  %1621 = vmatprep.subr.mxu0 %v270
  %1622 = vmatpush1.msra.mxu0 %v269
  %1623 = vmatprep.subr.mxu0 %v334
  %1624 = vmatpush1.msra.mxu0 %v333
  %1625 = vmatprep.subr.mxu0 %v398
  %1626 = vmatpush1.msra.mxu0 %v397
  %1627 = vmatprep.subr.mxu0 %v586
  %1628 = vmatpush1.msra.mxu0 %v583
  %1629 = vmatprep.subr.mxu0 0.0
  %1630 = vmatpush1.msra.mxu0 0.0
  %1631 = vmatprep.subr.mxu0 0.0
  %1632 = vmatpush1.msra.mxu0 0.0
  %1633 = vmatprep.subr.mxu0 0.0
  %1634 = vmatpush1.msra.mxu0 0.0
  %1635 = vmatprep.subr.mxu0 0.0
  %1636 = vmatpush1.msra.mxu0 0.0
  %1637 = vmatprep.subr.mxu0 0.0
  %1638 = vmatpush1.msra.mxu0 0.0
  %1639 = vmatprep.subr.mxu0 0.0
  %1640 = vmatpush1.msra.mxu0 0.0
  %1641 = vmatprep.subr.mxu0 0.0
  %1642 = vmatpush1.msra.mxu0 0.0
  %1643 = vmatprep.subr.mxu0 0.0
  %1644 = vmatpush1.msra.mxu0 0.0
  %1645 = vmatprep.subr.mxu0 0.0
  %1646 = vmatpush1.msra.mxu0 0.0
  %1647 = vmatprep.subr.mxu0 0.0
  %1648 = vmatpush1.msra.mxu0 0.0
  %1649 = vmatprep.subr.mxu0 0.0
  %1650 = vmatpush1.msra.mxu0 0.0
  %1651 = vmatprep.subr.mxu0 0.0
  %1652 = vmatpush1.msra.mxu0 0.0
  %1653 = vmatprep.subr.mxu0 0.0
  %1654 = vmatpush1.msra.mxu0 0.0
  %1655 = vmatprep.subr.mxu0 0.0
  %1656 = vmatpush1.msra.mxu0 0.0
  %1657 = vmatprep.subr.mxu0 0.0
  %1658 = vmatpush1.msra.mxu0 0.0
  %1659 = vmatprep.subr.mxu0 0.0
  %1660 = vmatpush1.msra.mxu0 0.0
  %1661 = vmatprep.subr.mxu0 0.0
  %1662 = vmatpush1.msra.mxu0 0.0
  %1663 = vmatprep.subr.mxu0 0.0
  %1664 = vmatpush1.msra.mxu0 0.0
  %1665 = vmatprep.subr.mxu0 0.0
  %1666 = vmatpush1.msra.mxu0 0.0
  %1667 = vmatprep.subr.mxu0 0.0
  %1668 = vmatpush1.msra.mxu0 0.0
  %1669 = vmatprep.subr.mxu0 0.0
  %1670 = vmatpush1.msra.mxu0 0.0
  %1671 = vmatprep.subr.mxu0 0.0
  %1672 = vmatpush1.msra.mxu0 0.0
  %1673 = vmatprep.subr.mxu0 0.0
  %1674 = vmatpush1.msra.mxu0 0.0
  %1675 = vmatprep.subr.mxu0 0.0
  %1676 = vmatpush1.msra.mxu0 0.0
  %1677 = vmatprep.subr.mxu0 0.0
  %1678 = vmatpush1.msra.mxu0 0.0
  %1679 = vmatprep.subr.mxu0 0.0
  %1680 = vmatpush1.msra.mxu0 0.0
  %1681 = vmatprep.subr.mxu0 0.0
  %1682 = vmatpush1.msra.mxu0 0.0
  %1683 = vmatprep.mubr.f32.mxu0 0.0
  %1684 = vmatmul.mubr.f32.gmra.mrb[0].mxu0 %v501
  %v1685 = vpop.f32.mrb[0].mxu0
  %v1686 = vadd.f32 0.0, %v1685
  %v1687 = vpop.f32.mrb[0].mxu0
  %v1688 = vadd.f32 0.0, %v1687
  %1689 = vdwg.mxu0
  %1690 = vmatprep.subr.mxu0 %v208
  %1691 = vmatpush1.msra.mxu0 %v207
  %1692 = vmatprep.subr.mxu0 %v272
  %1693 = vmatpush1.msra.mxu0 %v271
  %1694 = vmatprep.subr.mxu0 %v336
  %1695 = vmatpush1.msra.mxu0 %v335
  %1696 = vmatprep.subr.mxu0 %v400
  %1697 = vmatpush1.msra.mxu0 %v399
  %1698 = vmatprep.subr.mxu0 %v592
  %1699 = vmatpush1.msra.mxu0 %v589
  %1700 = vmatprep.subr.mxu0 0.0
  %1701 = vmatpush1.msra.mxu0 0.0
  %1702 = vmatprep.subr.mxu0 0.0
  %1703 = vmatpush1.msra.mxu0 0.0
  %1704 = vmatprep.subr.mxu0 0.0
  %1705 = vmatpush1.msra.mxu0 0.0
  %1706 = vmatprep.subr.mxu0 0.0
  %1707 = vmatpush1.msra.mxu0 0.0
  %1708 = vmatprep.subr.mxu0 0.0
  %1709 = vmatpush1.msra.mxu0 0.0
  %1710 = vmatprep.subr.mxu0 0.0
  %1711 = vmatpush1.msra.mxu0 0.0
  %1712 = vmatprep.subr.mxu0 0.0
  %1713 = vmatpush1.msra.mxu0 0.0
  %1714 = vmatprep.subr.mxu0 0.0
  %1715 = vmatpush1.msra.mxu0 0.0
  %1716 = vmatprep.subr.mxu0 0.0
  %1717 = vmatpush1.msra.mxu0 0.0
  %1718 = vmatprep.subr.mxu0 0.0
  %1719 = vmatpush1.msra.mxu0 0.0
  %1720 = vmatprep.subr.mxu0 0.0
  %1721 = vmatpush1.msra.mxu0 0.0
  %1722 = vmatprep.subr.mxu0 0.0
  %1723 = vmatpush1.msra.mxu0 0.0
  %1724 = vmatprep.subr.mxu0 0.0
  %1725 = vmatpush1.msra.mxu0 0.0
  %1726 = vmatprep.subr.mxu0 0.0
  %1727 = vmatpush1.msra.mxu0 0.0
  %1728 = vmatprep.subr.mxu0 0.0
  %1729 = vmatpush1.msra.mxu0 0.0
  %1730 = vmatprep.subr.mxu0 0.0
  %1731 = vmatpush1.msra.mxu0 0.0
  %1732 = vmatprep.subr.mxu0 0.0
  %1733 = vmatpush1.msra.mxu0 0.0
  %1734 = vmatprep.subr.mxu0 0.0
  %1735 = vmatpush1.msra.mxu0 0.0
  %1736 = vmatprep.subr.mxu0 0.0
  %1737 = vmatpush1.msra.mxu0 0.0
  %1738 = vmatprep.subr.mxu0 0.0
  %1739 = vmatpush1.msra.mxu0 0.0
  %1740 = vmatprep.subr.mxu0 0.0
  %1741 = vmatpush1.msra.mxu0 0.0
  %1742 = vmatprep.subr.mxu0 0.0
  %1743 = vmatpush1.msra.mxu0 0.0
  %1744 = vmatprep.subr.mxu0 0.0
  %1745 = vmatpush1.msra.mxu0 0.0
  %1746 = vmatprep.subr.mxu0 0.0
  %1747 = vmatpush1.msra.mxu0 0.0
  %1748 = vmatprep.subr.mxu0 0.0
  %1749 = vmatpush1.msra.mxu0 0.0
  %1750 = vmatprep.subr.mxu0 0.0
  %1751 = vmatpush1.msra.mxu0 0.0
  %1752 = vmatprep.subr.mxu0 0.0
  %1753 = vmatpush1.msra.mxu0 0.0
  %1754 = vmatprep.mubr.f32.mxu0 0.0
  %1755 = vmatmul.mubr.f32.gmra.mrb[0].mxu0 %v501
  %v1756 = vpop.f32.mrb[0].mxu0
  %v1757 = vadd.f32 0.0, %v1756
  %v1758 = vpop.f32.mrb[0].mxu0
  %v1759 = vadd.f32 0.0, %v1758
  %1760 = vdwg.mxu0
  %1761 = vmatprep.subr.mxu0 %v210
  %1762 = vmatpush1.msra.mxu0 %v209
  %1763 = vmatprep.subr.mxu0 %v274
  %1764 = vmatpush1.msra.mxu0 %v273
  %1765 = vmatprep.subr.mxu0 %v338
  %1766 = vmatpush1.msra.mxu0 %v337
  %1767 = vmatprep.subr.mxu0 %v402
  %1768 = vmatpush1.msra.mxu0 %v401
  %1769 = vmatprep.subr.mxu0 %v598
  %1770 = vmatpush1.msra.mxu0 %v595
  %1771 = vmatprep.subr.mxu0 0.0
  %1772 = vmatpush1.msra.mxu0 0.0
  %1773 = vmatprep.subr.mxu0 0.0
  %1774 = vmatpush1.msra.mxu0 0.0
  %1775 = vmatprep.subr.mxu0 0.0
  %1776 = vmatpush1.msra.mxu0 0.0
  %1777 = vmatprep.subr.mxu0 0.0
  %1778 = vmatpush1.msra.mxu0 0.0
  %1779 = vmatprep.subr.mxu0 0.0
  %1780 = vmatpush1.msra.mxu0 0.0
  %1781 = vmatprep.subr.mxu0 0.0
  %1782 = vmatpush1.msra.mxu0 0.0
  %1783 = vmatprep.subr.mxu0 0.0
  %1784 = vmatpush1.msra.mxu0 0.0
  %1785 = vmatprep.subr.mxu0 0.0
  %1786 = vmatpush1.msra.mxu0 0.0
  %1787 = vmatprep.subr.mxu0 0.0
  %1788 = vmatpush1.msra.mxu0 0.0
  %1789 = vmatprep.subr.mxu0 0.0
  %1790 = vmatpush1.msra.mxu0 0.0
  %1791 = vmatprep.subr.mxu0 0.0
  %1792 = vmatpush1.msra.mxu0 0.0
  %1793 = vmatprep.subr.mxu0 0.0
  %1794 = vmatpush1.msra.mxu0 0.0
  %1795 = vmatprep.subr.mxu0 0.0
  %1796 = vmatpush1.msra.mxu0 0.0
  %1797 = vmatprep.subr.mxu0 0.0
  %1798 = vmatpush1.msra.mxu0 0.0
  %1799 = vmatprep.subr.mxu0 0.0
  %1800 = vmatpush1.msra.mxu0 0.0
  %1801 = vmatprep.subr.mxu0 0.0
  %1802 = vmatpush1.msra.mxu0 0.0
  %1803 = vmatprep.subr.mxu0 0.0
  %1804 = vmatpush1.msra.mxu0 0.0
  %1805 = vmatprep.subr.mxu0 0.0
  %1806 = vmatpush1.msra.mxu0 0.0
  %1807 = vmatprep.subr.mxu0 0.0
  %1808 = vmatpush1.msra.mxu0 0.0
  %1809 = vmatprep.subr.mxu0 0.0
  %1810 = vmatpush1.msra.mxu0 0.0
  %1811 = vmatprep.subr.mxu0 0.0
  %1812 = vmatpush1.msra.mxu0 0.0
  %1813 = vmatprep.subr.mxu0 0.0
  %1814 = vmatpush1.msra.mxu0 0.0
  %1815 = vmatprep.subr.mxu0 0.0
  %1816 = vmatpush1.msra.mxu0 0.0
  %1817 = vmatprep.subr.mxu0 0.0
  %1818 = vmatpush1.msra.mxu0 0.0
  %1819 = vmatprep.subr.mxu0 0.0
  %1820 = vmatpush1.msra.mxu0 0.0
  %1821 = vmatprep.subr.mxu0 0.0
  %1822 = vmatpush1.msra.mxu0 0.0
  %1823 = vmatprep.subr.mxu0 0.0
  %1824 = vmatpush1.msra.mxu0 0.0
  %1825 = vmatprep.mubr.f32.mxu0 0.0
  %1826 = vmatmul.mubr.f32.gmra.mrb[0].mxu0 %v501
  %v1827 = vpop.f32.mrb[0].mxu0
  %v1828 = vadd.f32 0.0, %v1827
  %v1829 = vpop.f32.mrb[0].mxu0
  %v1830 = vadd.f32 0.0, %v1829
  %1831 = vdwg.mxu0
  %1832 = vmatprep.subr.mxu0 %v212
  %1833 = vmatpush1.msra.mxu0 %v211
  %1834 = vmatprep.subr.mxu0 %v276
  %1835 = vmatpush1.msra.mxu0 %v275
  %1836 = vmatprep.subr.mxu0 %v340
  %1837 = vmatpush1.msra.mxu0 %v339
  %1838 = vmatprep.subr.mxu0 %v404
  %1839 = vmatpush1.msra.mxu0 %v403
  %1840 = vmatprep.subr.mxu0 %v604
  %1841 = vmatpush1.msra.mxu0 %v601
  %1842 = vmatprep.subr.mxu0 0.0
  %1843 = vmatpush1.msra.mxu0 0.0
  %1844 = vmatprep.subr.mxu0 0.0
  %1845 = vmatpush1.msra.mxu0 0.0
  %1846 = vmatprep.subr.mxu0 0.0
  %1847 = vmatpush1.msra.mxu0 0.0
  %1848 = vmatprep.subr.mxu0 0.0
  %1849 = vmatpush1.msra.mxu0 0.0
  %1850 = vmatprep.subr.mxu0 0.0
  %1851 = vmatpush1.msra.mxu0 0.0
  %1852 = vmatprep.subr.mxu0 0.0
  %1853 = vmatpush1.msra.mxu0 0.0
  %1854 = vmatprep.subr.mxu0 0.0
  %1855 = vmatpush1.msra.mxu0 0.0
  %1856 = vmatprep.subr.mxu0 0.0
  %1857 = vmatpush1.msra.mxu0 0.0
  %1858 = vmatprep.subr.mxu0 0.0
  %1859 = vmatpush1.msra.mxu0 0.0
  %1860 = vmatprep.subr.mxu0 0.0
  %1861 = vmatpush1.msra.mxu0 0.0
  %1862 = vmatprep.subr.mxu0 0.0
  %1863 = vmatpush1.msra.mxu0 0.0
  %1864 = vmatprep.subr.mxu0 0.0
  %1865 = vmatpush1.msra.mxu0 0.0
  %1866 = vmatprep.subr.mxu0 0.0
  %1867 = vmatpush1.msra.mxu0 0.0
  %1868 = vmatprep.subr.mxu0 0.0
  %1869 = vmatpush1.msra.mxu0 0.0
  %1870 = vmatprep.subr.mxu0 0.0
  %1871 = vmatpush1.msra.mxu0 0.0
  %1872 = vmatprep.subr.mxu0 0.0
  %1873 = vmatpush1.msra.mxu0 0.0
  %1874 = vmatprep.subr.mxu0 0.0
  %1875 = vmatpush1.msra.mxu0 0.0
  %1876 = vmatprep.subr.mxu0 0.0
  %1877 = vmatpush1.msra.mxu0 0.0
  %1878 = vmatprep.subr.mxu0 0.0
  %1879 = vmatpush1.msra.mxu0 0.0
  %1880 = vmatprep.subr.mxu0 0.0
  %1881 = vmatpush1.msra.mxu0 0.0
  %1882 = vmatprep.subr.mxu0 0.0
  %1883 = vmatpush1.msra.mxu0 0.0
  %1884 = vmatprep.subr.mxu0 0.0
  %1885 = vmatpush1.msra.mxu0 0.0
  %1886 = vmatprep.subr.mxu0 0.0
  %1887 = vmatpush1.msra.mxu0 0.0
  %1888 = vmatprep.subr.mxu0 0.0
  %1889 = vmatpush1.msra.mxu0 0.0
  %1890 = vmatprep.subr.mxu0 0.0
  %1891 = vmatpush1.msra.mxu0 0.0
  %1892 = vmatprep.subr.mxu0 0.0
  %1893 = vmatpush1.msra.mxu0 0.0
  %1894 = vmatprep.subr.mxu0 0.0
  %1895 = vmatpush1.msra.mxu0 0.0
  %1896 = vmatprep.mubr.f32.mxu0 0.0
  %1897 = vmatmul.mubr.f32.gmra.mrb[0].mxu0 %v501
  %v1898 = vpop.f32.mrb[0].mxu0
  %v1899 = vadd.f32 0.0, %v1898
  %v1900 = vpop.f32.mrb[0].mxu0
  %v1901 = vadd.f32 0.0, %v1900
  %1902 = vdwg.mxu0
  %1903 = vmatprep.subr.mxu0 %v214
  %1904 = vmatpush1.msra.mxu0 %v213
  %1905 = vmatprep.subr.mxu0 %v278
  %1906 = vmatpush1.msra.mxu0 %v277
  %1907 = vmatprep.subr.mxu0 %v342
  %1908 = vmatpush1.msra.mxu0 %v341
  %1909 = vmatprep.subr.mxu0 %v406
  %1910 = vmatpush1.msra.mxu0 %v405
  %1911 = vmatprep.subr.mxu0 %v610
  %1912 = vmatpush1.msra.mxu0 %v607
  %1913 = vmatprep.subr.mxu0 0.0
  %1914 = vmatpush1.msra.mxu0 0.0
  %1915 = vmatprep.subr.mxu0 0.0
  %1916 = vmatpush1.msra.mxu0 0.0
  %1917 = vmatprep.subr.mxu0 0.0
  %1918 = vmatpush1.msra.mxu0 0.0
  %1919 = vmatprep.subr.mxu0 0.0
  %1920 = vmatpush1.msra.mxu0 0.0
  %1921 = vmatprep.subr.mxu0 0.0
  %1922 = vmatpush1.msra.mxu0 0.0
  %1923 = vmatprep.subr.mxu0 0.0
  %1924 = vmatpush1.msra.mxu0 0.0
  %1925 = vmatprep.subr.mxu0 0.0
  %1926 = vmatpush1.msra.mxu0 0.0
  %1927 = vmatprep.subr.mxu0 0.0
  %1928 = vmatpush1.msra.mxu0 0.0
  %1929 = vmatprep.subr.mxu0 0.0
  %1930 = vmatpush1.msra.mxu0 0.0
  %1931 = vmatprep.subr.mxu0 0.0
  %1932 = vmatpush1.msra.mxu0 0.0
  %1933 = vmatprep.subr.mxu0 0.0
  %1934 = vmatpush1.msra.mxu0 0.0
  %1935 = vmatprep.subr.mxu0 0.0
  %1936 = vmatpush1.msra.mxu0 0.0
  %1937 = vmatprep.subr.mxu0 0.0
  %1938 = vmatpush1.msra.mxu0 0.0
  %1939 = vmatprep.subr.mxu0 0.0
  %1940 = vmatpush1.msra.mxu0 0.0
  %1941 = vmatprep.subr.mxu0 0.0
  %1942 = vmatpush1.msra.mxu0 0.0
  %1943 = vmatprep.subr.mxu0 0.0
  %1944 = vmatpush1.msra.mxu0 0.0
  %1945 = vmatprep.subr.mxu0 0.0
  %1946 = vmatpush1.msra.mxu0 0.0
  %1947 = vmatprep.subr.mxu0 0.0
  %1948 = vmatpush1.msra.mxu0 0.0
  %1949 = vmatprep.subr.mxu0 0.0
  %1950 = vmatpush1.msra.mxu0 0.0
  %1951 = vmatprep.subr.mxu0 0.0
  %1952 = vmatpush1.msra.mxu0 0.0
  %1953 = vmatprep.subr.mxu0 0.0
  %1954 = vmatpush1.msra.mxu0 0.0
  %1955 = vmatprep.subr.mxu0 0.0
  %1956 = vmatpush1.msra.mxu0 0.0
  %1957 = vmatprep.subr.mxu0 0.0
  %1958 = vmatpush1.msra.mxu0 0.0
  %1959 = vmatprep.subr.mxu0 0.0
  %1960 = vmatpush1.msra.mxu0 0.0
  %1961 = vmatprep.subr.mxu0 0.0
  %1962 = vmatpush1.msra.mxu0 0.0
  %1963 = vmatprep.subr.mxu0 0.0
  %1964 = vmatpush1.msra.mxu0 0.0
  %1965 = vmatprep.subr.mxu0 0.0
  %1966 = vmatpush1.msra.mxu0 0.0
  %1967 = vmatprep.mubr.f32.mxu0 0.0
  %1968 = vmatmul.mubr.f32.gmra.mrb[0].mxu0 %v501
  %v1969 = vpop.f32.mrb[0].mxu0
  %v1970 = vadd.f32 0.0, %v1969
  %v1971 = vpop.f32.mrb[0].mxu0
  %v1972 = vadd.f32 0.0, %v1971
  %1973 = vdwg.mxu0
  %1974 = vmatprep.subr.mxu0 %v216
  %1975 = vmatpush1.msra.mxu0 %v215
  %1976 = vmatprep.subr.mxu0 %v280
  %1977 = vmatpush1.msra.mxu0 %v279
  %1978 = vmatprep.subr.mxu0 %v344
  %1979 = vmatpush1.msra.mxu0 %v343
  %1980 = vmatprep.subr.mxu0 %v408
  %1981 = vmatpush1.msra.mxu0 %v407
  %1982 = vmatprep.subr.mxu0 %v616
  %1983 = vmatpush1.msra.mxu0 %v613
  %1984 = vmatprep.subr.mxu0 0.0
  %1985 = vmatpush1.msra.mxu0 0.0
  %1986 = vmatprep.subr.mxu0 0.0
  %1987 = vmatpush1.msra.mxu0 0.0
  %1988 = vmatprep.subr.mxu0 0.0
  %1989 = vmatpush1.msra.mxu0 0.0
  %1990 = vmatprep.subr.mxu0 0.0
  %1991 = vmatpush1.msra.mxu0 0.0
  %1992 = vmatprep.subr.mxu0 0.0
  %1993 = vmatpush1.msra.mxu0 0.0
  %1994 = vmatprep.subr.mxu0 0.0
  %1995 = vmatpush1.msra.mxu0 0.0
  %1996 = vmatprep.subr.mxu0 0.0
  %1997 = vmatpush1.msra.mxu0 0.0
  %1998 = vmatprep.subr.mxu0 0.0
  %1999 = vmatpush1.msra.mxu0 0.0
  %2000 = vmatprep.subr.mxu0 0.0
  %2001 = vmatpush1.msra.mxu0 0.0
  %2002 = vmatprep.subr.mxu0 0.0
  %2003 = vmatpush1.msra.mxu0 0.0
  %2004 = vmatprep.subr.mxu0 0.0
  %2005 = vmatpush1.msra.mxu0 0.0
  %2006 = vmatprep.subr.mxu0 0.0
  %2007 = vmatpush1.msra.mxu0 0.0
  %2008 = vmatprep.subr.mxu0 0.0
  %2009 = vmatpush1.msra.mxu0 0.0
  %2010 = vmatprep.subr.mxu0 0.0
  %2011 = vmatpush1.msra.mxu0 0.0
  %2012 = vmatprep.subr.mxu0 0.0
  %2013 = vmatpush1.msra.mxu0 0.0
  %2014 = vmatprep.subr.mxu0 0.0
  %2015 = vmatpush1.msra.mxu0 0.0
  %2016 = vmatprep.subr.mxu0 0.0
  %2017 = vmatpush1.msra.mxu0 0.0
  %2018 = vmatprep.subr.mxu0 0.0
  %2019 = vmatpush1.msra.mxu0 0.0
  %2020 = vmatprep.subr.mxu0 0.0
  %2021 = vmatpush1.msra.mxu0 0.0
  %2022 = vmatprep.subr.mxu0 0.0
  %2023 = vmatpush1.msra.mxu0 0.0
  %2024 = vmatprep.subr.mxu0 0.0
  %2025 = vmatpush1.msra.mxu0 0.0
  %2026 = vmatprep.subr.mxu0 0.0
  %2027 = vmatpush1.msra.mxu0 0.0
  %2028 = vmatprep.subr.mxu0 0.0
  %2029 = vmatpush1.msra.mxu0 0.0
  %2030 = vmatprep.subr.mxu0 0.0
  %2031 = vmatpush1.msra.mxu0 0.0
  %2032 = vmatprep.subr.mxu0 0.0
  %2033 = vmatpush1.msra.mxu0 0.0
  %2034 = vmatprep.subr.mxu0 0.0
  %2035 = vmatpush1.msra.mxu0 0.0
  %2036 = vmatprep.subr.mxu0 0.0
  %2037 = vmatpush1.msra.mxu0 0.0
  %2038 = vmatprep.mubr.f32.mxu0 0.0
  %2039 = vmatmul.mubr.f32.gmra.mrb[0].mxu0 %v501
  %v2040 = vpop.f32.mrb[0].mxu0
  %v2041 = vadd.f32 0.0, %v2040
  %v2042 = vpop.f32.mrb[0].mxu0
  %v2043 = vadd.f32 0.0, %v2042
  %2044 = vdwg.mxu0
  %2045 = vmatprep.subr.mxu0 %v218
  %2046 = vmatpush1.msra.mxu0 %v217
  %2047 = vmatprep.subr.mxu0 %v282
  %2048 = vmatpush1.msra.mxu0 %v281
  %2049 = vmatprep.subr.mxu0 %v346
  %2050 = vmatpush1.msra.mxu0 %v345
  %2051 = vmatprep.subr.mxu0 %v410
  %2052 = vmatpush1.msra.mxu0 %v409
  %2053 = vmatprep.subr.mxu0 %v622
  %2054 = vmatpush1.msra.mxu0 %v619
  %2055 = vmatprep.subr.mxu0 0.0
  %2056 = vmatpush1.msra.mxu0 0.0
  %2057 = vmatprep.subr.mxu0 0.0
  %2058 = vmatpush1.msra.mxu0 0.0
  %2059 = vmatprep.subr.mxu0 0.0
  %2060 = vmatpush1.msra.mxu0 0.0
  %2061 = vmatprep.subr.mxu0 0.0
  %2062 = vmatpush1.msra.mxu0 0.0
  %2063 = vmatprep.subr.mxu0 0.0
  %2064 = vmatpush1.msra.mxu0 0.0
  %2065 = vmatprep.subr.mxu0 0.0
  %2066 = vmatpush1.msra.mxu0 0.0
  %2067 = vmatprep.subr.mxu0 0.0
  %2068 = vmatpush1.msra.mxu0 0.0
  %2069 = vmatprep.subr.mxu0 0.0
  %2070 = vmatpush1.msra.mxu0 0.0
  %2071 = vmatprep.subr.mxu0 0.0
  %2072 = vmatpush1.msra.mxu0 0.0
  %2073 = vmatprep.subr.mxu0 0.0
  %2074 = vmatpush1.msra.mxu0 0.0
  %2075 = vmatprep.subr.mxu0 0.0
  %2076 = vmatpush1.msra.mxu0 0.0
  %2077 = vmatprep.subr.mxu0 0.0
  %2078 = vmatpush1.msra.mxu0 0.0
  %2079 = vmatprep.subr.mxu0 0.0
  %2080 = vmatpush1.msra.mxu0 0.0
  %2081 = vmatprep.subr.mxu0 0.0
  %2082 = vmatpush1.msra.mxu0 0.0
  %2083 = vmatprep.subr.mxu0 0.0
  %2084 = vmatpush1.msra.mxu0 0.0
  %2085 = vmatprep.subr.mxu0 0.0
  %2086 = vmatpush1.msra.mxu0 0.0
  %2087 = vmatprep.subr.mxu0 0.0
  %2088 = vmatpush1.msra.mxu0 0.0
  %2089 = vmatprep.subr.mxu0 0.0
  %2090 = vmatpush1.msra.mxu0 0.0
  %2091 = vmatprep.subr.mxu0 0.0
  %2092 = vmatpush1.msra.mxu0 0.0
  %2093 = vmatprep.subr.mxu0 0.0
  %2094 = vmatpush1.msra.mxu0 0.0
  %2095 = vmatprep.subr.mxu0 0.0
  %2096 = vmatpush1.msra.mxu0 0.0
  %2097 = vmatprep.subr.mxu0 0.0
  %2098 = vmatpush1.msra.mxu0 0.0
  %2099 = vmatprep.subr.mxu0 0.0
  %2100 = vmatpush1.msra.mxu0 0.0
  %2101 = vmatprep.subr.mxu0 0.0
  %2102 = vmatpush1.msra.mxu0 0.0
  %2103 = vmatprep.subr.mxu0 0.0
  %2104 = vmatpush1.msra.mxu0 0.0
  %2105 = vmatprep.subr.mxu0 0.0
  %2106 = vmatpush1.msra.mxu0 0.0
  %2107 = vmatprep.subr.mxu0 0.0
  %2108 = vmatpush1.msra.mxu0 0.0
  %2109 = vmatprep.mubr.f32.mxu0 0.0
  %2110 = vmatmul.mubr.f32.gmra.mrb[0].mxu0 %v501
  %v2111 = vpop.f32.mrb[0].mxu0
  %v2112 = vadd.f32 0.0, %v2111
  %v2113 = vpop.f32.mrb[0].mxu0
  %v2114 = vadd.f32 0.0, %v2113
  %2115 = vdwg.mxu0
  %2116 = vmatprep.subr.mxu0 %v220
  %2117 = vmatpush1.msra.mxu0 %v219
  %2118 = vmatprep.subr.mxu0 %v284
  %2119 = vmatpush1.msra.mxu0 %v283
  %2120 = vmatprep.subr.mxu0 %v348
  %2121 = vmatpush1.msra.mxu0 %v347
  %2122 = vmatprep.subr.mxu0 %v412
  %2123 = vmatpush1.msra.mxu0 %v411
  %2124 = vmatprep.subr.mxu0 %v628
  %2125 = vmatpush1.msra.mxu0 %v625
  %2126 = vmatprep.subr.mxu0 0.0
  %2127 = vmatpush1.msra.mxu0 0.0
  %2128 = vmatprep.subr.mxu0 0.0
  %2129 = vmatpush1.msra.mxu0 0.0
  %2130 = vmatprep.subr.mxu0 0.0
  %2131 = vmatpush1.msra.mxu0 0.0
  %2132 = vmatprep.subr.mxu0 0.0
  %2133 = vmatpush1.msra.mxu0 0.0
  %2134 = vmatprep.subr.mxu0 0.0
  %2135 = vmatpush1.msra.mxu0 0.0
  %2136 = vmatprep.subr.mxu0 0.0
  %2137 = vmatpush1.msra.mxu0 0.0
  %2138 = vmatprep.subr.mxu0 0.0
  %2139 = vmatpush1.msra.mxu0 0.0
  %2140 = vmatprep.subr.mxu0 0.0
  %2141 = vmatpush1.msra.mxu0 0.0
  %2142 = vmatprep.subr.mxu0 0.0
  %2143 = vmatpush1.msra.mxu0 0.0
  %2144 = vmatprep.subr.mxu0 0.0
  %2145 = vmatpush1.msra.mxu0 0.0
  %2146 = vmatprep.subr.mxu0 0.0
  %2147 = vmatpush1.msra.mxu0 0.0
  %2148 = vmatprep.subr.mxu0 0.0
  %2149 = vmatpush1.msra.mxu0 0.0
  %2150 = vmatprep.subr.mxu0 0.0
  %2151 = vmatpush1.msra.mxu0 0.0
  %2152 = vmatprep.subr.mxu0 0.0
  %2153 = vmatpush1.msra.mxu0 0.0
  %2154 = vmatprep.subr.mxu0 0.0
  %2155 = vmatpush1.msra.mxu0 0.0
  %2156 = vmatprep.subr.mxu0 0.0
  %2157 = vmatpush1.msra.mxu0 0.0
  %2158 = vmatprep.subr.mxu0 0.0
  %2159 = vmatpush1.msra.mxu0 0.0
  %2160 = vmatprep.subr.mxu0 0.0
  %2161 = vmatpush1.msra.mxu0 0.0
  %2162 = vmatprep.subr.mxu0 0.0
  %2163 = vmatpush1.msra.mxu0 0.0
  %2164 = vmatprep.subr.mxu0 0.0
  %2165 = vmatpush1.msra.mxu0 0.0
  %2166 = vmatprep.subr.mxu0 0.0
  %2167 = vmatpush1.msra.mxu0 0.0
  %2168 = vmatprep.subr.mxu0 0.0
  %2169 = vmatpush1.msra.mxu0 0.0
  %2170 = vmatprep.subr.mxu0 0.0
  %2171 = vmatpush1.msra.mxu0 0.0
  %2172 = vmatprep.subr.mxu0 0.0
  %2173 = vmatpush1.msra.mxu0 0.0
  %2174 = vmatprep.subr.mxu0 0.0
  %2175 = vmatpush1.msra.mxu0 0.0
  %2176 = vmatprep.subr.mxu0 0.0
  %2177 = vmatpush1.msra.mxu0 0.0
  %2178 = vmatprep.subr.mxu0 0.0
  %2179 = vmatpush1.msra.mxu0 0.0
  %2180 = vmatprep.mubr.f32.mxu0 0.0
  %2181 = vmatmul.mubr.f32.gmra.mrb[0].mxu0 %v501
  %v2182 = vpop.f32.mrb[0].mxu0
  %v2183 = vadd.f32 0.0, %v2182
  %v2184 = vpop.f32.mrb[0].mxu0
  %v2185 = vadd.f32 0.0, %v2184
  %2186 = vdwg.mxu0
  %2187 = vmatprep.subr.mxu0 %v222
  %2188 = vmatpush1.msra.mxu0 %v221
  %2189 = vmatprep.subr.mxu0 %v286
  %2190 = vmatpush1.msra.mxu0 %v285
  %2191 = vmatprep.subr.mxu0 %v350
  %2192 = vmatpush1.msra.mxu0 %v349
  %2193 = vmatprep.subr.mxu0 %v414
  %2194 = vmatpush1.msra.mxu0 %v413
  %2195 = vmatprep.subr.mxu0 %v634
  %2196 = vmatpush1.msra.mxu0 %v631
  %2197 = vmatprep.subr.mxu0 0.0
  %2198 = vmatpush1.msra.mxu0 0.0
  %2199 = vmatprep.subr.mxu0 0.0
  %2200 = vmatpush1.msra.mxu0 0.0
  %2201 = vmatprep.subr.mxu0 0.0
  %2202 = vmatpush1.msra.mxu0 0.0
  %2203 = vmatprep.subr.mxu0 0.0
  %2204 = vmatpush1.msra.mxu0 0.0
  %2205 = vmatprep.subr.mxu0 0.0
  %2206 = vmatpush1.msra.mxu0 0.0
  %2207 = vmatprep.subr.mxu0 0.0
  %2208 = vmatpush1.msra.mxu0 0.0
  %2209 = vmatprep.subr.mxu0 0.0
  %2210 = vmatpush1.msra.mxu0 0.0
  %2211 = vmatprep.subr.mxu0 0.0
  %2212 = vmatpush1.msra.mxu0 0.0
  %2213 = vmatprep.subr.mxu0 0.0
  %2214 = vmatpush1.msra.mxu0 0.0
  %2215 = vmatprep.subr.mxu0 0.0
  %2216 = vmatpush1.msra.mxu0 0.0
  %2217 = vmatprep.subr.mxu0 0.0
  %2218 = vmatpush1.msra.mxu0 0.0
  %2219 = vmatprep.subr.mxu0 0.0
  %2220 = vmatpush1.msra.mxu0 0.0
  %2221 = vmatprep.subr.mxu0 0.0
  %2222 = vmatpush1.msra.mxu0 0.0
  %2223 = vmatprep.subr.mxu0 0.0
  %2224 = vmatpush1.msra.mxu0 0.0
  %2225 = vmatprep.subr.mxu0 0.0
  %2226 = vmatpush1.msra.mxu0 0.0
  %2227 = vmatprep.subr.mxu0 0.0
  %2228 = vmatpush1.msra.mxu0 0.0
  %2229 = vmatprep.subr.mxu0 0.0
  %2230 = vmatpush1.msra.mxu0 0.0
  %2231 = vmatprep.subr.mxu0 0.0
  %2232 = vmatpush1.msra.mxu0 0.0
  %2233 = vmatprep.subr.mxu0 0.0
  %2234 = vmatpush1.msra.mxu0 0.0
  %2235 = vmatprep.subr.mxu0 0.0
  %2236 = vmatpush1.msra.mxu0 0.0
  %2237 = vmatprep.subr.mxu0 0.0
  %2238 = vmatpush1.msra.mxu0 0.0
  %2239 = vmatprep.subr.mxu0 0.0
  %2240 = vmatpush1.msra.mxu0 0.0
  %2241 = vmatprep.subr.mxu0 0.0
  %2242 = vmatpush1.msra.mxu0 0.0
  %2243 = vmatprep.subr.mxu0 0.0
  %2244 = vmatpush1.msra.mxu0 0.0
  %2245 = vmatprep.subr.mxu0 0.0
  %2246 = vmatpush1.msra.mxu0 0.0
  %2247 = vmatprep.subr.mxu0 0.0
  %2248 = vmatpush1.msra.mxu0 0.0
  %2249 = vmatprep.subr.mxu0 0.0
  %2250 = vmatpush1.msra.mxu0 0.0
  %2251 = vmatprep.mubr.f32.mxu0 0.0
  %2252 = vmatmul.mubr.f32.gmra.mrb[0].mxu0 %v501
  %v2253 = vpop.f32.mrb[0].mxu0
  %v2254 = vadd.f32 0.0, %v2253
  %v2255 = vpop.f32.mrb[0].mxu0
  %v2256 = vadd.f32 0.0, %v2255
  %2257 = vdwg.mxu0
  %2258 = vmatprep.subr.mxu0 %v224
  %2259 = vmatpush1.msra.mxu0 %v223
  %2260 = vmatprep.subr.mxu0 %v288
  %2261 = vmatpush1.msra.mxu0 %v287
  %2262 = vmatprep.subr.mxu0 %v352
  %2263 = vmatpush1.msra.mxu0 %v351
  %2264 = vmatprep.subr.mxu0 %v416
  %2265 = vmatpush1.msra.mxu0 %v415
  %2266 = vmatprep.subr.mxu0 %v640
  %2267 = vmatpush1.msra.mxu0 %v637
  %2268 = vmatprep.subr.mxu0 0.0
  %2269 = vmatpush1.msra.mxu0 0.0
  %2270 = vmatprep.subr.mxu0 0.0
  %2271 = vmatpush1.msra.mxu0 0.0
  %2272 = vmatprep.subr.mxu0 0.0
  %2273 = vmatpush1.msra.mxu0 0.0
  %2274 = vmatprep.subr.mxu0 0.0
  %2275 = vmatpush1.msra.mxu0 0.0
  %2276 = vmatprep.subr.mxu0 0.0
  %2277 = vmatpush1.msra.mxu0 0.0
  %2278 = vmatprep.subr.mxu0 0.0
  %2279 = vmatpush1.msra.mxu0 0.0
  %2280 = vmatprep.subr.mxu0 0.0
  %2281 = vmatpush1.msra.mxu0 0.0
  %2282 = vmatprep.subr.mxu0 0.0
  %2283 = vmatpush1.msra.mxu0 0.0
  %2284 = vmatprep.subr.mxu0 0.0
  %2285 = vmatpush1.msra.mxu0 0.0
  %2286 = vmatprep.subr.mxu0 0.0
  %2287 = vmatpush1.msra.mxu0 0.0
  %2288 = vmatprep.subr.mxu0 0.0
  %2289 = vmatpush1.msra.mxu0 0.0
  %2290 = vmatprep.subr.mxu0 0.0
  %2291 = vmatpush1.msra.mxu0 0.0
  %2292 = vmatprep.subr.mxu0 0.0
  %2293 = vmatpush1.msra.mxu0 0.0
  %2294 = vmatprep.subr.mxu0 0.0
  %2295 = vmatpush1.msra.mxu0 0.0
  %2296 = vmatprep.subr.mxu0 0.0
  %2297 = vmatpush1.msra.mxu0 0.0
  %2298 = vmatprep.subr.mxu0 0.0
  %2299 = vmatpush1.msra.mxu0 0.0
  %2300 = vmatprep.subr.mxu0 0.0
  %2301 = vmatpush1.msra.mxu0 0.0
  %2302 = vmatprep.subr.mxu0 0.0
  %2303 = vmatpush1.msra.mxu0 0.0
  %2304 = vmatprep.subr.mxu0 0.0
  %2305 = vmatpush1.msra.mxu0 0.0
  %2306 = vmatprep.subr.mxu0 0.0
  %2307 = vmatpush1.msra.mxu0 0.0
  %2308 = vmatprep.subr.mxu0 0.0
  %2309 = vmatpush1.msra.mxu0 0.0
  %2310 = vmatprep.subr.mxu0 0.0
  %2311 = vmatpush1.msra.mxu0 0.0
  %2312 = vmatprep.subr.mxu0 0.0
  %2313 = vmatpush1.msra.mxu0 0.0
  %2314 = vmatprep.subr.mxu0 0.0
  %2315 = vmatpush1.msra.mxu0 0.0
  %2316 = vmatprep.subr.mxu0 0.0
  %2317 = vmatpush1.msra.mxu0 0.0
  %2318 = vmatprep.subr.mxu0 0.0
  %2319 = vmatpush1.msra.mxu0 0.0
  %2320 = vmatprep.subr.mxu0 0.0
  %2321 = vmatpush1.msra.mxu0 0.0
  %2322 = vmatprep.mubr.f32.mxu0 0.0
  %2323 = vmatmul.mubr.f32.gmra.mrb[0].mxu0 %v501
  %v2324 = vpop.f32.mrb[0].mxu0
  %v2325 = vadd.f32 0.0, %v2324
  %v2326 = vpop.f32.mrb[0].mxu0
  %v2327 = vadd.f32 0.0, %v2326
  %2328 = vdwg.mxu0
  %2329 = vmatprep.subr.mxu0 %v226
  %2330 = vmatpush1.msra.mxu0 %v225
  %2331 = vmatprep.subr.mxu0 %v290
  %2332 = vmatpush1.msra.mxu0 %v289
  %2333 = vmatprep.subr.mxu0 %v354
  %2334 = vmatpush1.msra.mxu0 %v353
  %2335 = vmatprep.subr.mxu0 %v418
  %2336 = vmatpush1.msra.mxu0 %v417
  %2337 = vmatprep.subr.mxu0 %v646
  %2338 = vmatpush1.msra.mxu0 %v643
  %2339 = vmatprep.subr.mxu0 0.0
  %2340 = vmatpush1.msra.mxu0 0.0
  %2341 = vmatprep.subr.mxu0 0.0
  %2342 = vmatpush1.msra.mxu0 0.0
  %2343 = vmatprep.subr.mxu0 0.0
  %2344 = vmatpush1.msra.mxu0 0.0
  %2345 = vmatprep.subr.mxu0 0.0
  %2346 = vmatpush1.msra.mxu0 0.0
  %2347 = vmatprep.subr.mxu0 0.0
  %2348 = vmatpush1.msra.mxu0 0.0
  %2349 = vmatprep.subr.mxu0 0.0
  %2350 = vmatpush1.msra.mxu0 0.0
  %2351 = vmatprep.subr.mxu0 0.0
  %2352 = vmatpush1.msra.mxu0 0.0
  %2353 = vmatprep.subr.mxu0 0.0
  %2354 = vmatpush1.msra.mxu0 0.0
  %2355 = vmatprep.subr.mxu0 0.0
  %2356 = vmatpush1.msra.mxu0 0.0
  %2357 = vmatprep.subr.mxu0 0.0
  %2358 = vmatpush1.msra.mxu0 0.0
  %2359 = vmatprep.subr.mxu0 0.0
  %2360 = vmatpush1.msra.mxu0 0.0
  %2361 = vmatprep.subr.mxu0 0.0
  %2362 = vmatpush1.msra.mxu0 0.0
  %2363 = vmatprep.subr.mxu0 0.0
  %2364 = vmatpush1.msra.mxu0 0.0
  %2365 = vmatprep.subr.mxu0 0.0
  %2366 = vmatpush1.msra.mxu0 0.0
  %2367 = vmatprep.subr.mxu0 0.0
  %2368 = vmatpush1.msra.mxu0 0.0
  %2369 = vmatprep.subr.mxu0 0.0
  %2370 = vmatpush1.msra.mxu0 0.0
  %2371 = vmatprep.subr.mxu0 0.0
  %2372 = vmatpush1.msra.mxu0 0.0
  %2373 = vmatprep.subr.mxu0 0.0
  %2374 = vmatpush1.msra.mxu0 0.0
  %2375 = vmatprep.subr.mxu0 0.0
  %2376 = vmatpush1.msra.mxu0 0.0
  %2377 = vmatprep.subr.mxu0 0.0
  %2378 = vmatpush1.msra.mxu0 0.0
  %2379 = vmatprep.subr.mxu0 0.0
  %2380 = vmatpush1.msra.mxu0 0.0
  %2381 = vmatprep.subr.mxu0 0.0
  %2382 = vmatpush1.msra.mxu0 0.0
  %2383 = vmatprep.subr.mxu0 0.0
  %2384 = vmatpush1.msra.mxu0 0.0
  %2385 = vmatprep.subr.mxu0 0.0
  %2386 = vmatpush1.msra.mxu0 0.0
  %2387 = vmatprep.subr.mxu0 0.0
  %2388 = vmatpush1.msra.mxu0 0.0
  %2389 = vmatprep.subr.mxu0 0.0
  %2390 = vmatpush1.msra.mxu0 0.0
  %2391 = vmatprep.subr.mxu0 0.0
  %2392 = vmatpush1.msra.mxu0 0.0
  %2393 = vmatprep.mubr.f32.mxu0 0.0
  %2394 = vmatmul.mubr.f32.gmra.mrb[0].mxu0 %v501
  %v2395 = vpop.f32.mrb[0].mxu0
  %v2396 = vadd.f32 0.0, %v2395
  %v2397 = vpop.f32.mrb[0].mxu0
  %v2398 = vadd.f32 0.0, %v2397
  %2399 = vdwg.mxu0
  %2400 = vmatprep.subr.mxu0 %v228
  %2401 = vmatpush1.msra.mxu0 %v227
  %2402 = vmatprep.subr.mxu0 %v292
  %2403 = vmatpush1.msra.mxu0 %v291
  %2404 = vmatprep.subr.mxu0 %v356
  %2405 = vmatpush1.msra.mxu0 %v355
  %2406 = vmatprep.subr.mxu0 %v420
  %2407 = vmatpush1.msra.mxu0 %v419
  %2408 = vmatprep.subr.mxu0 %v652
  %2409 = vmatpush1.msra.mxu0 %v649
  %2410 = vmatprep.subr.mxu0 0.0
  %2411 = vmatpush1.msra.mxu0 0.0
  %2412 = vmatprep.subr.mxu0 0.0
  %2413 = vmatpush1.msra.mxu0 0.0
  %2414 = vmatprep.subr.mxu0 0.0
  %2415 = vmatpush1.msra.mxu0 0.0
  %2416 = vmatprep.subr.mxu0 0.0
  %2417 = vmatpush1.msra.mxu0 0.0
  %2418 = vmatprep.subr.mxu0 0.0
  %2419 = vmatpush1.msra.mxu0 0.0
  %2420 = vmatprep.subr.mxu0 0.0
  %2421 = vmatpush1.msra.mxu0 0.0
  %2422 = vmatprep.subr.mxu0 0.0
  %2423 = vmatpush1.msra.mxu0 0.0
  %2424 = vmatprep.subr.mxu0 0.0
  %2425 = vmatpush1.msra.mxu0 0.0
  %2426 = vmatprep.subr.mxu0 0.0
  %2427 = vmatpush1.msra.mxu0 0.0
  %2428 = vmatprep.subr.mxu0 0.0
  %2429 = vmatpush1.msra.mxu0 0.0
  %2430 = vmatprep.subr.mxu0 0.0
  %2431 = vmatpush1.msra.mxu0 0.0
  %2432 = vmatprep.subr.mxu0 0.0
  %2433 = vmatpush1.msra.mxu0 0.0
  %2434 = vmatprep.subr.mxu0 0.0
  %2435 = vmatpush1.msra.mxu0 0.0
  %2436 = vmatprep.subr.mxu0 0.0
  %2437 = vmatpush1.msra.mxu0 0.0
  %2438 = vmatprep.subr.mxu0 0.0
  %2439 = vmatpush1.msra.mxu0 0.0
  %2440 = vmatprep.subr.mxu0 0.0
  %2441 = vmatpush1.msra.mxu0 0.0
  %2442 = vmatprep.subr.mxu0 0.0
  %2443 = vmatpush1.msra.mxu0 0.0
  %2444 = vmatprep.subr.mxu0 0.0
  %2445 = vmatpush1.msra.mxu0 0.0
  %2446 = vmatprep.subr.mxu0 0.0
  %2447 = vmatpush1.msra.mxu0 0.0
  %2448 = vmatprep.subr.mxu0 0.0
  %2449 = vmatpush1.msra.mxu0 0.0
  %2450 = vmatprep.subr.mxu0 0.0
  %2451 = vmatpush1.msra.mxu0 0.0
  %2452 = vmatprep.subr.mxu0 0.0
  %2453 = vmatpush1.msra.mxu0 0.0
  %2454 = vmatprep.subr.mxu0 0.0
  %2455 = vmatpush1.msra.mxu0 0.0
  %2456 = vmatprep.subr.mxu0 0.0
  %2457 = vmatpush1.msra.mxu0 0.0
  %2458 = vmatprep.subr.mxu0 0.0
  %2459 = vmatpush1.msra.mxu0 0.0
  %2460 = vmatprep.subr.mxu0 0.0
  %2461 = vmatpush1.msra.mxu0 0.0
  %2462 = vmatprep.subr.mxu0 0.0
  %2463 = vmatpush1.msra.mxu0 0.0
  %2464 = vmatprep.mubr.f32.mxu0 0.0
  %2465 = vmatmul.mubr.f32.gmra.mrb[0].mxu0 %v501
  %v2466 = vpop.f32.mrb[0].mxu0
  %v2467 = vadd.f32 0.0, %v2466
  %v2468 = vpop.f32.mrb[0].mxu0
  %v2469 = vadd.f32 0.0, %v2468
  %2470 = vdwg.mxu0
  %2471 = vmatprep.subr.mxu0 %v230
  %2472 = vmatpush1.msra.mxu0 %v229
  %2473 = vmatprep.subr.mxu0 %v294
  %2474 = vmatpush1.msra.mxu0 %v293
  %2475 = vmatprep.subr.mxu0 %v358
  %2476 = vmatpush1.msra.mxu0 %v357
  %2477 = vmatprep.subr.mxu0 %v422
  %2478 = vmatpush1.msra.mxu0 %v421
  %2479 = vmatprep.subr.mxu0 %v658
  %2480 = vmatpush1.msra.mxu0 %v655
  %2481 = vmatprep.subr.mxu0 0.0
  %2482 = vmatpush1.msra.mxu0 0.0
  %2483 = vmatprep.subr.mxu0 0.0
  %2484 = vmatpush1.msra.mxu0 0.0
  %2485 = vmatprep.subr.mxu0 0.0
  %2486 = vmatpush1.msra.mxu0 0.0
  %2487 = vmatprep.subr.mxu0 0.0
  %2488 = vmatpush1.msra.mxu0 0.0
  %2489 = vmatprep.subr.mxu0 0.0
  %2490 = vmatpush1.msra.mxu0 0.0
  %2491 = vmatprep.subr.mxu0 0.0
  %2492 = vmatpush1.msra.mxu0 0.0
  %2493 = vmatprep.subr.mxu0 0.0
  %2494 = vmatpush1.msra.mxu0 0.0
  %2495 = vmatprep.subr.mxu0 0.0
  %2496 = vmatpush1.msra.mxu0 0.0
  %2497 = vmatprep.subr.mxu0 0.0
  %2498 = vmatpush1.msra.mxu0 0.0
  %2499 = vmatprep.subr.mxu0 0.0
  %2500 = vmatpush1.msra.mxu0 0.0
  %2501 = vmatprep.subr.mxu0 0.0
  %2502 = vmatpush1.msra.mxu0 0.0
  %2503 = vmatprep.subr.mxu0 0.0
  %2504 = vmatpush1.msra.mxu0 0.0
  %2505 = vmatprep.subr.mxu0 0.0
  %2506 = vmatpush1.msra.mxu0 0.0
  %2507 = vmatprep.subr.mxu0 0.0
  %2508 = vmatpush1.msra.mxu0 0.0
  %2509 = vmatprep.subr.mxu0 0.0
  %2510 = vmatpush1.msra.mxu0 0.0
  %2511 = vmatprep.subr.mxu0 0.0
  %2512 = vmatpush1.msra.mxu0 0.0
  %2513 = vmatprep.subr.mxu0 0.0
  %2514 = vmatpush1.msra.mxu0 0.0
  %2515 = vmatprep.subr.mxu0 0.0
  %2516 = vmatpush1.msra.mxu0 0.0
  %2517 = vmatprep.subr.mxu0 0.0
  %2518 = vmatpush1.msra.mxu0 0.0
  %2519 = vmatprep.subr.mxu0 0.0
  %2520 = vmatpush1.msra.mxu0 0.0
  %2521 = vmatprep.subr.mxu0 0.0
  %2522 = vmatpush1.msra.mxu0 0.0
  %2523 = vmatprep.subr.mxu0 0.0
  %2524 = vmatpush1.msra.mxu0 0.0
  %2525 = vmatprep.subr.mxu0 0.0
  %2526 = vmatpush1.msra.mxu0 0.0
  %2527 = vmatprep.subr.mxu0 0.0
  %2528 = vmatpush1.msra.mxu0 0.0
  %2529 = vmatprep.subr.mxu0 0.0
  %2530 = vmatpush1.msra.mxu0 0.0
  %2531 = vmatprep.subr.mxu0 0.0
  %2532 = vmatpush1.msra.mxu0 0.0
  %2533 = vmatprep.subr.mxu0 0.0
  %2534 = vmatpush1.msra.mxu0 0.0
  %2535 = vmatprep.mubr.f32.mxu0 0.0
  %2536 = vmatmul.mubr.f32.gmra.mrb[0].mxu0 %v501
  %v2537 = vpop.f32.mrb[0].mxu0
  %v2538 = vadd.f32 0.0, %v2537
  %v2539 = vpop.f32.mrb[0].mxu0
  %v2540 = vadd.f32 0.0, %v2539
  %2541 = vdwg.mxu0
  %2542 = vmatprep.subr.mxu0 %v232
  %2543 = vmatpush1.msra.mxu0 %v231
  %2544 = vmatprep.subr.mxu0 %v296
  %2545 = vmatpush1.msra.mxu0 %v295
  %2546 = vmatprep.subr.mxu0 %v360
  %2547 = vmatpush1.msra.mxu0 %v359
  %2548 = vmatprep.subr.mxu0 %v424
  %2549 = vmatpush1.msra.mxu0 %v423
  %2550 = vmatprep.subr.mxu0 %v664
  %2551 = vmatpush1.msra.mxu0 %v661
  %2552 = vmatprep.subr.mxu0 0.0
  %2553 = vmatpush1.msra.mxu0 0.0
  %2554 = vmatprep.subr.mxu0 0.0
  %2555 = vmatpush1.msra.mxu0 0.0
  %2556 = vmatprep.subr.mxu0 0.0
  %2557 = vmatpush1.msra.mxu0 0.0
  %2558 = vmatprep.subr.mxu0 0.0
  %2559 = vmatpush1.msra.mxu0 0.0
  %2560 = vmatprep.subr.mxu0 0.0
  %2561 = vmatpush1.msra.mxu0 0.0
  %2562 = vmatprep.subr.mxu0 0.0
  %2563 = vmatpush1.msra.mxu0 0.0
  %2564 = vmatprep.subr.mxu0 0.0
  %2565 = vmatpush1.msra.mxu0 0.0
  %2566 = vmatprep.subr.mxu0 0.0
  %2567 = vmatpush1.msra.mxu0 0.0
  %2568 = vmatprep.subr.mxu0 0.0
  %2569 = vmatpush1.msra.mxu0 0.0
  %2570 = vmatprep.subr.mxu0 0.0
  %2571 = vmatpush1.msra.mxu0 0.0
  %2572 = vmatprep.subr.mxu0 0.0
  %2573 = vmatpush1.msra.mxu0 0.0
  %2574 = vmatprep.subr.mxu0 0.0
  %2575 = vmatpush1.msra.mxu0 0.0
  %2576 = vmatprep.subr.mxu0 0.0
  %2577 = vmatpush1.msra.mxu0 0.0
  %2578 = vmatprep.subr.mxu0 0.0
  %2579 = vmatpush1.msra.mxu0 0.0
  %2580 = vmatprep.subr.mxu0 0.0
  %2581 = vmatpush1.msra.mxu0 0.0
  %2582 = vmatprep.subr.mxu0 0.0
  %2583 = vmatpush1.msra.mxu0 0.0
  %2584 = vmatprep.subr.mxu0 0.0
  %2585 = vmatpush1.msra.mxu0 0.0
  %2586 = vmatprep.subr.mxu0 0.0
  %2587 = vmatpush1.msra.mxu0 0.0
  %2588 = vmatprep.subr.mxu0 0.0
  %2589 = vmatpush1.msra.mxu0 0.0
  %2590 = vmatprep.subr.mxu0 0.0
  %2591 = vmatpush1.msra.mxu0 0.0
  %2592 = vmatprep.subr.mxu0 0.0
  %2593 = vmatpush1.msra.mxu0 0.0
  %2594 = vmatprep.subr.mxu0 0.0
  %2595 = vmatpush1.msra.mxu0 0.0
  %2596 = vmatprep.subr.mxu0 0.0
  %2597 = vmatpush1.msra.mxu0 0.0
  %2598 = vmatprep.subr.mxu0 0.0
  %2599 = vmatpush1.msra.mxu0 0.0
  %2600 = vmatprep.subr.mxu0 0.0
  %2601 = vmatpush1.msra.mxu0 0.0
  %2602 = vmatprep.subr.mxu0 0.0
  %2603 = vmatpush1.msra.mxu0 0.0
  %2604 = vmatprep.subr.mxu0 0.0
  %2605 = vmatpush1.msra.mxu0 0.0
  %2606 = vmatprep.mubr.f32.mxu0 0.0
  %2607 = vmatmul.mubr.f32.gmra.mrb[0].mxu0 %v501
  %v2608 = vpop.f32.mrb[0].mxu0
  %v2609 = vadd.f32 0.0, %v2608
  %v2610 = vpop.f32.mrb[0].mxu0
  %v2611 = vadd.f32 0.0, %v2610
  %2612 = vdwg.mxu0
  %2613 = vmatprep.subr.mxu0 %v234
  %2614 = vmatpush1.msra.mxu0 %v233
  %2615 = vmatprep.subr.mxu0 %v298
  %2616 = vmatpush1.msra.mxu0 %v297
  %2617 = vmatprep.subr.mxu0 %v362
  %2618 = vmatpush1.msra.mxu0 %v361
  %2619 = vmatprep.subr.mxu0 %v426
  %2620 = vmatpush1.msra.mxu0 %v425
  %2621 = vmatprep.subr.mxu0 %v670
  %2622 = vmatpush1.msra.mxu0 %v667
  %2623 = vmatprep.subr.mxu0 0.0
  %2624 = vmatpush1.msra.mxu0 0.0
  %2625 = vmatprep.subr.mxu0 0.0
  %2626 = vmatpush1.msra.mxu0 0.0
  %2627 = vmatprep.subr.mxu0 0.0
  %2628 = vmatpush1.msra.mxu0 0.0
  %2629 = vmatprep.subr.mxu0 0.0
  %2630 = vmatpush1.msra.mxu0 0.0
  %2631 = vmatprep.subr.mxu0 0.0
  %2632 = vmatpush1.msra.mxu0 0.0
  %2633 = vmatprep.subr.mxu0 0.0
  %2634 = vmatpush1.msra.mxu0 0.0
  %2635 = vmatprep.subr.mxu0 0.0
  %2636 = vmatpush1.msra.mxu0 0.0
  %2637 = vmatprep.subr.mxu0 0.0
  %2638 = vmatpush1.msra.mxu0 0.0
  %2639 = vmatprep.subr.mxu0 0.0
  %2640 = vmatpush1.msra.mxu0 0.0
  %2641 = vmatprep.subr.mxu0 0.0
  %2642 = vmatpush1.msra.mxu0 0.0
  %2643 = vmatprep.subr.mxu0 0.0
  %2644 = vmatpush1.msra.mxu0 0.0
  %2645 = vmatprep.subr.mxu0 0.0
  %2646 = vmatpush1.msra.mxu0 0.0
  %2647 = vmatprep.subr.mxu0 0.0
  %2648 = vmatpush1.msra.mxu0 0.0
  %2649 = vmatprep.subr.mxu0 0.0
  %2650 = vmatpush1.msra.mxu0 0.0
  %2651 = vmatprep.subr.mxu0 0.0
  %2652 = vmatpush1.msra.mxu0 0.0
  %2653 = vmatprep.subr.mxu0 0.0
  %2654 = vmatpush1.msra.mxu0 0.0
  %2655 = vmatprep.subr.mxu0 0.0
  %2656 = vmatpush1.msra.mxu0 0.0
  %2657 = vmatprep.subr.mxu0 0.0
  %2658 = vmatpush1.msra.mxu0 0.0
  %2659 = vmatprep.subr.mxu0 0.0
  %2660 = vmatpush1.msra.mxu0 0.0
  %2661 = vmatprep.subr.mxu0 0.0
  %2662 = vmatpush1.msra.mxu0 0.0
  %2663 = vmatprep.subr.mxu0 0.0
  %2664 = vmatpush1.msra.mxu0 0.0
  %2665 = vmatprep.subr.mxu0 0.0
  %2666 = vmatpush1.msra.mxu0 0.0
  %2667 = vmatprep.subr.mxu0 0.0
  %2668 = vmatpush1.msra.mxu0 0.0
  %2669 = vmatprep.subr.mxu0 0.0
  %2670 = vmatpush1.msra.mxu0 0.0
  %2671 = vmatprep.subr.mxu0 0.0
  %2672 = vmatpush1.msra.mxu0 0.0
  %2673 = vmatprep.subr.mxu0 0.0
  %2674 = vmatpush1.msra.mxu0 0.0
  %2675 = vmatprep.subr.mxu0 0.0
  %2676 = vmatpush1.msra.mxu0 0.0
  %2677 = vmatprep.mubr.f32.mxu0 0.0
  %2678 = vmatmul.mubr.f32.gmra.mrb[0].mxu0 %v501
  %v2679 = vpop.f32.mrb[0].mxu0
  %v2680 = vadd.f32 0.0, %v2679
  %v2681 = vpop.f32.mrb[0].mxu0
  %v2682 = vadd.f32 0.0, %v2681
  %2683 = vdwg.mxu0
  %2684 = vmatprep.subr.mxu0 %v236
  %2685 = vmatpush1.msra.mxu0 %v235
  %2686 = vmatprep.subr.mxu0 %v300
  %2687 = vmatpush1.msra.mxu0 %v299
  %2688 = vmatprep.subr.mxu0 %v364
  %2689 = vmatpush1.msra.mxu0 %v363
  %2690 = vmatprep.subr.mxu0 %v428
  %2691 = vmatpush1.msra.mxu0 %v427
  %2692 = vmatprep.subr.mxu0 %v676
  %2693 = vmatpush1.msra.mxu0 %v673
  %2694 = vmatprep.subr.mxu0 0.0
  %2695 = vmatpush1.msra.mxu0 0.0
  %2696 = vmatprep.subr.mxu0 0.0
  %2697 = vmatpush1.msra.mxu0 0.0
  %2698 = vmatprep.subr.mxu0 0.0
  %2699 = vmatpush1.msra.mxu0 0.0
  %2700 = vmatprep.subr.mxu0 0.0
  %2701 = vmatpush1.msra.mxu0 0.0
  %2702 = vmatprep.subr.mxu0 0.0
  %2703 = vmatpush1.msra.mxu0 0.0
  %2704 = vmatprep.subr.mxu0 0.0
  %2705 = vmatpush1.msra.mxu0 0.0
  %2706 = vmatprep.subr.mxu0 0.0
  %2707 = vmatpush1.msra.mxu0 0.0
  %2708 = vmatprep.subr.mxu0 0.0
  %2709 = vmatpush1.msra.mxu0 0.0
  %2710 = vmatprep.subr.mxu0 0.0
  %2711 = vmatpush1.msra.mxu0 0.0
  %2712 = vmatprep.subr.mxu0 0.0
  %2713 = vmatpush1.msra.mxu0 0.0
  %2714 = vmatprep.subr.mxu0 0.0
  %2715 = vmatpush1.msra.mxu0 0.0
  %2716 = vmatprep.subr.mxu0 0.0
  %2717 = vmatpush1.msra.mxu0 0.0
  %2718 = vmatprep.subr.mxu0 0.0
  %2719 = vmatpush1.msra.mxu0 0.0
  %2720 = vmatprep.subr.mxu0 0.0
  %2721 = vmatpush1.msra.mxu0 0.0
  %2722 = vmatprep.subr.mxu0 0.0
  %2723 = vmatpush1.msra.mxu0 0.0
  %2724 = vmatprep.subr.mxu0 0.0
  %2725 = vmatpush1.msra.mxu0 0.0
  %2726 = vmatprep.subr.mxu0 0.0
  %2727 = vmatpush1.msra.mxu0 0.0
  %2728 = vmatprep.subr.mxu0 0.0
  %2729 = vmatpush1.msra.mxu0 0.0
  %2730 = vmatprep.subr.mxu0 0.0
  %2731 = vmatpush1.msra.mxu0 0.0
  %2732 = vmatprep.subr.mxu0 0.0
  %2733 = vmatpush1.msra.mxu0 0.0
  %2734 = vmatprep.subr.mxu0 0.0
  %2735 = vmatpush1.msra.mxu0 0.0
  %2736 = vmatprep.subr.mxu0 0.0
  %2737 = vmatpush1.msra.mxu0 0.0
  %2738 = vmatprep.subr.mxu0 0.0
  %2739 = vmatpush1.msra.mxu0 0.0
  %2740 = vmatprep.subr.mxu0 0.0
  %2741 = vmatpush1.msra.mxu0 0.0
  %2742 = vmatprep.subr.mxu0 0.0
  %2743 = vmatpush1.msra.mxu0 0.0
  %2744 = vmatprep.subr.mxu0 0.0
  %2745 = vmatpush1.msra.mxu0 0.0
  %2746 = vmatprep.subr.mxu0 0.0
  %2747 = vmatpush1.msra.mxu0 0.0
  %2748 = vmatprep.mubr.f32.mxu0 0.0
  %2749 = vmatmul.mubr.f32.gmra.mrb[0].mxu0 %v501
  %v2750 = vpop.f32.mrb[0].mxu0
  %v2751 = vadd.f32 0.0, %v2750
  %v2752 = vpop.f32.mrb[0].mxu0
  %v2753 = vadd.f32 0.0, %v2752
  %2754 = vdwg.mxu0
  %2755 = vmatprep.subr.mxu0 %v238
  %2756 = vmatpush1.msra.mxu0 %v237
  %2757 = vmatprep.subr.mxu0 %v302
  %2758 = vmatpush1.msra.mxu0 %v301
  %2759 = vmatprep.subr.mxu0 %v366
  %2760 = vmatpush1.msra.mxu0 %v365
  %2761 = vmatprep.subr.mxu0 %v430
  %2762 = vmatpush1.msra.mxu0 %v429
  %2763 = vmatprep.subr.mxu0 %v682
  %2764 = vmatpush1.msra.mxu0 %v679
  %2765 = vmatprep.subr.mxu0 0.0
  %2766 = vmatpush1.msra.mxu0 0.0
  %2767 = vmatprep.subr.mxu0 0.0
  %2768 = vmatpush1.msra.mxu0 0.0
  %2769 = vmatprep.subr.mxu0 0.0
  %2770 = vmatpush1.msra.mxu0 0.0
  %2771 = vmatprep.subr.mxu0 0.0
  %2772 = vmatpush1.msra.mxu0 0.0
  %2773 = vmatprep.subr.mxu0 0.0
  %2774 = vmatpush1.msra.mxu0 0.0
  %2775 = vmatprep.subr.mxu0 0.0
  %2776 = vmatpush1.msra.mxu0 0.0
  %2777 = vmatprep.subr.mxu0 0.0
  %2778 = vmatpush1.msra.mxu0 0.0
  %2779 = vmatprep.subr.mxu0 0.0
  %2780 = vmatpush1.msra.mxu0 0.0
  %2781 = vmatprep.subr.mxu0 0.0
  %2782 = vmatpush1.msra.mxu0 0.0
  %2783 = vmatprep.subr.mxu0 0.0
  %2784 = vmatpush1.msra.mxu0 0.0
  %2785 = vmatprep.subr.mxu0 0.0
  %2786 = vmatpush1.msra.mxu0 0.0
  %2787 = vmatprep.subr.mxu0 0.0
  %2788 = vmatpush1.msra.mxu0 0.0
  %2789 = vmatprep.subr.mxu0 0.0
  %2790 = vmatpush1.msra.mxu0 0.0
  %2791 = vmatprep.subr.mxu0 0.0
  %2792 = vmatpush1.msra.mxu0 0.0
  %2793 = vmatprep.subr.mxu0 0.0
  %2794 = vmatpush1.msra.mxu0 0.0
  %2795 = vmatprep.subr.mxu0 0.0
  %2796 = vmatpush1.msra.mxu0 0.0
  %2797 = vmatprep.subr.mxu0 0.0
  %2798 = vmatpush1.msra.mxu0 0.0
  %2799 = vmatprep.subr.mxu0 0.0
  %2800 = vmatpush1.msra.mxu0 0.0
  %2801 = vmatprep.subr.mxu0 0.0
  %2802 = vmatpush1.msra.mxu0 0.0
  %2803 = vmatprep.subr.mxu0 0.0
  %2804 = vmatpush1.msra.mxu0 0.0
  %2805 = vmatprep.subr.mxu0 0.0
  %2806 = vmatpush1.msra.mxu0 0.0
  %2807 = vmatprep.subr.mxu0 0.0
  %2808 = vmatpush1.msra.mxu0 0.0
  %2809 = vmatprep.subr.mxu0 0.0
  %2810 = vmatpush1.msra.mxu0 0.0
  %2811 = vmatprep.subr.mxu0 0.0
  %2812 = vmatpush1.msra.mxu0 0.0
  %2813 = vmatprep.subr.mxu0 0.0
  %2814 = vmatpush1.msra.mxu0 0.0
  %2815 = vmatprep.subr.mxu0 0.0
  %2816 = vmatpush1.msra.mxu0 0.0
  %2817 = vmatprep.subr.mxu0 0.0
  %2818 = vmatpush1.msra.mxu0 0.0
  %2819 = vmatprep.mubr.f32.mxu0 0.0
  %2820 = vmatmul.mubr.f32.gmra.mrb[0].mxu0 %v501
  %v2821 = vpop.f32.mrb[0].mxu0
  %v2822 = vadd.f32 0.0, %v2821
  %v2823 = vpop.f32.mrb[0].mxu0
  %v2824 = vadd.f32 0.0, %v2823
  %2825 = vdwg.mxu0
  %2826 = vmatprep.subr.mxu0 %v240
  %2827 = vmatpush1.msra.mxu0 %v239
  %2828 = vmatprep.subr.mxu0 %v304
  %2829 = vmatpush1.msra.mxu0 %v303
  %2830 = vmatprep.subr.mxu0 %v368
  %2831 = vmatpush1.msra.mxu0 %v367
  %2832 = vmatprep.subr.mxu0 %v432
  %2833 = vmatpush1.msra.mxu0 %v431
  %2834 = vmatprep.subr.mxu0 %v688
  %2835 = vmatpush1.msra.mxu0 %v685
  %2836 = vmatprep.subr.mxu0 0.0
  %2837 = vmatpush1.msra.mxu0 0.0
  %2838 = vmatprep.subr.mxu0 0.0
  %2839 = vmatpush1.msra.mxu0 0.0
  %2840 = vmatprep.subr.mxu0 0.0
  %2841 = vmatpush1.msra.mxu0 0.0
  %2842 = vmatprep.subr.mxu0 0.0
  %2843 = vmatpush1.msra.mxu0 0.0
  %2844 = vmatprep.subr.mxu0 0.0
  %2845 = vmatpush1.msra.mxu0 0.0
  %2846 = vmatprep.subr.mxu0 0.0
  %2847 = vmatpush1.msra.mxu0 0.0
  %2848 = vmatprep.subr.mxu0 0.0
  %2849 = vmatpush1.msra.mxu0 0.0
  %2850 = vmatprep.subr.mxu0 0.0
  %2851 = vmatpush1.msra.mxu0 0.0
  %2852 = vmatprep.subr.mxu0 0.0
  %2853 = vmatpush1.msra.mxu0 0.0
  %2854 = vmatprep.subr.mxu0 0.0
  %2855 = vmatpush1.msra.mxu0 0.0
  %2856 = vmatprep.subr.mxu0 0.0
  %2857 = vmatpush1.msra.mxu0 0.0
  %2858 = vmatprep.subr.mxu0 0.0
  %2859 = vmatpush1.msra.mxu0 0.0
  %2860 = vmatprep.subr.mxu0 0.0
  %2861 = vmatpush1.msra.mxu0 0.0
  %2862 = vmatprep.subr.mxu0 0.0
  %2863 = vmatpush1.msra.mxu0 0.0
  %2864 = vmatprep.subr.mxu0 0.0
  %2865 = vmatpush1.msra.mxu0 0.0
  %2866 = vmatprep.subr.mxu0 0.0
  %2867 = vmatpush1.msra.mxu0 0.0
  %2868 = vmatprep.subr.mxu0 0.0
  %2869 = vmatpush1.msra.mxu0 0.0
  %2870 = vmatprep.subr.mxu0 0.0
  %2871 = vmatpush1.msra.mxu0 0.0
  %2872 = vmatprep.subr.mxu0 0.0
  %2873 = vmatpush1.msra.mxu0 0.0
  %2874 = vmatprep.subr.mxu0 0.0
  %2875 = vmatpush1.msra.mxu0 0.0
  %2876 = vmatprep.subr.mxu0 0.0
  %2877 = vmatpush1.msra.mxu0 0.0
  %2878 = vmatprep.subr.mxu0 0.0
  %2879 = vmatpush1.msra.mxu0 0.0
  %2880 = vmatprep.subr.mxu0 0.0
  %2881 = vmatpush1.msra.mxu0 0.0
  %2882 = vmatprep.subr.mxu0 0.0
  %2883 = vmatpush1.msra.mxu0 0.0
  %2884 = vmatprep.subr.mxu0 0.0
  %2885 = vmatpush1.msra.mxu0 0.0
  %2886 = vmatprep.subr.mxu0 0.0
  %2887 = vmatpush1.msra.mxu0 0.0
  %2888 = vmatprep.subr.mxu0 0.0
  %2889 = vmatpush1.msra.mxu0 0.0
  %2890 = vmatprep.mubr.f32.mxu0 0.0
  %2891 = vmatmul.mubr.f32.gmra.mrb[0].mxu0 %v501
  %v2892 = vpop.f32.mrb[0].mxu0
  %v2893 = vadd.f32 0.0, %v2892
  %v2894 = vpop.f32.mrb[0].mxu0
  %v2895 = vadd.f32 0.0, %v2894
  %2896 = vdwg.mxu0
  %2897 = vmatprep.subr.mxu0 %v242
  %2898 = vmatpush1.msra.mxu0 %v241
  %2899 = vmatprep.subr.mxu0 %v306
  %2900 = vmatpush1.msra.mxu0 %v305
  %2901 = vmatprep.subr.mxu0 %v370
  %2902 = vmatpush1.msra.mxu0 %v369
  %2903 = vmatprep.subr.mxu0 %v434
  %2904 = vmatpush1.msra.mxu0 %v433
  %2905 = vmatprep.subr.mxu0 %v694
  %2906 = vmatpush1.msra.mxu0 %v691
  %2907 = vmatprep.subr.mxu0 0.0
  %2908 = vmatpush1.msra.mxu0 0.0
  %2909 = vmatprep.subr.mxu0 0.0
  %2910 = vmatpush1.msra.mxu0 0.0
  %2911 = vmatprep.subr.mxu0 0.0
  %2912 = vmatpush1.msra.mxu0 0.0
  %2913 = vmatprep.subr.mxu0 0.0
  %2914 = vmatpush1.msra.mxu0 0.0
  %2915 = vmatprep.subr.mxu0 0.0
  %2916 = vmatpush1.msra.mxu0 0.0
  %2917 = vmatprep.subr.mxu0 0.0
  %2918 = vmatpush1.msra.mxu0 0.0
  %2919 = vmatprep.subr.mxu0 0.0
  %2920 = vmatpush1.msra.mxu0 0.0
  %2921 = vmatprep.subr.mxu0 0.0
  %2922 = vmatpush1.msra.mxu0 0.0
  %2923 = vmatprep.subr.mxu0 0.0
  %2924 = vmatpush1.msra.mxu0 0.0
  %2925 = vmatprep.subr.mxu0 0.0
  %2926 = vmatpush1.msra.mxu0 0.0
  %2927 = vmatprep.subr.mxu0 0.0
  %2928 = vmatpush1.msra.mxu0 0.0
  %2929 = vmatprep.subr.mxu0 0.0
  %2930 = vmatpush1.msra.mxu0 0.0
  %2931 = vmatprep.subr.mxu0 0.0
  %2932 = vmatpush1.msra.mxu0 0.0
  %2933 = vmatprep.subr.mxu0 0.0
  %2934 = vmatpush1.msra.mxu0 0.0
  %2935 = vmatprep.subr.mxu0 0.0
  %2936 = vmatpush1.msra.mxu0 0.0
  %2937 = vmatprep.subr.mxu0 0.0
  %2938 = vmatpush1.msra.mxu0 0.0
  %2939 = vmatprep.subr.mxu0 0.0
  %2940 = vmatpush1.msra.mxu0 0.0
  %2941 = vmatprep.subr.mxu0 0.0
  %2942 = vmatpush1.msra.mxu0 0.0
  %2943 = vmatprep.subr.mxu0 0.0
  %2944 = vmatpush1.msra.mxu0 0.0
  %2945 = vmatprep.subr.mxu0 0.0
  %2946 = vmatpush1.msra.mxu0 0.0
  %2947 = vmatprep.subr.mxu0 0.0
  %2948 = vmatpush1.msra.mxu0 0.0
  %2949 = vmatprep.subr.mxu0 0.0
  %2950 = vmatpush1.msra.mxu0 0.0
  %2951 = vmatprep.subr.mxu0 0.0
  %2952 = vmatpush1.msra.mxu0 0.0
  %2953 = vmatprep.subr.mxu0 0.0
  %2954 = vmatpush1.msra.mxu0 0.0
  %2955 = vmatprep.subr.mxu0 0.0
  %2956 = vmatpush1.msra.mxu0 0.0
  %2957 = vmatprep.subr.mxu0 0.0
  %2958 = vmatpush1.msra.mxu0 0.0
  %2959 = vmatprep.subr.mxu0 0.0
  %2960 = vmatpush1.msra.mxu0 0.0
  %2961 = vmatprep.mubr.f32.mxu0 0.0
  %2962 = vmatmul.mubr.f32.gmra.mrb[0].mxu0 %v501
  %v2963 = vpop.f32.mrb[0].mxu0
  %v2964 = vadd.f32 0.0, %v2963
  %v2965 = vpop.f32.mrb[0].mxu0
  %v2966 = vadd.f32 0.0, %v2965
  %2967 = vdwg.mxu0
  %v2968 = vadd.f32 %v763, %v765
  %v2969 = vadd.f32 %v2968, %v834
  %v2970 = vadd.f32 %v2969, %v836
  %v2971 = vadd.f32 %v2970, %v905
  %v2972 = vadd.f32 %v2971, %v907
  %v2973 = vadd.f32 %v2972, %v976
  %v2974 = vadd.f32 %v2973, %v978
  %v2975 = vadd.f32 %v2974, %v1047
  %v2976 = vadd.f32 %v2975, %v1049
  %v2977 = vadd.f32 %v2976, %v1118
  %v2978 = vadd.f32 %v2977, %v1120
  %v2979 = vadd.f32 %v2978, %v1189
  %v2980 = vadd.f32 %v2979, %v1191
  %v2981 = vadd.f32 %v2980, %v1260
  %v2982 = vadd.f32 %v2981, %v1262
  %v2983 = vadd.f32 %v2982, %v1331
  %v2984 = vadd.f32 %v2983, %v1333
  %v2985 = vadd.f32 %v2984, %v1402
  %v2986 = vadd.f32 %v2985, %v1404
  %v2987 = vadd.f32 %v2986, %v1473
  %v2988 = vadd.f32 %v2987, %v1475
  %v2989 = vadd.f32 %v2988, %v1544
  %v2990 = vadd.f32 %v2989, %v1546
  %v2991 = vadd.f32 %v2990, %v1615
  %v2992 = vadd.f32 %v2991, %v1617
  %v2993 = vadd.f32 %v2992, %v1686
  %v2994 = vadd.f32 %v2993, %v1688
  %v2995 = vadd.f32 %v2994, %v1757
  %v2996 = vadd.f32 %v2995, %v1759
  %v2997 = vadd.f32 %v2996, %v1828
  %v2998 = vadd.f32 %v2997, %v1830
  %v2999 = vadd.f32 %v2998, %v1899
  %v3000 = vadd.f32 %v2999, %v1901
  %v3001 = vadd.f32 %v3000, %v1970
  %v3002 = vadd.f32 %v3001, %v1972
  %v3003 = vadd.f32 %v3002, %v2041
  %v3004 = vadd.f32 %v3003, %v2043
  %v3005 = vadd.f32 %v3004, %v2112
  %v3006 = vadd.f32 %v3005, %v2114
  %v3007 = vadd.f32 %v3006, %v2183
  %v3008 = vadd.f32 %v3007, %v2185
  %v3009 = vadd.f32 %v3008, %v2254
  %v3010 = vadd.f32 %v3009, %v2256
  %v3011 = vadd.f32 %v3010, %v2325
  %v3012 = vadd.f32 %v3011, %v2327
  %v3013 = vadd.f32 %v3012, %v2396
  %v3014 = vadd.f32 %v3013, %v2398
  %v3015 = vadd.f32 %v3014, %v2467
  %v3016 = vadd.f32 %v3015, %v2469
  %v3017 = vadd.f32 %v3016, %v2538
  %v3018 = vadd.f32 %v3017, %v2540
  %v3019 = vadd.f32 %v3018, %v2609
  %v3020 = vadd.f32 %v3019, %v2611
  %v3021 = vadd.f32 %v3020, %v2680
  %v3022 = vadd.f32 %v3021, %v2682
  %v3023 = vadd.f32 %v3022, %v2751
  %v3024 = vadd.f32 %v3023, %v2753
  %v3025 = vadd.f32 %v3024, %v2822
  %v3026 = vadd.f32 %v3025, %v2824
  %v3027 = vadd.f32 %v3026, %v2893
  %v3028 = vadd.f32 %v3027, %v2895
  %v3029 = vadd.f32 %v3028, %v2964
  %v3030 = vadd.f32 %v3029, %v2966
  %3031 = vadd.xlane.f32.xlu0 %v3030
  %v3032 = vpop.xlane.xlu0 %3031
  %v3033 = vmul.f32 %v3032, 0.00012207031
  %v3034 = vmul.f32 %v763, %v763
  %v3035 = vmul.f32 %v765, %v765
  %v3036 = vmul.f32 %v834, %v834
  %v3037 = vmul.f32 %v836, %v836
  %v3038 = vmul.f32 %v905, %v905
  %v3039 = vmul.f32 %v907, %v907
  %v3040 = vmul.f32 %v976, %v976
  %v3041 = vmul.f32 %v978, %v978
  %v3042 = vmul.f32 %v1047, %v1047
  %v3043 = vmul.f32 %v1049, %v1049
  %v3044 = vmul.f32 %v1118, %v1118
  %v3045 = vmul.f32 %v1120, %v1120
  %v3046 = vmul.f32 %v1189, %v1189
  %v3047 = vmul.f32 %v1191, %v1191
  %v3048 = vmul.f32 %v1260, %v1260
  %v3049 = vmul.f32 %v1262, %v1262
  %v3050 = vmul.f32 %v1331, %v1331
  %v3051 = vmul.f32 %v1333, %v1333
  %v3052 = vmul.f32 %v1402, %v1402
  %v3053 = vmul.f32 %v1404, %v1404
  %v3054 = vmul.f32 %v1473, %v1473
  %v3055 = vmul.f32 %v1475, %v1475
  %v3056 = vmul.f32 %v1544, %v1544
  %v3057 = vmul.f32 %v1546, %v1546
  %v3058 = vmul.f32 %v1615, %v1615
  %v3059 = vmul.f32 %v1617, %v1617
  %v3060 = vmul.f32 %v1686, %v1686
  %v3061 = vmul.f32 %v1688, %v1688
  %v3062 = vmul.f32 %v1757, %v1757
  %v3063 = vmul.f32 %v1759, %v1759
  %v3064 = vmul.f32 %v1828, %v1828
  %v3065 = vmul.f32 %v1830, %v1830
  %v3066 = vmul.f32 %v1899, %v1899
  %v3067 = vmul.f32 %v1901, %v1901
  %v3068 = vmul.f32 %v1970, %v1970
  %v3069 = vmul.f32 %v1972, %v1972
  %v3070 = vmul.f32 %v2041, %v2041
  %v3071 = vmul.f32 %v2043, %v2043
  %v3072 = vmul.f32 %v2112, %v2112
  %v3073 = vmul.f32 %v2114, %v2114
  %v3074 = vmul.f32 %v2183, %v2183
  %v3075 = vmul.f32 %v2185, %v2185
  %v3076 = vmul.f32 %v2254, %v2254
  %v3077 = vmul.f32 %v2256, %v2256
  %v3078 = vmul.f32 %v2325, %v2325
  %v3079 = vmul.f32 %v2327, %v2327
  %v3080 = vmul.f32 %v2396, %v2396
  %v3081 = vmul.f32 %v2398, %v2398
  %v3082 = vmul.f32 %v2467, %v2467
  %v3083 = vmul.f32 %v2469, %v2469
  %v3084 = vmul.f32 %v2538, %v2538
  %v3085 = vmul.f32 %v2540, %v2540
  %v3086 = vmul.f32 %v2609, %v2609
  %v3087 = vmul.f32 %v2611, %v2611
  %v3088 = vmul.f32 %v2680, %v2680
  %v3089 = vmul.f32 %v2682, %v2682
  %v3090 = vmul.f32 %v2751, %v2751
  %v3091 = vmul.f32 %v2753, %v2753
  %v3092 = vmul.f32 %v2822, %v2822
  %v3093 = vmul.f32 %v2824, %v2824
  %v3094 = vmul.f32 %v2893, %v2893
  %v3095 = vmul.f32 %v2895, %v2895
  %v3096 = vmul.f32 %v2964, %v2964
  %v3097 = vmul.f32 %v2966, %v2966
  %v3098 = vadd.f32 %v3034, %v3035
  %v3099 = vadd.f32 %v3098, %v3036
  %v3100 = vadd.f32 %v3099, %v3037
  %v3101 = vadd.f32 %v3100, %v3038
  %v3102 = vadd.f32 %v3101, %v3039
  %v3103 = vadd.f32 %v3102, %v3040
  %v3104 = vadd.f32 %v3103, %v3041
  %v3105 = vadd.f32 %v3104, %v3042
  %v3106 = vadd.f32 %v3105, %v3043
  %v3107 = vadd.f32 %v3106, %v3044
  %v3108 = vadd.f32 %v3107, %v3045
  %v3109 = vadd.f32 %v3108, %v3046
  %v3110 = vadd.f32 %v3109, %v3047
  %v3111 = vadd.f32 %v3110, %v3048
  %v3112 = vadd.f32 %v3111, %v3049
  %v3113 = vadd.f32 %v3112, %v3050
  %v3114 = vadd.f32 %v3113, %v3051
  %v3115 = vadd.f32 %v3114, %v3052
  %v3116 = vadd.f32 %v3115, %v3053
  %v3117 = vadd.f32 %v3116, %v3054
  %v3118 = vadd.f32 %v3117, %v3055
  %v3119 = vadd.f32 %v3118, %v3056
  %v3120 = vadd.f32 %v3119, %v3057
  %v3121 = vadd.f32 %v3120, %v3058
  %v3122 = vadd.f32 %v3121, %v3059
  %v3123 = vadd.f32 %v3122, %v3060
  %v3124 = vadd.f32 %v3123, %v3061
  %v3125 = vadd.f32 %v3124, %v3062
  %v3126 = vadd.f32 %v3125, %v3063
  %v3127 = vadd.f32 %v3126, %v3064
  %v3128 = vadd.f32 %v3127, %v3065
  %v3129 = vadd.f32 %v3128, %v3066
  %v3130 = vadd.f32 %v3129, %v3067
  %v3131 = vadd.f32 %v3130, %v3068
  %v3132 = vadd.f32 %v3131, %v3069
  %v3133 = vadd.f32 %v3132, %v3070
  %v3134 = vadd.f32 %v3133, %v3071
  %v3135 = vadd.f32 %v3134, %v3072
  %v3136 = vadd.f32 %v3135, %v3073
  %v3137 = vadd.f32 %v3136, %v3074
  %v3138 = vadd.f32 %v3137, %v3075
  %v3139 = vadd.f32 %v3138, %v3076
  %v3140 = vadd.f32 %v3139, %v3077
  %v3141 = vadd.f32 %v3140, %v3078
  %v3142 = vadd.f32 %v3141, %v3079
  %v3143 = vadd.f32 %v3142, %v3080
  %v3144 = vadd.f32 %v3143, %v3081
  %v3145 = vadd.f32 %v3144, %v3082
  %v3146 = vadd.f32 %v3145, %v3083
  %v3147 = vadd.f32 %v3146, %v3084
  %v3148 = vadd.f32 %v3147, %v3085
  %v3149 = vadd.f32 %v3148, %v3086
  %v3150 = vadd.f32 %v3149, %v3087
  %v3151 = vadd.f32 %v3150, %v3088
  %v3152 = vadd.f32 %v3151, %v3089
  %v3153 = vadd.f32 %v3152, %v3090
  %v3154 = vadd.f32 %v3153, %v3091
  %v3155 = vadd.f32 %v3154, %v3092
  %v3156 = vadd.f32 %v3155, %v3093
  %v3157 = vadd.f32 %v3156, %v3094
  %v3158 = vadd.f32 %v3157, %v3095
  %v3159 = vadd.f32 %v3158, %v3096
  %v3160 = vadd.f32 %v3159, %v3097
  %3161 = vadd.xlane.f32.xlu0 %v3160
  %v3162 = vpop.xlane.xlu0 %3161
  %v3163 = vmul.f32 %v3162, 0.00012207031
  %v3164 = vmul.f32 %v3033, %v3033
  %v3165 = vsub.f32 %v3163, %v3164
  %v3166 = vmax.f32 %v3165, 0.0
  %v3167 = vld [vmem:[%s2] sm:$0xff]
  %v3168 = vadd.f32 %v3166, 1e-05
  %v3169 = vrsqrt.pop %v3168
  %v3170 = vmul.f32 %v3167, %v3169
  %v3171 = vld [vmem:[%s3] sm:$0xff]
  %v3172 = vmul.f32 %v3033, %v3170
  %v3173 = vsub.f32 %v3171, %v3172
  %3175 = vset.pattern.permute.xlu0 0
  %3176 = vperm.xlu0 %3175, %v3170
  %v3177 = vpop.permute.xlu0 %3176
  %v3179 = vmul.f32 %v763, %v3177
  %v3180 = vmul.f32 %v765, %v3177
  %v3181 = vmul.f32 %v834, %v3177
  %v3182 = vmul.f32 %v836, %v3177
  %v3183 = vmul.f32 %v905, %v3177
  %v3184 = vmul.f32 %v907, %v3177
  %v3185 = vmul.f32 %v976, %v3177
  %v3186 = vmul.f32 %v978, %v3177
  %v3187 = vmul.f32 %v1047, %v3177
  %v3188 = vmul.f32 %v1049, %v3177
  %v3189 = vmul.f32 %v1118, %v3177
  %v3190 = vmul.f32 %v1120, %v3177
  %v3191 = vmul.f32 %v1189, %v3177
  %v3192 = vmul.f32 %v1191, %v3177
  %v3193 = vmul.f32 %v1260, %v3177
  %v3194 = vmul.f32 %v1262, %v3177
  %v3195 = vmul.f32 %v1331, %v3177
  %v3196 = vmul.f32 %v1333, %v3177
  %v3197 = vmul.f32 %v1402, %v3177
  %v3198 = vmul.f32 %v1404, %v3177
  %v3199 = vmul.f32 %v1473, %v3177
  %v3200 = vmul.f32 %v1475, %v3177
  %v3201 = vmul.f32 %v1544, %v3177
  %v3202 = vmul.f32 %v1546, %v3177
  %v3203 = vmul.f32 %v1615, %v3177
  %v3204 = vmul.f32 %v1617, %v3177
  %v3205 = vmul.f32 %v1686, %v3177
  %v3206 = vmul.f32 %v1688, %v3177
  %v3207 = vmul.f32 %v1757, %v3177
  %v3208 = vmul.f32 %v1759, %v3177
  %v3209 = vmul.f32 %v1828, %v3177
  %v3210 = vmul.f32 %v1830, %v3177
  %v3211 = vmul.f32 %v1899, %v3177
  %v3212 = vmul.f32 %v1901, %v3177
  %v3213 = vmul.f32 %v1970, %v3177
  %v3214 = vmul.f32 %v1972, %v3177
  %v3215 = vmul.f32 %v2041, %v3177
  %v3216 = vmul.f32 %v2043, %v3177
  %v3217 = vmul.f32 %v2112, %v3177
  %v3218 = vmul.f32 %v2114, %v3177
  %v3219 = vmul.f32 %v2183, %v3177
  %v3220 = vmul.f32 %v2185, %v3177
  %v3221 = vmul.f32 %v2254, %v3177
  %v3222 = vmul.f32 %v2256, %v3177
  %v3223 = vmul.f32 %v2325, %v3177
  %v3224 = vmul.f32 %v2327, %v3177
  %v3225 = vmul.f32 %v2396, %v3177
  %v3226 = vmul.f32 %v2398, %v3177
  %v3227 = vmul.f32 %v2467, %v3177
  %v3228 = vmul.f32 %v2469, %v3177
  %v3229 = vmul.f32 %v2538, %v3177
  %v3230 = vmul.f32 %v2540, %v3177
  %v3231 = vmul.f32 %v2609, %v3177
  %v3232 = vmul.f32 %v2611, %v3177
  %v3233 = vmul.f32 %v2680, %v3177
  %v3234 = vmul.f32 %v2682, %v3177
  %v3235 = vmul.f32 %v2751, %v3177
  %v3236 = vmul.f32 %v2753, %v3177
  %v3237 = vmul.f32 %v2822, %v3177
  %v3238 = vmul.f32 %v2824, %v3177
  %v3239 = vmul.f32 %v2893, %v3177
  %v3240 = vmul.f32 %v2895, %v3177
  %v3241 = vmul.f32 %v2964, %v3177
  %v3242 = vmul.f32 %v2966, %v3177
  %3244 = vset.pattern.permute.xlu0 0
  %3245 = vperm.xlu0 %3244, %v3173
  %v3246 = vpop.permute.xlu0 %3245
  %v3248 = vadd.f32 %v3179, %v3246
  %v3249 = vadd.f32 %v3180, %v3246
  %v3250 = vadd.f32 %v3181, %v3246
  %v3251 = vadd.f32 %v3182, %v3246
  %v3252 = vadd.f32 %v3183, %v3246
  %v3253 = vadd.f32 %v3184, %v3246
  %v3254 = vadd.f32 %v3185, %v3246
  %v3255 = vadd.f32 %v3186, %v3246
  %v3256 = vadd.f32 %v3187, %v3246
  %v3257 = vadd.f32 %v3188, %v3246
  %v3258 = vadd.f32 %v3189, %v3246
  %v3259 = vadd.f32 %v3190, %v3246
  %v3260 = vadd.f32 %v3191, %v3246
  %v3261 = vadd.f32 %v3192, %v3246
  %v3262 = vadd.f32 %v3193, %v3246
  %v3263 = vadd.f32 %v3194, %v3246
  %v3264 = vadd.f32 %v3195, %v3246
  %v3265 = vadd.f32 %v3196, %v3246
  %v3266 = vadd.f32 %v3197, %v3246
  %v3267 = vadd.f32 %v3198, %v3246
  %v3268 = vadd.f32 %v3199, %v3246
  %v3269 = vadd.f32 %v3200, %v3246
  %v3270 = vadd.f32 %v3201, %v3246
  %v3271 = vadd.f32 %v3202, %v3246
  %v3272 = vadd.f32 %v3203, %v3246
  %v3273 = vadd.f32 %v3204, %v3246
  %v3274 = vadd.f32 %v3205, %v3246
  %v3275 = vadd.f32 %v3206, %v3246
  %v3276 = vadd.f32 %v3207, %v3246
  %v3277 = vadd.f32 %v3208, %v3246
  %v3278 = vadd.f32 %v3209, %v3246
  %v3279 = vadd.f32 %v3210, %v3246
  %v3280 = vadd.f32 %v3211, %v3246
  %v3281 = vadd.f32 %v3212, %v3246
  %v3282 = vadd.f32 %v3213, %v3246
  %v3283 = vadd.f32 %v3214, %v3246
  %v3284 = vadd.f32 %v3215, %v3246
  %v3285 = vadd.f32 %v3216, %v3246
  %v3286 = vadd.f32 %v3217, %v3246
  %v3287 = vadd.f32 %v3218, %v3246
  %v3288 = vadd.f32 %v3219, %v3246
  %v3289 = vadd.f32 %v3220, %v3246
  %v3290 = vadd.f32 %v3221, %v3246
  %v3291 = vadd.f32 %v3222, %v3246
  %v3292 = vadd.f32 %v3223, %v3246
  %v3293 = vadd.f32 %v3224, %v3246
  %v3294 = vadd.f32 %v3225, %v3246
  %v3295 = vadd.f32 %v3226, %v3246
  %v3296 = vadd.f32 %v3227, %v3246
  %v3297 = vadd.f32 %v3228, %v3246
  %v3298 = vadd.f32 %v3229, %v3246
  %v3299 = vadd.f32 %v3230, %v3246
  %v3300 = vadd.f32 %v3231, %v3246
  %v3301 = vadd.f32 %v3232, %v3246
  %v3302 = vadd.f32 %v3233, %v3246
  %v3303 = vadd.f32 %v3234, %v3246
  %v3304 = vadd.f32 %v3235, %v3246
  %v3305 = vadd.f32 %v3236, %v3246
  %v3306 = vadd.f32 %v3237, %v3246
  %v3307 = vadd.f32 %v3238, %v3246
  %v3308 = vadd.f32 %v3239, %v3246
  %v3309 = vadd.f32 %v3240, %v3246
  %v3310 = vadd.f32 %v3241, %v3246
  %v3311 = vadd.f32 %v3242, %v3246
  %v3312 = vsub.f32 0.0, %v3248
  %v3313 = vsub.f32 0.0, %v3249
  %v3314 = vsub.f32 0.0, %v3250
  %v3315 = vsub.f32 0.0, %v3251
  %v3316 = vsub.f32 0.0, %v3252
  %v3317 = vsub.f32 0.0, %v3253
  %v3318 = vsub.f32 0.0, %v3254
  %v3319 = vsub.f32 0.0, %v3255
  %v3320 = vsub.f32 0.0, %v3256
  %v3321 = vsub.f32 0.0, %v3257
  %v3322 = vsub.f32 0.0, %v3258
  %v3323 = vsub.f32 0.0, %v3259
  %v3324 = vsub.f32 0.0, %v3260
  %v3325 = vsub.f32 0.0, %v3261
  %v3326 = vsub.f32 0.0, %v3262
  %v3327 = vsub.f32 0.0, %v3263
  %v3328 = vsub.f32 0.0, %v3264
  %v3329 = vsub.f32 0.0, %v3265
  %v3330 = vsub.f32 0.0, %v3266
  %v3331 = vsub.f32 0.0, %v3267
  %v3332 = vsub.f32 0.0, %v3268
  %v3333 = vsub.f32 0.0, %v3269
  %v3334 = vsub.f32 0.0, %v3270
  %v3335 = vsub.f32 0.0, %v3271
  %v3336 = vsub.f32 0.0, %v3272
  %v3337 = vsub.f32 0.0, %v3273
  %v3338 = vsub.f32 0.0, %v3274
  %v3339 = vsub.f32 0.0, %v3275
  %v3340 = vsub.f32 0.0, %v3276
  %v3341 = vsub.f32 0.0, %v3277
  %v3342 = vsub.f32 0.0, %v3278
  %v3343 = vsub.f32 0.0, %v3279
  %v3344 = vsub.f32 0.0, %v3280
  %v3345 = vsub.f32 0.0, %v3281
  %v3346 = vsub.f32 0.0, %v3282
  %v3347 = vsub.f32 0.0, %v3283
  %v3348 = vsub.f32 0.0, %v3284
  %v3349 = vsub.f32 0.0, %v3285
  %v3350 = vsub.f32 0.0, %v3286
  %v3351 = vsub.f32 0.0, %v3287
  %v3352 = vsub.f32 0.0, %v3288
  %v3353 = vsub.f32 0.0, %v3289
  %v3354 = vsub.f32 0.0, %v3290
  %v3355 = vsub.f32 0.0, %v3291
  %v3356 = vsub.f32 0.0, %v3292
  %v3357 = vsub.f32 0.0, %v3293
  %v3358 = vsub.f32 0.0, %v3294
  %v3359 = vsub.f32 0.0, %v3295
  %v3360 = vsub.f32 0.0, %v3296
  %v3361 = vsub.f32 0.0, %v3297
  %v3362 = vsub.f32 0.0, %v3298
  %v3363 = vsub.f32 0.0, %v3299
  %v3364 = vsub.f32 0.0, %v3300
  %v3365 = vsub.f32 0.0, %v3301
  %v3366 = vsub.f32 0.0, %v3302
  %v3367 = vsub.f32 0.0, %v3303
  %v3368 = vsub.f32 0.0, %v3304
  %v3369 = vsub.f32 0.0, %v3305
  %v3370 = vsub.f32 0.0, %v3306
  %v3371 = vsub.f32 0.0, %v3307
  %v3372 = vsub.f32 0.0, %v3308
  %v3373 = vsub.f32 0.0, %v3309
  %v3374 = vsub.f32 0.0, %v3310
  %v3375 = vsub.f32 0.0, %v3311
  %v3376 = vmul.f32 %v3312, 1.442695
  %v3377 = vpow.pop %v3376
  %v3378 = vmul.f32 %v3313, 1.442695
  %v3379 = vpow.pop %v3378
  %v3380 = vmul.f32 %v3314, 1.442695
  %v3381 = vpow.pop %v3380
  %v3382 = vmul.f32 %v3315, 1.442695
  %v3383 = vpow.pop %v3382
  %v3384 = vmul.f32 %v3316, 1.442695
  %v3385 = vpow.pop %v3384
  %v3386 = vmul.f32 %v3317, 1.442695
  %v3387 = vpow.pop %v3386
  %v3388 = vmul.f32 %v3318, 1.442695
  %v3389 = vpow.pop %v3388
  %v3390 = vmul.f32 %v3319, 1.442695
  %v3391 = vpow.pop %v3390
  %v3392 = vmul.f32 %v3320, 1.442695
  %v3393 = vpow.pop %v3392
  %v3394 = vmul.f32 %v3321, 1.442695
  %v3395 = vpow.pop %v3394
  %v3396 = vmul.f32 %v3322, 1.442695
  %v3397 = vpow.pop %v3396
  %v3398 = vmul.f32 %v3323, 1.442695
  %v3399 = vpow.pop %v3398
  %v3400 = vmul.f32 %v3324, 1.442695
  %v3401 = vpow.pop %v3400
  %v3402 = vmul.f32 %v3325, 1.442695
  %v3403 = vpow.pop %v3402
  %v3404 = vmul.f32 %v3326, 1.442695
  %v3405 = vpow.pop %v3404
  %v3406 = vmul.f32 %v3327, 1.442695
  %v3407 = vpow.pop %v3406
  %v3408 = vmul.f32 %v3328, 1.442695
  %v3409 = vpow.pop %v3408
  %v3410 = vmul.f32 %v3329, 1.442695
  %v3411 = vpow.pop %v3410
  %v3412 = vmul.f32 %v3330, 1.442695
  %v3413 = vpow.pop %v3412
  %v3414 = vmul.f32 %v3331, 1.442695
  %v3415 = vpow.pop %v3414
  %v3416 = vmul.f32 %v3332, 1.442695
  %v3417 = vpow.pop %v3416
  %v3418 = vmul.f32 %v3333, 1.442695
  %v3419 = vpow.pop %v3418
  %v3420 = vmul.f32 %v3334, 1.442695
  %v3421 = vpow.pop %v3420
  %v3422 = vmul.f32 %v3335, 1.442695
  %v3423 = vpow.pop %v3422
  %v3424 = vmul.f32 %v3336, 1.442695
  %v3425 = vpow.pop %v3424
  %v3426 = vmul.f32 %v3337, 1.442695
  %v3427 = vpow.pop %v3426
  %v3428 = vmul.f32 %v3338, 1.442695
  %v3429 = vpow.pop %v3428
  %v3430 = vmul.f32 %v3339, 1.442695
  %v3431 = vpow.pop %v3430
  %v3432 = vmul.f32 %v3340, 1.442695
  %v3433 = vpow.pop %v3432
  %v3434 = vmul.f32 %v3341, 1.442695
  %v3435 = vpow.pop %v3434
  %v3436 = vmul.f32 %v3342, 1.442695
  %v3437 = vpow.pop %v3436
  %v3438 = vmul.f32 %v3343, 1.442695
  %v3439 = vpow.pop %v3438
  %v3440 = vmul.f32 %v3344, 1.442695
  %v3441 = vpow.pop %v3440
  %v3442 = vmul.f32 %v3345, 1.442695
  %v3443 = vpow.pop %v3442
  %v3444 = vmul.f32 %v3346, 1.442695
  %v3445 = vpow.pop %v3444
  %v3446 = vmul.f32 %v3347, 1.442695
  %v3447 = vpow.pop %v3446
  %v3448 = vmul.f32 %v3348, 1.442695
  %v3449 = vpow.pop %v3448
  %v3450 = vmul.f32 %v3349, 1.442695
  %v3451 = vpow.pop %v3450
  %v3452 = vmul.f32 %v3350, 1.442695
  %v3453 = vpow.pop %v3452
  %v3454 = vmul.f32 %v3351, 1.442695
  %v3455 = vpow.pop %v3454
  %v3456 = vmul.f32 %v3352, 1.442695
  %v3457 = vpow.pop %v3456
  %v3458 = vmul.f32 %v3353, 1.442695
  %v3459 = vpow.pop %v3458
  %v3460 = vmul.f32 %v3354, 1.442695
  %v3461 = vpow.pop %v3460
  %v3462 = vmul.f32 %v3355, 1.442695
  %v3463 = vpow.pop %v3462
  %v3464 = vmul.f32 %v3356, 1.442695
  %v3465 = vpow.pop %v3464
  %v3466 = vmul.f32 %v3357, 1.442695
  %v3467 = vpow.pop %v3466
  %v3468 = vmul.f32 %v3358, 1.442695
  %v3469 = vpow.pop %v3468
  %v3470 = vmul.f32 %v3359, 1.442695
  %v3471 = vpow.pop %v3470
  %v3472 = vmul.f32 %v3360, 1.442695
  %v3473 = vpow.pop %v3472
  %v3474 = vmul.f32 %v3361, 1.442695
  %v3475 = vpow.pop %v3474
  %v3476 = vmul.f32 %v3362, 1.442695
  %v3477 = vpow.pop %v3476
  %v3478 = vmul.f32 %v3363, 1.442695
  %v3479 = vpow.pop %v3478
  %v3480 = vmul.f32 %v3364, 1.442695
  %v3481 = vpow.pop %v3480
  %v3482 = vmul.f32 %v3365, 1.442695
  %v3483 = vpow.pop %v3482
  %v3484 = vmul.f32 %v3366, 1.442695
  %v3485 = vpow.pop %v3484
  %v3486 = vmul.f32 %v3367, 1.442695
  %v3487 = vpow.pop %v3486
  %v3488 = vmul.f32 %v3368, 1.442695
  %v3489 = vpow.pop %v3488
  %v3490 = vmul.f32 %v3369, 1.442695
  %v3491 = vpow.pop %v3490
  %v3492 = vmul.f32 %v3370, 1.442695
  %v3493 = vpow.pop %v3492
  %v3494 = vmul.f32 %v3371, 1.442695
  %v3495 = vpow.pop %v3494
  %v3496 = vmul.f32 %v3372, 1.442695
  %v3497 = vpow.pop %v3496
  %v3498 = vmul.f32 %v3373, 1.442695
  %v3499 = vpow.pop %v3498
  %v3500 = vmul.f32 %v3374, 1.442695
  %v3501 = vpow.pop %v3500
  %v3502 = vmul.f32 %v3375, 1.442695
  %v3503 = vpow.pop %v3502
  %v3504 = vadd.f32 %v3377, 1.0
  %v3505 = vadd.f32 %v3379, 1.0
  %v3506 = vadd.f32 %v3381, 1.0
  %v3507 = vadd.f32 %v3383, 1.0
  %v3508 = vadd.f32 %v3385, 1.0
  %v3509 = vadd.f32 %v3387, 1.0
  %v3510 = vadd.f32 %v3389, 1.0
  %v3511 = vadd.f32 %v3391, 1.0
  %v3512 = vadd.f32 %v3393, 1.0
  %v3513 = vadd.f32 %v3395, 1.0
  %v3514 = vadd.f32 %v3397, 1.0
  %v3515 = vadd.f32 %v3399, 1.0
  %v3516 = vadd.f32 %v3401, 1.0
  %v3517 = vadd.f32 %v3403, 1.0
  %v3518 = vadd.f32 %v3405, 1.0
  %v3519 = vadd.f32 %v3407, 1.0
  %v3520 = vadd.f32 %v3409, 1.0
  %v3521 = vadd.f32 %v3411, 1.0
  %v3522 = vadd.f32 %v3413, 1.0
  %v3523 = vadd.f32 %v3415, 1.0
  %v3524 = vadd.f32 %v3417, 1.0
  %v3525 = vadd.f32 %v3419, 1.0
  %v3526 = vadd.f32 %v3421, 1.0
  %v3527 = vadd.f32 %v3423, 1.0
  %v3528 = vadd.f32 %v3425, 1.0
  %v3529 = vadd.f32 %v3427, 1.0
  %v3530 = vadd.f32 %v3429, 1.0
  %v3531 = vadd.f32 %v3431, 1.0
  %v3532 = vadd.f32 %v3433, 1.0
  %v3533 = vadd.f32 %v3435, 1.0
  %v3534 = vadd.f32 %v3437, 1.0
  %v3535 = vadd.f32 %v3439, 1.0
  %v3536 = vadd.f32 %v3441, 1.0
  %v3537 = vadd.f32 %v3443, 1.0
  %v3538 = vadd.f32 %v3445, 1.0
  %v3539 = vadd.f32 %v3447, 1.0
  %v3540 = vadd.f32 %v3449, 1.0
  %v3541 = vadd.f32 %v3451, 1.0
  %v3542 = vadd.f32 %v3453, 1.0
  %v3543 = vadd.f32 %v3455, 1.0
  %v3544 = vadd.f32 %v3457, 1.0
  %v3545 = vadd.f32 %v3459, 1.0
  %v3546 = vadd.f32 %v3461, 1.0
  %v3547 = vadd.f32 %v3463, 1.0
  %v3548 = vadd.f32 %v3465, 1.0
  %v3549 = vadd.f32 %v3467, 1.0
  %v3550 = vadd.f32 %v3469, 1.0
  %v3551 = vadd.f32 %v3471, 1.0
  %v3552 = vadd.f32 %v3473, 1.0
  %v3553 = vadd.f32 %v3475, 1.0
  %v3554 = vadd.f32 %v3477, 1.0
  %v3555 = vadd.f32 %v3479, 1.0
  %v3556 = vadd.f32 %v3481, 1.0
  %v3557 = vadd.f32 %v3483, 1.0
  %v3558 = vadd.f32 %v3485, 1.0
  %v3559 = vadd.f32 %v3487, 1.0
  %v3560 = vadd.f32 %v3489, 1.0
  %v3561 = vadd.f32 %v3491, 1.0
  %v3562 = vadd.f32 %v3493, 1.0
  %v3563 = vadd.f32 %v3495, 1.0
  %v3564 = vadd.f32 %v3497, 1.0
  %v3565 = vadd.f32 %v3499, 1.0
  %v3566 = vadd.f32 %v3501, 1.0
  %v3567 = vadd.f32 %v3503, 1.0
  %v3568 = vrcp.pop %v3504
  %v3569 = vmul.f32 1.0, %v3568
  %v3570 = vrcp.pop %v3505
  %v3571 = vmul.f32 1.0, %v3570
  %v3572 = vrcp.pop %v3506
  %v3573 = vmul.f32 1.0, %v3572
  %v3574 = vrcp.pop %v3507
  %v3575 = vmul.f32 1.0, %v3574
  %v3576 = vrcp.pop %v3508
  %v3577 = vmul.f32 1.0, %v3576
  %v3578 = vrcp.pop %v3509
  %v3579 = vmul.f32 1.0, %v3578
  %v3580 = vrcp.pop %v3510
  %v3581 = vmul.f32 1.0, %v3580
  %v3582 = vrcp.pop %v3511
  %v3583 = vmul.f32 1.0, %v3582
  %v3584 = vrcp.pop %v3512
  %v3585 = vmul.f32 1.0, %v3584
  %v3586 = vrcp.pop %v3513
  %v3587 = vmul.f32 1.0, %v3586
  %v3588 = vrcp.pop %v3514
  %v3589 = vmul.f32 1.0, %v3588
  %v3590 = vrcp.pop %v3515
  %v3591 = vmul.f32 1.0, %v3590
  %v3592 = vrcp.pop %v3516
  %v3593 = vmul.f32 1.0, %v3592
  %v3594 = vrcp.pop %v3517
  %v3595 = vmul.f32 1.0, %v3594
  %v3596 = vrcp.pop %v3518
  %v3597 = vmul.f32 1.0, %v3596
  %v3598 = vrcp.pop %v3519
  %v3599 = vmul.f32 1.0, %v3598
  %v3600 = vrcp.pop %v3520
  %v3601 = vmul.f32 1.0, %v3600
  %v3602 = vrcp.pop %v3521
  %v3603 = vmul.f32 1.0, %v3602
  %v3604 = vrcp.pop %v3522
  %v3605 = vmul.f32 1.0, %v3604
  %v3606 = vrcp.pop %v3523
  %v3607 = vmul.f32 1.0, %v3606
  %v3608 = vrcp.pop %v3524
  %v3609 = vmul.f32 1.0, %v3608
  %v3610 = vrcp.pop %v3525
  %v3611 = vmul.f32 1.0, %v3610
  %v3612 = vrcp.pop %v3526
  %v3613 = vmul.f32 1.0, %v3612
  %v3614 = vrcp.pop %v3527
  %v3615 = vmul.f32 1.0, %v3614
  %v3616 = vrcp.pop %v3528
  %v3617 = vmul.f32 1.0, %v3616
  %v3618 = vrcp.pop %v3529
  %v3619 = vmul.f32 1.0, %v3618
  %v3620 = vrcp.pop %v3530
  %v3621 = vmul.f32 1.0, %v3620
  %v3622 = vrcp.pop %v3531
  %v3623 = vmul.f32 1.0, %v3622
  %v3624 = vrcp.pop %v3532
  %v3625 = vmul.f32 1.0, %v3624
  %v3626 = vrcp.pop %v3533
  %v3627 = vmul.f32 1.0, %v3626
  %v3628 = vrcp.pop %v3534
  %v3629 = vmul.f32 1.0, %v3628
  %v3630 = vrcp.pop %v3535
  %v3631 = vmul.f32 1.0, %v3630
  %v3632 = vrcp.pop %v3536
  %v3633 = vmul.f32 1.0, %v3632
  %v3634 = vrcp.pop %v3537
  %v3635 = vmul.f32 1.0, %v3634
  %v3636 = vrcp.pop %v3538
  %v3637 = vmul.f32 1.0, %v3636
  %v3638 = vrcp.pop %v3539
  %v3639 = vmul.f32 1.0, %v3638
  %v3640 = vrcp.pop %v3540
  %v3641 = vmul.f32 1.0, %v3640
  %v3642 = vrcp.pop %v3541
  %v3643 = vmul.f32 1.0, %v3642
  %v3644 = vrcp.pop %v3542
  %v3645 = vmul.f32 1.0, %v3644
  %v3646 = vrcp.pop %v3543
  %v3647 = vmul.f32 1.0, %v3646
  %v3648 = vrcp.pop %v3544
  %v3649 = vmul.f32 1.0, %v3648
  %v3650 = vrcp.pop %v3545
  %v3651 = vmul.f32 1.0, %v3650
  %v3652 = vrcp.pop %v3546
  %v3653 = vmul.f32 1.0, %v3652
  %v3654 = vrcp.pop %v3547
  %v3655 = vmul.f32 1.0, %v3654
  %v3656 = vrcp.pop %v3548
  %v3657 = vmul.f32 1.0, %v3656
  %v3658 = vrcp.pop %v3549
  %v3659 = vmul.f32 1.0, %v3658
  %v3660 = vrcp.pop %v3550
  %v3661 = vmul.f32 1.0, %v3660
  %v3662 = vrcp.pop %v3551
  %v3663 = vmul.f32 1.0, %v3662
  %v3664 = vrcp.pop %v3552
  %v3665 = vmul.f32 1.0, %v3664
  %v3666 = vrcp.pop %v3553
  %v3667 = vmul.f32 1.0, %v3666
  %v3668 = vrcp.pop %v3554
  %v3669 = vmul.f32 1.0, %v3668
  %v3670 = vrcp.pop %v3555
  %v3671 = vmul.f32 1.0, %v3670
  %v3672 = vrcp.pop %v3556
  %v3673 = vmul.f32 1.0, %v3672
  %v3674 = vrcp.pop %v3557
  %v3675 = vmul.f32 1.0, %v3674
  %v3676 = vrcp.pop %v3558
  %v3677 = vmul.f32 1.0, %v3676
  %v3678 = vrcp.pop %v3559
  %v3679 = vmul.f32 1.0, %v3678
  %v3680 = vrcp.pop %v3560
  %v3681 = vmul.f32 1.0, %v3680
  %v3682 = vrcp.pop %v3561
  %v3683 = vmul.f32 1.0, %v3682
  %v3684 = vrcp.pop %v3562
  %v3685 = vmul.f32 1.0, %v3684
  %v3686 = vrcp.pop %v3563
  %v3687 = vmul.f32 1.0, %v3686
  %v3688 = vrcp.pop %v3564
  %v3689 = vmul.f32 1.0, %v3688
  %v3690 = vrcp.pop %v3565
  %v3691 = vmul.f32 1.0, %v3690
  %v3692 = vrcp.pop %v3566
  %v3693 = vmul.f32 1.0, %v3692
  %v3694 = vrcp.pop %v3567
  %v3695 = vmul.f32 1.0, %v3694
  %3696 = vst [vmem:[%s4] sm:$0xff] %v3569
  %3697 = vst [vmem:[%s4 + $0x8] sm:$0xff] %v3571
  %3698 = vst [vmem:[%s4 + $0x10] sm:$0xff] %v3573
  %3699 = vst [vmem:[%s4 + $0x18] sm:$0xff] %v3575
  %3700 = vst [vmem:[%s4 + $0x20] sm:$0xff] %v3577
  %3701 = vst [vmem:[%s4 + $0x28] sm:$0xff] %v3579
  %3702 = vst [vmem:[%s4 + $0x30] sm:$0xff] %v3581
  %3703 = vst [vmem:[%s4 + $0x38] sm:$0xff] %v3583
  %3704 = vst [vmem:[%s4 + $0x40] sm:$0xff] %v3585
  %3705 = vst [vmem:[%s4 + $0x48] sm:$0xff] %v3587
  %3706 = vst [vmem:[%s4 + $0x50] sm:$0xff] %v3589
  %3707 = vst [vmem:[%s4 + $0x58] sm:$0xff] %v3591
  %3708 = vst [vmem:[%s4 + $0x60] sm:$0xff] %v3593
  %3709 = vst [vmem:[%s4 + $0x68] sm:$0xff] %v3595
  %3710 = vst [vmem:[%s4 + $0x70] sm:$0xff] %v3597
  %3711 = vst [vmem:[%s4 + $0x78] sm:$0xff] %v3599
  %3712 = vst [vmem:[%s4 + $0x80] sm:$0xff] %v3601
  %3713 = vst [vmem:[%s4 + $0x88] sm:$0xff] %v3603
  %3714 = vst [vmem:[%s4 + $0x90] sm:$0xff] %v3605
  %3715 = vst [vmem:[%s4 + $0x98] sm:$0xff] %v3607
  %3716 = vst [vmem:[%s4 + $0xa0] sm:$0xff] %v3609
  %3717 = vst [vmem:[%s4 + $0xa8] sm:$0xff] %v3611
  %3718 = vst [vmem:[%s4 + $0xb0] sm:$0xff] %v3613
  %3719 = vst [vmem:[%s4 + $0xb8] sm:$0xff] %v3615
  %3720 = vst [vmem:[%s4 + $0xc0] sm:$0xff] %v3617
  %3721 = vst [vmem:[%s4 + $0xc8] sm:$0xff] %v3619
  %3722 = vst [vmem:[%s4 + $0xd0] sm:$0xff] %v3621
  %3723 = vst [vmem:[%s4 + $0xd8] sm:$0xff] %v3623
  %3724 = vst [vmem:[%s4 + $0xe0] sm:$0xff] %v3625
  %3725 = vst [vmem:[%s4 + $0xe8] sm:$0xff] %v3627
  %3726 = vst [vmem:[%s4 + $0xf0] sm:$0xff] %v3629
  %3727 = vst [vmem:[%s4 + $0xf8] sm:$0xff] %v3631
  %3728 = vst [vmem:[%s4 + $0x100] sm:$0xff] %v3633
  %3729 = vst [vmem:[%s4 + $0x108] sm:$0xff] %v3635
  %3730 = vst [vmem:[%s4 + $0x110] sm:$0xff] %v3637
  %3731 = vst [vmem:[%s4 + $0x118] sm:$0xff] %v3639
  %3732 = vst [vmem:[%s4 + $0x120] sm:$0xff] %v3641
  %3733 = vst [vmem:[%s4 + $0x128] sm:$0xff] %v3643
  %3734 = vst [vmem:[%s4 + $0x130] sm:$0xff] %v3645
  %3735 = vst [vmem:[%s4 + $0x138] sm:$0xff] %v3647
  %3736 = vst [vmem:[%s4 + $0x140] sm:$0xff] %v3649
  %3737 = vst [vmem:[%s4 + $0x148] sm:$0xff] %v3651
  %3738 = vst [vmem:[%s4 + $0x150] sm:$0xff] %v3653
  %3739 = vst [vmem:[%s4 + $0x158] sm:$0xff] %v3655
  %3740 = vst [vmem:[%s4 + $0x160] sm:$0xff] %v3657
  %3741 = vst [vmem:[%s4 + $0x168] sm:$0xff] %v3659
  %3742 = vst [vmem:[%s4 + $0x170] sm:$0xff] %v3661
  %3743 = vst [vmem:[%s4 + $0x178] sm:$0xff] %v3663
  %3744 = vst [vmem:[%s4 + $0x180] sm:$0xff] %v3665
  %3745 = vst [vmem:[%s4 + $0x188] sm:$0xff] %v3667
  %3746 = vst [vmem:[%s4 + $0x190] sm:$0xff] %v3669
  %3747 = vst [vmem:[%s4 + $0x198] sm:$0xff] %v3671
  %3748 = vst [vmem:[%s4 + $0x1a0] sm:$0xff] %v3673
  %3749 = vst [vmem:[%s4 + $0x1a8] sm:$0xff] %v3675
  %3750 = vst [vmem:[%s4 + $0x1b0] sm:$0xff] %v3677
  %3751 = vst [vmem:[%s4 + $0x1b8] sm:$0xff] %v3679
  %3752 = vst [vmem:[%s4 + $0x1c0] sm:$0xff] %v3681
  %3753 = vst [vmem:[%s4 + $0x1c8] sm:$0xff] %v3683
  %3754 = vst [vmem:[%s4 + $0x1d0] sm:$0xff] %v3685
  %3755 = vst [vmem:[%s4 + $0x1d8] sm:$0xff] %v3687
  %3756 = vst [vmem:[%s4 + $0x1e0] sm:$0xff] %v3689
  %3757 = vst [vmem:[%s4 + $0x1e8] sm:$0xff] %v3691
  %3758 = vst [vmem:[%s4 + $0x1f0] sm:$0xff] %v3693
  %3759 = vst [vmem:[%s4 + $0x1f8] sm:$0xff] %v3695
  // Predicated region
  $region18: #{decoder_forward.9} parent=0 // pred_check
    _
  $region19: #{decoder_forward.9} parent=0 // pred_check_branch
    %3761 = sbr.rel (0) target = $region21
  $region20: #{decoder_forward.9} parent=0 // pred_region
    _
  $region21: #{decoder_forward.9} parent=0 // pred_fallthru
    _
  // Predicated region
  $region22: #{decoder_forward.9} parent=0 // pred_check
    _
  $region23: #{decoder_forward.9} parent=0 // pred_check_branch
    %3763 = sbr.rel (0) target = $region25
  $region24: #{decoder_forward.9} parent=0 // pred_region
    _
  $region25: #{decoder_forward.9} parent=0 // pred_fallthru
    _

</llo_original>
